<compile_context>
chip_gen: v6e
topology: v6e:2x2x1
jax: 0.10.0
libtpu: 0.0.40
codegen_flags: <defaults>
</compile_context>

<pallas_src>
import functools
import math

import jax
import jax.numpy as jnp
from jax import lax
from jax.experimental import pallas as pl
from jax.experimental.pallas import tpu as pltpu


# MXU operand dtype (accumulation is always f32). Set to jnp.float32 to recover exact
# f32 numerics at reduced MXU throughput.
MM_DTYPE = jnp.bfloat16


# ----------------------------------------------------------------------------
# Fully fused kernel: all levels, QKV in-proj -> multi-head attention -> out-proj
# ----------------------------------------------------------------------------
def _fused_hier_attn_kernel(x_ref, *refs, num_levels, num_heads, head_dim):
    """All `num_levels` MultiheadAttention levels for a single batch element.

    x_ref : (L, E) f32 activations for this batch element.
    refs  : per level [wqkv_t (E,3E) bf16, bqkv (1,3E) f32, wo_t (E,E) bf16,
            bo (1,E) f32], followed by `num_levels` output refs, each (L, E) f32.
    """
    w_refs = refs[: 4 * num_levels]
    out_refs = refs[4 * num_levels:]

    L, E = x_ref.shape
    H, Dh = num_heads, head_dim

    h = x_ref[...]                                                       # (L, E) f32

    for lvl in range(num_levels):
        wqkv_ref, bqkv_ref, wo_ref, bo_ref = w_refs[4 * lvl: 4 * lvl + 4]

        # Fused QKV in-projection (bf16 operands, f32 accumulation). 1/sqrt(Dh) is
        # pre-folded into the Q rows of weight+bias at prepare_params time.
        qkv = jnp.dot(h.astype(MM_DTYPE), wqkv_ref[...],
                      preferred_element_type=jnp.float32) + bqkv_ref[...]  # (L, 3E)

        # Static unroll over heads (H is small; see TODO for fori_loop at larger H).
        o_heads = []
        for hd in range(H):
            lo = hd * Dh
            q = qkv[:, lo:lo + Dh]
            k = qkv[:, E + lo:E + lo + Dh]
            v = qkv[:, 2 * E + lo:2 * E + lo + Dh]

            # Scores: contract the last axes directly -> no explicit K transpose.
            s = lax.dot_general(q.astype(MM_DTYPE), k.astype(MM_DTYPE),
                                (((1,), (1,)), ((), ())),
                                preferred_element_type=jnp.float32)        # (L, L)

            # Numerically-stable softmax; keep the (L, L) probabilities UNNORMALIZED
            # and fold the row-sum reciprocal into o_h after P@V (L*Dh muls per head
            # instead of L*L).  Elementwise math in f32, EUP approx reciprocal.
            m = jnp.max(s, axis=-1, keepdims=True)
            p = jnp.exp(s - m)
            l_sum = jnp.sum(p, axis=-1, keepdims=True)

            o_h = jnp.dot(p.astype(MM_DTYPE), v.astype(MM_DTYPE),
                          preferred_element_type=jnp.float32)              # (L, Dh)
            o_heads.append(o_h * pl.reciprocal(l_sum, approx=True))

        # Single K=E out-projection GEMM on the concatenated head outputs
        # (vs H separate K=Dh matmuls): far better MXU contraction utilization.
        o_cat = jnp.concatenate(o_heads, axis=-1)                          # (L, E)
        h = jnp.dot(o_cat.astype(MM_DTYPE), wo_ref[...],
                    preferred_element_type=jnp.float32) + bo_ref[...]      # (L, E)

        out_refs[lvl][...] = h.astype(out_refs[lvl].dtype)


def _vmem_limit_bytes(L, E, num_levels):
    """Explicit scoped-VMEM budget from the real footprint (with generous slack)."""
    w_bytes = num_levels * (E * 3 * E * 2 + 3 * E * 4 + E * E * 2 + E * 4)
    act_bytes = 2 * (1 + num_levels) * (L * E * 4)          # double-buffered x + outs
    interm = 4 * (L * 3 * E + 2 * L * L + 4 * L * E) * 4    # live per-level values
    est = 2 * w_bytes + act_bytes + interm + (1 << 20)
    return int(min(max(est, 8 << 20), 48 << 20))


# ----------------------------------------------------------------------------
# HierarchicalAttention forward: one fused pallas_call for all levels
# ----------------------------------------------------------------------------
def hierarchical_attention(x, prepared_level_params, num_heads, mask=None):
    """x: (L, N, E), PyTorch batch_first=False convention. Returns list of (L, N, E)."""
    assert mask is None  # TODO(synk): attn_mask support
    L, N, E = x.shape
    num_levels = len(prepared_level_params)
    assert E % num_heads == 0
    Dh = E // num_heads

    # Batch-first internal layout: ONE transpose of the input (no inter-level glue).
    x_nle = jnp.transpose(x, (1, 0, 2))                     # (N, L, E)

    def resident(shape):
        # Constant block index -> fetched once, stays resident across grid steps.
        return pl.BlockSpec(shape, lambda n, _nd=len(shape): (0,) * _nd)

    in_specs = [pl.BlockSpec((pl.Squeezed(), L, E), lambda n: (n, 0, 0))]
    weight_args = []
    for prep in prepared_level_params:
        in_specs += [resident((E, 3 * E)),                  # W_qkv^T (bf16)
                     resident((1, 3 * E)),                  # b_qkv   (f32)
                     resident((E, E)),                      # W_o^T   (bf16)
                     resident((1, E))]                      # b_o     (f32)
        weight_args += [prep["wqkv_t"], prep["bqkv"], prep["wo_t"], prep["bo"]]

    out_shape = tuple(jax.ShapeDtypeStruct((N, L, E), x.dtype)
                      for _ in range(num_levels))
    out_specs = tuple(pl.BlockSpec((pl.Squeezed(), L, E), lambda n: (n, 0, 0))
                      for _ in range(num_levels))

    kernel = functools.partial(_fused_hier_attn_kernel, num_levels=num_levels,
                               num_heads=num_heads, head_dim=Dh)

    outs_nle = pl.pallas_call(
        kernel,
        out_shape=out_shape,
        grid=(N,),
        in_specs=in_specs,
        out_specs=out_specs,
        compiler_params=pltpu.CompilerParams(
            # Batch elements are independent -> shard across v7x's 2 TensorCores.
            dimension_semantics=("parallel",),
            vmem_limit_bytes=_vmem_limit_bytes(L, E, num_levels),
        ),
    )(x_nle, *weight_args)

    # Back to PyTorch (L, N, E) layout for each collected level output.
    return [jnp.transpose(o, (1, 0, 2)) for o in outs_nle]


# ----------------------------------------------------------------------------
# Parameter handling
# ----------------------------------------------------------------------------
def init_params(key, hidden_size, num_levels):
    """Deterministic init with nn.MultiheadAttention parameter shapes (PyTorch layout)."""
    params = []
    for _ in range(num_levels):
        k1, k2, key = jax.random.split(key, 3)
        bound_in = math.sqrt(6.0 / (3 * hidden_size + hidden_size))   # xavier_uniform
        in_w = jax.random.uniform(k1, (3 * hidden_size, hidden_size),
                                  jnp.float32, -bound_in, bound_in)
        bound_out = 1.0 / math.sqrt(hidden_size)
        out_w = jax.random.uniform(k2, (hidden_size, hidden_size),
                                   jnp.float32, -bound_out, bound_out)
        params.append({
            "in_proj_weight": in_w,
            "in_proj_bias": jnp.zeros((3 * hidden_size,), jnp.float32),
            "out_proj_weight": out_w,
            "out_proj_bias": jnp.zeros((hidden_size,), jnp.float32),
        })
    return params


def prepare_params(params, num_heads, mm_dtype=MM_DTYPE):
    """One-time host-side transform of PyTorch-layout MHA params for the kernel:
    pre-transpose (no per-call w.T), fold 1/sqrt(Dh) into the Q projection
    (weight + bias), and downcast matmul weights to bf16 (biases stay f32)."""
    in_w = params["in_proj_weight"]          # (3E, E)
    in_b = params["in_proj_bias"]            # (3E,)
    out_w = params["out_proj_weight"]        # (E, E)
    out_b = params["out_proj_bias"]          # (E,)
    E = in_w.shape[1]
    Dh = E // num_heads
    scale = 1.0 / math.sqrt(Dh)

    q_scale = jnp.concatenate([jnp.full((E,), scale, in_w.dtype),
                               jnp.ones((2 * E,), in_w.dtype)])
    in_w = in_w * q_scale[:, None]
    in_b = in_b * q_scale

    return {
        "wqkv_t": in_w.T.astype(mm_dtype),                 # (E, 3E)
        "bqkv": in_b.reshape(1, 3 * E).astype(jnp.float32),
        "wo_t": out_w.T.astype(mm_dtype),                  # (E, E)
        "bo": out_b.reshape(1, E).astype(jnp.float32),
    }


# ----------------------------------------------------------------------------
# Pure-JAX f32 reference (PyTorch nn.MultiheadAttention semantics)
# ----------------------------------------------------------------------------
def _reference_level(x, params, num_heads):
    L, N, E = x.shape
    H = num_heads
    Dh = E // H
    qkv = jnp.einsum("lne,fe->lnf", x, params["in_proj_weight"]) + params["in_proj_bias"]
    q, k, v = qkv[..., :E], qkv[..., E:2 * E], qkv[..., 2 * E:]

    def heads(t):
        return t.reshape(L, N, H, Dh).transpose(1, 2, 0, 3)      # (N, H, L, Dh)

    qh, kh, vh = heads(q), heads(k), heads(v)
    s = jnp.einsum("nhqd,nhkd->nhqk", qh, kh) / math.sqrt(Dh)
    p = jax.nn.softmax(s, axis=-1)
    o = jnp.einsum("nhqk,nhkd->nhqd", p, vh).transpose(2, 0, 1, 3).reshape(L, N, E)
    return jnp.einsum("lne,fe->lnf", o, params["out_proj_weight"]) + params["out_proj_bias"]


def _reference(x, level_params, num_heads):
    outs = []
    for p in level_params:
        x = _reference_level(x, p, num_heads)
        outs.append(x)
    return outs


if __name__ == "__main__":
    SEQ, BATCH, HIDDEN, HEADS, LEVELS = 8, 2, 32, 4, 3

    key = jax.random.PRNGKey(0)
    kx, kp = jax.random.split(key)
    x = jax.random.normal(kx, (SEQ, BATCH, HIDDEN), jnp.float32)   # (L, N, E)

    raw_params = init_params(kp, HIDDEN, LEVELS)
    prepped = [prepare_params(p, HEADS) for p in raw_params]

    outs = hierarchical_attention(x, prepped, HEADS, mask=None)
    outs = [jax.block_until_ready(o) for o in outs]

    assert len(outs) == LEVELS
    refs = _reference(x, raw_params, HEADS)
    for o, r in zip(outs, refs):
        assert o.shape == (SEQ, BATCH, HIDDEN)
        assert bool(jnp.all(jnp.isfinite(o)))
        # bf16 MXU operands + approx reciprocal => loose tolerance vs f32 reference.
        assert float(jnp.max(jnp.abs(o - r))) < 0.15

    print("KERNEL_OK")
</pallas_src>

<mosaic_0001>
module attributes {stable_mosaic.version = 11 : i64} {
  func.func @_fused_hier_attn_kernel(%arg0: i32, %arg1: memref<1x8x32xf32, #tpu.memory_space<vmem>>, %arg2: memref<32x96xbf16, #tpu.memory_space<vmem>>, %arg3: memref<1x96xf32, #tpu.memory_space<vmem>>, %arg4: memref<32x32xbf16, #tpu.memory_space<vmem>>, %arg5: memref<1x32xf32, #tpu.memory_space<vmem>>, %arg6: memref<32x96xbf16, #tpu.memory_space<vmem>>, %arg7: memref<1x96xf32, #tpu.memory_space<vmem>>, %arg8: memref<32x32xbf16, #tpu.memory_space<vmem>>, %arg9: memref<1x32xf32, #tpu.memory_space<vmem>>, %arg10: memref<32x96xbf16, #tpu.memory_space<vmem>>, %arg11: memref<1x96xf32, #tpu.memory_space<vmem>>, %arg12: memref<32x32xbf16, #tpu.memory_space<vmem>>, %arg13: memref<1x32xf32, #tpu.memory_space<vmem>>, %arg14: memref<1x8x32xf32, #tpu.memory_space<vmem>>, %arg15: memref<1x8x32xf32, #tpu.memory_space<vmem>>, %arg16: memref<1x8x32xf32, #tpu.memory_space<vmem>>) attributes {dimension_semantics = [#tpu.dimension_semantics<parallel>], iteration_bounds = array<i64: 2>, scalar_prefetch = 0 : i64, scratch_operands = 0 : i64, tpu.core_type = #tpu.core_type<tc>, window_params = [{transform_indices = @transform_0, window_bounds = array<i64: 1, 8, 32>}, {pipeline_mode = #tpu.pipeline_mode<synchronous>, transform_indices = @transform_1, window_bounds = array<i64: 32, 96>}, {pipeline_mode = #tpu.pipeline_mode<synchronous>, transform_indices = @transform_2, window_bounds = array<i64: 1, 96>}, {pipeline_mode = #tpu.pipeline_mode<synchronous>, transform_indices = @transform_3, window_bounds = array<i64: 32, 32>}, {pipeline_mode = #tpu.pipeline_mode<synchronous>, transform_indices = @transform_4, window_bounds = array<i64: 1, 32>}, {pipeline_mode = #tpu.pipeline_mode<synchronous>, transform_indices = @transform_5, window_bounds = array<i64: 32, 96>}, {pipeline_mode = #tpu.pipeline_mode<synchronous>, transform_indices = @transform_6, window_bounds = array<i64: 1, 96>}, {pipeline_mode = #tpu.pipeline_mode<synchronous>, transform_indices = @transform_7, window_bounds = array<i64: 32, 32>}, {pipeline_mode = #tpu.pipeline_mode<synchronous>, transform_indices = @transform_8, window_bounds = array<i64: 1, 32>}, {pipeline_mode = #tpu.pipeline_mode<synchronous>, transform_indices = @transform_9, window_bounds = array<i64: 32, 96>}, {pipeline_mode = #tpu.pipeline_mode<synchronous>, transform_indices = @transform_10, window_bounds = array<i64: 1, 96>}, {pipeline_mode = #tpu.pipeline_mode<synchronous>, transform_indices = @transform_11, window_bounds = array<i64: 32, 32>}, {pipeline_mode = #tpu.pipeline_mode<synchronous>, transform_indices = @transform_12, window_bounds = array<i64: 1, 32>}, {transform_indices = @transform_13, window_bounds = array<i64: 1, 8, 32>}, {transform_indices = @transform_14, window_bounds = array<i64: 1, 8, 32>}, {transform_indices = @transform_15, window_bounds = array<i64: 1, 8, 32>}]} {
    %c0 = arith.constant 0 : index
    %c0_0 = arith.constant 0 : index
    %c0_1 = arith.constant 0 : index
    %0 = vector.load %arg1[%c0, %c0_0, %c0_1] : memref<1x8x32xf32, #tpu.memory_space<vmem>>, vector<1x8x32xf32>
    %1 = vector.shape_cast %0 : vector<1x8x32xf32> to vector<8x32xf32>
    %2 = arith.truncf %1 : vector<8x32xf32> to vector<8x32xbf16>
    %c0_2 = arith.constant 0 : index
    %c0_3 = arith.constant 0 : index
    %3 = vector.load %arg2[%c0_2, %c0_3] : memref<32x96xbf16, #tpu.memory_space<vmem>>, vector<32x96xbf16>
    %cst = arith.constant dense<0.000000e+00> : vector<8x96xf32>
    %4 = tpu.matmul %2, %3, %cst {dimension_numbers = #tpu.dot_dimension_numbers<[1], [0], [0], [1], [0, 0, 1, 1], [], []>} : vector<8x32xbf16>, vector<32x96xbf16>, vector<8x96xf32> -> vector<8x96xf32>
    %c0_4 = arith.constant 0 : index
    %c0_5 = arith.constant 0 : index
    %5 = vector.load %arg3[%c0_4, %c0_5] : memref<1x96xf32, #tpu.memory_space<vmem>>, vector<1x96xf32>
    %6 = vector.broadcast %5 : vector<1x96xf32> to vector<8x96xf32>
    %7 = arith.addf %4, %6 : vector<8x96xf32>
    %8 = vector.extract_strided_slice %7 {offsets = [0, 0], sizes = [8, 8], strides = [1, 1]} : vector<8x96xf32> to vector<8x8xf32>
    %9 = vector.extract_strided_slice %7 {offsets = [0, 32], sizes = [8, 8], strides = [1, 1]} : vector<8x96xf32> to vector<8x8xf32>
    %10 = vector.extract_strided_slice %7 {offsets = [0, 64], sizes = [8, 8], strides = [1, 1]} : vector<8x96xf32> to vector<8x8xf32>
    %11 = arith.truncf %8 : vector<8x8xf32> to vector<8x8xbf16>
    %12 = arith.truncf %9 : vector<8x8xf32> to vector<8x8xbf16>
    %cst_6 = arith.constant dense<0.000000e+00> : vector<8x8xf32>
    %13 = tpu.matmul %11, %12, %cst_6 {dimension_numbers = #tpu.dot_dimension_numbers<[1], [1], [0], [0], [0, 0, 1, 0], [], []>} : vector<8x8xbf16>, vector<8x8xbf16>, vector<8x8xf32> -> vector<8x8xf32>
    %cst_7 = arith.constant dense<0xFF800000> : vector<8xf32>
    %14 = vector.multi_reduction <maximumf>, %13, %cst_7 [1] : vector<8x8xf32> to vector<8xf32>
    %15 = vector.shape_cast %14 : vector<8xf32> to vector<8x1xf32>
    %16 = vector.broadcast %15 : vector<8x1xf32> to vector<8x8xf32>
    %17 = arith.subf %13, %16 : vector<8x8xf32>
    %18 = math.exp %17 : vector<8x8xf32>
    %cst_8 = arith.constant dense<0.000000e+00> : vector<8xf32>
    %19 = vector.multi_reduction <add>, %18, %cst_8 [1] : vector<8x8xf32> to vector<8xf32>
    %20 = vector.shape_cast %19 : vector<8xf32> to vector<8x1xf32>
    %21 = arith.truncf %18 : vector<8x8xf32> to vector<8x8xbf16>
    %22 = arith.truncf %10 : vector<8x8xf32> to vector<8x8xbf16>
    %cst_9 = arith.constant dense<0.000000e+00> : vector<8x8xf32>
    %23 = tpu.matmul %21, %22, %cst_9 {dimension_numbers = #tpu.dot_dimension_numbers<[1], [0], [0], [1], [0, 0, 1, 1], [], []>} : vector<8x8xbf16>, vector<8x8xbf16>, vector<8x8xf32> -> vector<8x8xf32>
    %24 = tpu.reciprocal %20 {approx = true} : vector<8x1xf32> -> vector<8x1xf32>
    %25 = vector.broadcast %24 : vector<8x1xf32> to vector<8x8xf32>
    %26 = arith.mulf %23, %25 : vector<8x8xf32>
    %27 = vector.extract_strided_slice %7 {offsets = [0, 8], sizes = [8, 8], strides = [1, 1]} : vector<8x96xf32> to vector<8x8xf32>
    %28 = vector.extract_strided_slice %7 {offsets = [0, 40], sizes = [8, 8], strides = [1, 1]} : vector<8x96xf32> to vector<8x8xf32>
    %29 = vector.extract_strided_slice %7 {offsets = [0, 72], sizes = [8, 8], strides = [1, 1]} : vector<8x96xf32> to vector<8x8xf32>
    %30 = arith.truncf %27 : vector<8x8xf32> to vector<8x8xbf16>
    %31 = arith.truncf %28 : vector<8x8xf32> to vector<8x8xbf16>
    %cst_10 = arith.constant dense<0.000000e+00> : vector<8x8xf32>
    %32 = tpu.matmul %30, %31, %cst_10 {dimension_numbers = #tpu.dot_dimension_numbers<[1], [1], [0], [0], [0, 0, 1, 0], [], []>} : vector<8x8xbf16>, vector<8x8xbf16>, vector<8x8xf32> -> vector<8x8xf32>
    %cst_11 = arith.constant dense<0xFF800000> : vector<8xf32>
    %33 = vector.multi_reduction <maximumf>, %32, %cst_11 [1] : vector<8x8xf32> to vector<8xf32>
    %34 = vector.shape_cast %33 : vector<8xf32> to vector<8x1xf32>
    %35 = vector.broadcast %34 : vector<8x1xf32> to vector<8x8xf32>
    %36 = arith.subf %32, %35 : vector<8x8xf32>
    %37 = math.exp %36 : vector<8x8xf32>
    %cst_12 = arith.constant dense<0.000000e+00> : vector<8xf32>
    %38 = vector.multi_reduction <add>, %37, %cst_12 [1] : vector<8x8xf32> to vector<8xf32>
    %39 = vector.shape_cast %38 : vector<8xf32> to vector<8x1xf32>
    %40 = arith.truncf %37 : vector<8x8xf32> to vector<8x8xbf16>
    %41 = arith.truncf %29 : vector<8x8xf32> to vector<8x8xbf16>
    %cst_13 = arith.constant dense<0.000000e+00> : vector<8x8xf32>
    %42 = tpu.matmul %40, %41, %cst_13 {dimension_numbers = #tpu.dot_dimension_numbers<[1], [0], [0], [1], [0, 0, 1, 1], [], []>} : vector<8x8xbf16>, vector<8x8xbf16>, vector<8x8xf32> -> vector<8x8xf32>
    %43 = tpu.reciprocal %39 {approx = true} : vector<8x1xf32> -> vector<8x1xf32>
    %44 = vector.broadcast %43 : vector<8x1xf32> to vector<8x8xf32>
    %45 = arith.mulf %42, %44 : vector<8x8xf32>
    %46 = vector.extract_strided_slice %7 {offsets = [0, 16], sizes = [8, 8], strides = [1, 1]} : vector<8x96xf32> to vector<8x8xf32>
    %47 = vector.extract_strided_slice %7 {offsets = [0, 48], sizes = [8, 8], strides = [1, 1]} : vector<8x96xf32> to vector<8x8xf32>
    %48 = vector.extract_strided_slice %7 {offsets = [0, 80], sizes = [8, 8], strides = [1, 1]} : vector<8x96xf32> to vector<8x8xf32>
    %49 = arith.truncf %46 : vector<8x8xf32> to vector<8x8xbf16>
    %50 = arith.truncf %47 : vector<8x8xf32> to vector<8x8xbf16>
    %cst_14 = arith.constant dense<0.000000e+00> : vector<8x8xf32>
    %51 = tpu.matmul %49, %50, %cst_14 {dimension_numbers = #tpu.dot_dimension_numbers<[1], [1], [0], [0], [0, 0, 1, 0], [], []>} : vector<8x8xbf16>, vector<8x8xbf16>, vector<8x8xf32> -> vector<8x8xf32>
    %cst_15 = arith.constant dense<0xFF800000> : vector<8xf32>
    %52 = vector.multi_reduction <maximumf>, %51, %cst_15 [1] : vector<8x8xf32> to vector<8xf32>
    %53 = vector.shape_cast %52 : vector<8xf32> to vector<8x1xf32>
    %54 = vector.broadcast %53 : vector<8x1xf32> to vector<8x8xf32>
    %55 = arith.subf %51, %54 : vector<8x8xf32>
    %56 = math.exp %55 : vector<8x8xf32>
    %cst_16 = arith.constant dense<0.000000e+00> : vector<8xf32>
    %57 = vector.multi_reduction <add>, %56, %cst_16 [1] : vector<8x8xf32> to vector<8xf32>
    %58 = vector.shape_cast %57 : vector<8xf32> to vector<8x1xf32>
    %59 = arith.truncf %56 : vector<8x8xf32> to vector<8x8xbf16>
    %60 = arith.truncf %48 : vector<8x8xf32> to vector<8x8xbf16>
    %cst_17 = arith.constant dense<0.000000e+00> : vector<8x8xf32>
    %61 = tpu.matmul %59, %60, %cst_17 {dimension_numbers = #tpu.dot_dimension_numbers<[1], [0], [0], [1], [0, 0, 1, 1], [], []>} : vector<8x8xbf16>, vector<8x8xbf16>, vector<8x8xf32> -> vector<8x8xf32>
    %62 = tpu.reciprocal %58 {approx = true} : vector<8x1xf32> -> vector<8x1xf32>
    %63 = vector.broadcast %62 : vector<8x1xf32> to vector<8x8xf32>
    %64 = arith.mulf %61, %63 : vector<8x8xf32>
    %65 = vector.extract_strided_slice %7 {offsets = [0, 24], sizes = [8, 8], strides = [1, 1]} : vector<8x96xf32> to vector<8x8xf32>
    %66 = vector.extract_strided_slice %7 {offsets = [0, 56], sizes = [8, 8], strides = [1, 1]} : vector<8x96xf32> to vector<8x8xf32>
    %67 = vector.extract_strided_slice %7 {offsets = [0, 88], sizes = [8, 8], strides = [1, 1]} : vector<8x96xf32> to vector<8x8xf32>
    %68 = arith.truncf %65 : vector<8x8xf32> to vector<8x8xbf16>
    %69 = arith.truncf %66 : vector<8x8xf32> to vector<8x8xbf16>
    %cst_18 = arith.constant dense<0.000000e+00> : vector<8x8xf32>
    %70 = tpu.matmul %68, %69, %cst_18 {dimension_numbers = #tpu.dot_dimension_numbers<[1], [1], [0], [0], [0, 0, 1, 0], [], []>} : vector<8x8xbf16>, vector<8x8xbf16>, vector<8x8xf32> -> vector<8x8xf32>
    %cst_19 = arith.constant dense<0xFF800000> : vector<8xf32>
    %71 = vector.multi_reduction <maximumf>, %70, %cst_19 [1] : vector<8x8xf32> to vector<8xf32>
    %72 = vector.shape_cast %71 : vector<8xf32> to vector<8x1xf32>
    %73 = vector.broadcast %72 : vector<8x1xf32> to vector<8x8xf32>
    %74 = arith.subf %70, %73 : vector<8x8xf32>
    %75 = math.exp %74 : vector<8x8xf32>
    %cst_20 = arith.constant dense<0.000000e+00> : vector<8xf32>
    %76 = vector.multi_reduction <add>, %75, %cst_20 [1] : vector<8x8xf32> to vector<8xf32>
    %77 = vector.shape_cast %76 : vector<8xf32> to vector<8x1xf32>
    %78 = arith.truncf %75 : vector<8x8xf32> to vector<8x8xbf16>
    %79 = arith.truncf %67 : vector<8x8xf32> to vector<8x8xbf16>
    %cst_21 = arith.constant dense<0.000000e+00> : vector<8x8xf32>
    %80 = tpu.matmul %78, %79, %cst_21 {dimension_numbers = #tpu.dot_dimension_numbers<[1], [0], [0], [1], [0, 0, 1, 1], [], []>} : vector<8x8xbf16>, vector<8x8xbf16>, vector<8x8xf32> -> vector<8x8xf32>
    %81 = tpu.reciprocal %77 {approx = true} : vector<8x1xf32> -> vector<8x1xf32>
    %82 = vector.broadcast %81 : vector<8x1xf32> to vector<8x8xf32>
    %83 = arith.mulf %80, %82 : vector<8x8xf32>
    %84 = tpu.concatenate %26, %45, %64, %83 in 1 : vector<8x8xf32>, vector<8x8xf32>, vector<8x8xf32>, vector<8x8xf32> -> vector<8x32xf32>
    %85 = arith.truncf %84 : vector<8x32xf32> to vector<8x32xbf16>
    %c0_22 = arith.constant 0 : index
    %c0_23 = arith.constant 0 : index
    %86 = vector.load %arg4[%c0_22, %c0_23] : memref<32x32xbf16, #tpu.memory_space<vmem>>, vector<32x32xbf16>
    %cst_24 = arith.constant dense<0.000000e+00> : vector<8x32xf32>
    %87 = tpu.matmul %85, %86, %cst_24 {dimension_numbers = #tpu.dot_dimension_numbers<[1], [0], [0], [1], [0, 0, 1, 1], [], []>} : vector<8x32xbf16>, vector<32x32xbf16>, vector<8x32xf32> -> vector<8x32xf32>
    %c0_25 = arith.constant 0 : index
    %c0_26 = arith.constant 0 : index
    %88 = vector.load %arg5[%c0_25, %c0_26] : memref<1x32xf32, #tpu.memory_space<vmem>>, vector<1x32xf32>
    %89 = vector.broadcast %88 : vector<1x32xf32> to vector<8x32xf32>
    %90 = arith.addf %87, %89 : vector<8x32xf32>
    %c0_27 = arith.constant 0 : index
    %c0_28 = arith.constant 0 : index
    %c0_29 = arith.constant 0 : index
    %91 = vector.load %arg14[%c0_27, %c0_28, %c0_29] : memref<1x8x32xf32, #tpu.memory_space<vmem>>, vector<1x8x32xf32>
    %92 = vector.shape_cast %91 : vector<1x8x32xf32> to vector<8x32xf32>
    %93 = vector.shape_cast %90 : vector<8x32xf32> to vector<1x8x32xf32>
    tpu.vector_store %arg14[%c0_27, %c0_28, %c0_29], %93 {strides = array<i32>} : memref<1x8x32xf32, #tpu.memory_space<vmem>>, vector<1x8x32xf32>,
    %94 = arith.truncf %90 : vector<8x32xf32> to vector<8x32xbf16>
    %c0_30 = arith.constant 0 : index
    %c0_31 = arith.constant 0 : index
    %95 = vector.load %arg6[%c0_30, %c0_31] : memref<32x96xbf16, #tpu.memory_space<vmem>>, vector<32x96xbf16>
    %cst_32 = arith.constant dense<0.000000e+00> : vector<8x96xf32>
    %96 = tpu.matmul %94, %95, %cst_32 {dimension_numbers = #tpu.dot_dimension_numbers<[1], [0], [0], [1], [0, 0, 1, 1], [], []>} : vector<8x32xbf16>, vector<32x96xbf16>, vector<8x96xf32> -> vector<8x96xf32>
    %c0_33 = arith.constant 0 : index
    %c0_34 = arith.constant 0 : index
    %97 = vector.load %arg7[%c0_33, %c0_34] : memref<1x96xf32, #tpu.memory_space<vmem>>, vector<1x96xf32>
    %98 = vector.broadcast %97 : vector<1x96xf32> to vector<8x96xf32>
    %99 = arith.addf %96, %98 : vector<8x96xf32>
    %100 = vector.extract_strided_slice %99 {offsets = [0, 0], sizes = [8, 8], strides = [1, 1]} : vector<8x96xf32> to vector<8x8xf32>
    %101 = vector.extract_strided_slice %99 {offsets = [0, 32], sizes = [8, 8], strides = [1, 1]} : vector<8x96xf32> to vector<8x8xf32>
    %102 = vector.extract_strided_slice %99 {offsets = [0, 64], sizes = [8, 8], strides = [1, 1]} : vector<8x96xf32> to vector<8x8xf32>
    %103 = arith.truncf %100 : vector<8x8xf32> to vector<8x8xbf16>
    %104 = arith.truncf %101 : vector<8x8xf32> to vector<8x8xbf16>
    %cst_35 = arith.constant dense<0.000000e+00> : vector<8x8xf32>
    %105 = tpu.matmul %103, %104, %cst_35 {dimension_numbers = #tpu.dot_dimension_numbers<[1], [1], [0], [0], [0, 0, 1, 0], [], []>} : vector<8x8xbf16>, vector<8x8xbf16>, vector<8x8xf32> -> vector<8x8xf32>
    %cst_36 = arith.constant dense<0xFF800000> : vector<8xf32>
    %106 = vector.multi_reduction <maximumf>, %105, %cst_36 [1] : vector<8x8xf32> to vector<8xf32>
    %107 = vector.shape_cast %106 : vector<8xf32> to vector<8x1xf32>
    %108 = vector.broadcast %107 : vector<8x1xf32> to vector<8x8xf32>
    %109 = arith.subf %105, %108 : vector<8x8xf32>
    %110 = math.exp %109 : vector<8x8xf32>
    %cst_37 = arith.constant dense<0.000000e+00> : vector<8xf32>
    %111 = vector.multi_reduction <add>, %110, %cst_37 [1] : vector<8x8xf32> to vector<8xf32>
    %112 = vector.shape_cast %111 : vector<8xf32> to vector<8x1xf32>
    %113 = arith.truncf %110 : vector<8x8xf32> to vector<8x8xbf16>
    %114 = arith.truncf %102 : vector<8x8xf32> to vector<8x8xbf16>
    %cst_38 = arith.constant dense<0.000000e+00> : vector<8x8xf32>
    %115 = tpu.matmul %113, %114, %cst_38 {dimension_numbers = #tpu.dot_dimension_numbers<[1], [0], [0], [1], [0, 0, 1, 1], [], []>} : vector<8x8xbf16>, vector<8x8xbf16>, vector<8x8xf32> -> vector<8x8xf32>
    %116 = tpu.reciprocal %112 {approx = true} : vector<8x1xf32> -> vector<8x1xf32>
    %117 = vector.broadcast %116 : vector<8x1xf32> to vector<8x8xf32>
    %118 = arith.mulf %115, %117 : vector<8x8xf32>
    %119 = vector.extract_strided_slice %99 {offsets = [0, 8], sizes = [8, 8], strides = [1, 1]} : vector<8x96xf32> to vector<8x8xf32>
    %120 = vector.extract_strided_slice %99 {offsets = [0, 40], sizes = [8, 8], strides = [1, 1]} : vector<8x96xf32> to vector<8x8xf32>
    %121 = vector.extract_strided_slice %99 {offsets = [0, 72], sizes = [8, 8], strides = [1, 1]} : vector<8x96xf32> to vector<8x8xf32>
    %122 = arith.truncf %119 : vector<8x8xf32> to vector<8x8xbf16>
    %123 = arith.truncf %120 : vector<8x8xf32> to vector<8x8xbf16>
    %cst_39 = arith.constant dense<0.000000e+00> : vector<8x8xf32>
    %124 = tpu.matmul %122, %123, %cst_39 {dimension_numbers = #tpu.dot_dimension_numbers<[1], [1], [0], [0], [0, 0, 1, 0], [], []>} : vector<8x8xbf16>, vector<8x8xbf16>, vector<8x8xf32> -> vector<8x8xf32>
    %cst_40 = arith.constant dense<0xFF800000> : vector<8xf32>
    %125 = vector.multi_reduction <maximumf>, %124, %cst_40 [1] : vector<8x8xf32> to vector<8xf32>
    %126 = vector.shape_cast %125 : vector<8xf32> to vector<8x1xf32>
    %127 = vector.broadcast %126 : vector<8x1xf32> to vector<8x8xf32>
    %128 = arith.subf %124, %127 : vector<8x8xf32>
    %129 = math.exp %128 : vector<8x8xf32>
    %cst_41 = arith.constant dense<0.000000e+00> : vector<8xf32>
    %130 = vector.multi_reduction <add>, %129, %cst_41 [1] : vector<8x8xf32> to vector<8xf32>
    %131 = vector.shape_cast %130 : vector<8xf32> to vector<8x1xf32>
    %132 = arith.truncf %129 : vector<8x8xf32> to vector<8x8xbf16>
    %133 = arith.truncf %121 : vector<8x8xf32> to vector<8x8xbf16>
    %cst_42 = arith.constant dense<0.000000e+00> : vector<8x8xf32>
    %134 = tpu.matmul %132, %133, %cst_42 {dimension_numbers = #tpu.dot_dimension_numbers<[1], [0], [0], [1], [0, 0, 1, 1], [], []>} : vector<8x8xbf16>, vector<8x8xbf16>, vector<8x8xf32> -> vector<8x8xf32>
    %135 = tpu.reciprocal %131 {approx = true} : vector<8x1xf32> -> vector<8x1xf32>
    %136 = vector.broadcast %135 : vector<8x1xf32> to vector<8x8xf32>
    %137 = arith.mulf %134, %136 : vector<8x8xf32>
    %138 = vector.extract_strided_slice %99 {offsets = [0, 16], sizes = [8, 8], strides = [1, 1]} : vector<8x96xf32> to vector<8x8xf32>
    %139 = vector.extract_strided_slice %99 {offsets = [0, 48], sizes = [8, 8], strides = [1, 1]} : vector<8x96xf32> to vector<8x8xf32>
    %140 = vector.extract_strided_slice %99 {offsets = [0, 80], sizes = [8, 8], strides = [1, 1]} : vector<8x96xf32> to vector<8x8xf32>
    %141 = arith.truncf %138 : vector<8x8xf32> to vector<8x8xbf16>
    %142 = arith.truncf %139 : vector<8x8xf32> to vector<8x8xbf16>
    %cst_43 = arith.constant dense<0.000000e+00> : vector<8x8xf32>
    %143 = tpu.matmul %141, %142, %cst_43 {dimension_numbers = #tpu.dot_dimension_numbers<[1], [1], [0], [0], [0, 0, 1, 0], [], []>} : vector<8x8xbf16>, vector<8x8xbf16>, vector<8x8xf32> -> vector<8x8xf32>
    %cst_44 = arith.constant dense<0xFF800000> : vector<8xf32>
    %144 = vector.multi_reduction <maximumf>, %143, %cst_44 [1] : vector<8x8xf32> to vector<8xf32>
    %145 = vector.shape_cast %144 : vector<8xf32> to vector<8x1xf32>
    %146 = vector.broadcast %145 : vector<8x1xf32> to vector<8x8xf32>
    %147 = arith.subf %143, %146 : vector<8x8xf32>
    %148 = math.exp %147 : vector<8x8xf32>
    %cst_45 = arith.constant dense<0.000000e+00> : vector<8xf32>
    %149 = vector.multi_reduction <add>, %148, %cst_45 [1] : vector<8x8xf32> to vector<8xf32>
    %150 = vector.shape_cast %149 : vector<8xf32> to vector<8x1xf32>
    %151 = arith.truncf %148 : vector<8x8xf32> to vector<8x8xbf16>
    %152 = arith.truncf %140 : vector<8x8xf32> to vector<8x8xbf16>
    %cst_46 = arith.constant dense<0.000000e+00> : vector<8x8xf32>
    %153 = tpu.matmul %151, %152, %cst_46 {dimension_numbers = #tpu.dot_dimension_numbers<[1], [0], [0], [1], [0, 0, 1, 1], [], []>} : vector<8x8xbf16>, vector<8x8xbf16>, vector<8x8xf32> -> vector<8x8xf32>
    %154 = tpu.reciprocal %150 {approx = true} : vector<8x1xf32> -> vector<8x1xf32>
    %155 = vector.broadcast %154 : vector<8x1xf32> to vector<8x8xf32>
    %156 = arith.mulf %153, %155 : vector<8x8xf32>
    %157 = vector.extract_strided_slice %99 {offsets = [0, 24], sizes = [8, 8], strides = [1, 1]} : vector<8x96xf32> to vector<8x8xf32>
    %158 = vector.extract_strided_slice %99 {offsets = [0, 56], sizes = [8, 8], strides = [1, 1]} : vector<8x96xf32> to vector<8x8xf32>
    %159 = vector.extract_strided_slice %99 {offsets = [0, 88], sizes = [8, 8], strides = [1, 1]} : vector<8x96xf32> to vector<8x8xf32>
    %160 = arith.truncf %157 : vector<8x8xf32> to vector<8x8xbf16>
    %161 = arith.truncf %158 : vector<8x8xf32> to vector<8x8xbf16>
    %cst_47 = arith.constant dense<0.000000e+00> : vector<8x8xf32>
    %162 = tpu.matmul %160, %161, %cst_47 {dimension_numbers = #tpu.dot_dimension_numbers<[1], [1], [0], [0], [0, 0, 1, 0], [], []>} : vector<8x8xbf16>, vector<8x8xbf16>, vector<8x8xf32> -> vector<8x8xf32>
    %cst_48 = arith.constant dense<0xFF800000> : vector<8xf32>
    %163 = vector.multi_reduction <maximumf>, %162, %cst_48 [1] : vector<8x8xf32> to vector<8xf32>
    %164 = vector.shape_cast %163 : vector<8xf32> to vector<8x1xf32>
    %165 = vector.broadcast %164 : vector<8x1xf32> to vector<8x8xf32>
    %166 = arith.subf %162, %165 : vector<8x8xf32>
    %167 = math.exp %166 : vector<8x8xf32>
    %cst_49 = arith.constant dense<0.000000e+00> : vector<8xf32>
    %168 = vector.multi_reduction <add>, %167, %cst_49 [1] : vector<8x8xf32> to vector<8xf32>
    %169 = vector.shape_cast %168 : vector<8xf32> to vector<8x1xf32>
    %170 = arith.truncf %167 : vector<8x8xf32> to vector<8x8xbf16>
    %171 = arith.truncf %159 : vector<8x8xf32> to vector<8x8xbf16>
    %cst_50 = arith.constant dense<0.000000e+00> : vector<8x8xf32>
    %172 = tpu.matmul %170, %171, %cst_50 {dimension_numbers = #tpu.dot_dimension_numbers<[1], [0], [0], [1], [0, 0, 1, 1], [], []>} : vector<8x8xbf16>, vector<8x8xbf16>, vector<8x8xf32> -> vector<8x8xf32>
    %173 = tpu.reciprocal %169 {approx = true} : vector<8x1xf32> -> vector<8x1xf32>
    %174 = vector.broadcast %173 : vector<8x1xf32> to vector<8x8xf32>
    %175 = arith.mulf %172, %174 : vector<8x8xf32>
    %176 = tpu.concatenate %118, %137, %156, %175 in 1 : vector<8x8xf32>, vector<8x8xf32>, vector<8x8xf32>, vector<8x8xf32> -> vector<8x32xf32>
    %177 = arith.truncf %176 : vector<8x32xf32> to vector<8x32xbf16>
    %c0_51 = arith.constant 0 : index
    %c0_52 = arith.constant 0 : index
    %178 = vector.load %arg8[%c0_51, %c0_52] : memref<32x32xbf16, #tpu.memory_space<vmem>>, vector<32x32xbf16>
    %cst_53 = arith.constant dense<0.000000e+00> : vector<8x32xf32>
    %179 = tpu.matmul %177, %178, %cst_53 {dimension_numbers = #tpu.dot_dimension_numbers<[1], [0], [0], [1], [0, 0, 1, 1], [], []>} : vector<8x32xbf16>, vector<32x32xbf16>, vector<8x32xf32> -> vector<8x32xf32>
    %c0_54 = arith.constant 0 : index
    %c0_55 = arith.constant 0 : index
    %180 = vector.load %arg9[%c0_54, %c0_55] : memref<1x32xf32, #tpu.memory_space<vmem>>, vector<1x32xf32>
    %181 = vector.broadcast %180 : vector<1x32xf32> to vector<8x32xf32>
    %182 = arith.addf %179, %181 : vector<8x32xf32>
    %c0_56 = arith.constant 0 : index
    %c0_57 = arith.constant 0 : index
    %c0_58 = arith.constant 0 : index
    %183 = vector.load %arg15[%c0_56, %c0_57, %c0_58] : memref<1x8x32xf32, #tpu.memory_space<vmem>>, vector<1x8x32xf32>
    %184 = vector.shape_cast %183 : vector<1x8x32xf32> to vector<8x32xf32>
    %185 = vector.shape_cast %182 : vector<8x32xf32> to vector<1x8x32xf32>
    tpu.vector_store %arg15[%c0_56, %c0_57, %c0_58], %185 {strides = array<i32>} : memref<1x8x32xf32, #tpu.memory_space<vmem>>, vector<1x8x32xf32>,
    %186 = arith.truncf %182 : vector<8x32xf32> to vector<8x32xbf16>
    %c0_59 = arith.constant 0 : index
    %c0_60 = arith.constant 0 : index
    %187 = vector.load %arg10[%c0_59, %c0_60] : memref<32x96xbf16, #tpu.memory_space<vmem>>, vector<32x96xbf16>
    %cst_61 = arith.constant dense<0.000000e+00> : vector<8x96xf32>
    %188 = tpu.matmul %186, %187, %cst_61 {dimension_numbers = #tpu.dot_dimension_numbers<[1], [0], [0], [1], [0, 0, 1, 1], [], []>} : vector<8x32xbf16>, vector<32x96xbf16>, vector<8x96xf32> -> vector<8x96xf32>
    %c0_62 = arith.constant 0 : index
    %c0_63 = arith.constant 0 : index
    %189 = vector.load %arg11[%c0_62, %c0_63] : memref<1x96xf32, #tpu.memory_space<vmem>>, vector<1x96xf32>
    %190 = vector.broadcast %189 : vector<1x96xf32> to vector<8x96xf32>
    %191 = arith.addf %188, %190 : vector<8x96xf32>
    %192 = vector.extract_strided_slice %191 {offsets = [0, 0], sizes = [8, 8], strides = [1, 1]} : vector<8x96xf32> to vector<8x8xf32>
    %193 = vector.extract_strided_slice %191 {offsets = [0, 32], sizes = [8, 8], strides = [1, 1]} : vector<8x96xf32> to vector<8x8xf32>
    %194 = vector.extract_strided_slice %191 {offsets = [0, 64], sizes = [8, 8], strides = [1, 1]} : vector<8x96xf32> to vector<8x8xf32>
    %195 = arith.truncf %192 : vector<8x8xf32> to vector<8x8xbf16>
    %196 = arith.truncf %193 : vector<8x8xf32> to vector<8x8xbf16>
    %cst_64 = arith.constant dense<0.000000e+00> : vector<8x8xf32>
    %197 = tpu.matmul %195, %196, %cst_64 {dimension_numbers = #tpu.dot_dimension_numbers<[1], [1], [0], [0], [0, 0, 1, 0], [], []>} : vector<8x8xbf16>, vector<8x8xbf16>, vector<8x8xf32> -> vector<8x8xf32>
    %cst_65 = arith.constant dense<0xFF800000> : vector<8xf32>
    %198 = vector.multi_reduction <maximumf>, %197, %cst_65 [1] : vector<8x8xf32> to vector<8xf32>
    %199 = vector.shape_cast %198 : vector<8xf32> to vector<8x1xf32>
    %200 = vector.broadcast %199 : vector<8x1xf32> to vector<8x8xf32>
    %201 = arith.subf %197, %200 : vector<8x8xf32>
    %202 = math.exp %201 : vector<8x8xf32>
    %cst_66 = arith.constant dense<0.000000e+00> : vector<8xf32>
    %203 = vector.multi_reduction <add>, %202, %cst_66 [1] : vector<8x8xf32> to vector<8xf32>
    %204 = vector.shape_cast %203 : vector<8xf32> to vector<8x1xf32>
    %205 = arith.truncf %202 : vector<8x8xf32> to vector<8x8xbf16>
    %206 = arith.truncf %194 : vector<8x8xf32> to vector<8x8xbf16>
    %cst_67 = arith.constant dense<0.000000e+00> : vector<8x8xf32>
    %207 = tpu.matmul %205, %206, %cst_67 {dimension_numbers = #tpu.dot_dimension_numbers<[1], [0], [0], [1], [0, 0, 1, 1], [], []>} : vector<8x8xbf16>, vector<8x8xbf16>, vector<8x8xf32> -> vector<8x8xf32>
    %208 = tpu.reciprocal %204 {approx = true} : vector<8x1xf32> -> vector<8x1xf32>
    %209 = vector.broadcast %208 : vector<8x1xf32> to vector<8x8xf32>
    %210 = arith.mulf %207, %209 : vector<8x8xf32>
    %211 = vector.extract_strided_slice %191 {offsets = [0, 8], sizes = [8, 8], strides = [1, 1]} : vector<8x96xf32> to vector<8x8xf32>
    %212 = vector.extract_strided_slice %191 {offsets = [0, 40], sizes = [8, 8], strides = [1, 1]} : vector<8x96xf32> to vector<8x8xf32>
    %213 = vector.extract_strided_slice %191 {offsets = [0, 72], sizes = [8, 8], strides = [1, 1]} : vector<8x96xf32> to vector<8x8xf32>
    %214 = arith.truncf %211 : vector<8x8xf32> to vector<8x8xbf16>
    %215 = arith.truncf %212 : vector<8x8xf32> to vector<8x8xbf16>
    %cst_68 = arith.constant dense<0.000000e+00> : vector<8x8xf32>
    %216 = tpu.matmul %214, %215, %cst_68 {dimension_numbers = #tpu.dot_dimension_numbers<[1], [1], [0], [0], [0, 0, 1, 0], [], []>} : vector<8x8xbf16>, vector<8x8xbf16>, vector<8x8xf32> -> vector<8x8xf32>
    %cst_69 = arith.constant dense<0xFF800000> : vector<8xf32>
    %217 = vector.multi_reduction <maximumf>, %216, %cst_69 [1] : vector<8x8xf32> to vector<8xf32>
    %218 = vector.shape_cast %217 : vector<8xf32> to vector<8x1xf32>
    %219 = vector.broadcast %218 : vector<8x1xf32> to vector<8x8xf32>
    %220 = arith.subf %216, %219 : vector<8x8xf32>
    %221 = math.exp %220 : vector<8x8xf32>
    %cst_70 = arith.constant dense<0.000000e+00> : vector<8xf32>
    %222 = vector.multi_reduction <add>, %221, %cst_70 [1] : vector<8x8xf32> to vector<8xf32>
    %223 = vector.shape_cast %222 : vector<8xf32> to vector<8x1xf32>
    %224 = arith.truncf %221 : vector<8x8xf32> to vector<8x8xbf16>
    %225 = arith.truncf %213 : vector<8x8xf32> to vector<8x8xbf16>
    %cst_71 = arith.constant dense<0.000000e+00> : vector<8x8xf32>
    %226 = tpu.matmul %224, %225, %cst_71 {dimension_numbers = #tpu.dot_dimension_numbers<[1], [0], [0], [1], [0, 0, 1, 1], [], []>} : vector<8x8xbf16>, vector<8x8xbf16>, vector<8x8xf32> -> vector<8x8xf32>
    %227 = tpu.reciprocal %223 {approx = true} : vector<8x1xf32> -> vector<8x1xf32>
    %228 = vector.broadcast %227 : vector<8x1xf32> to vector<8x8xf32>
    %229 = arith.mulf %226, %228 : vector<8x8xf32>
    %230 = vector.extract_strided_slice %191 {offsets = [0, 16], sizes = [8, 8], strides = [1, 1]} : vector<8x96xf32> to vector<8x8xf32>
    %231 = vector.extract_strided_slice %191 {offsets = [0, 48], sizes = [8, 8], strides = [1, 1]} : vector<8x96xf32> to vector<8x8xf32>
    %232 = vector.extract_strided_slice %191 {offsets = [0, 80], sizes = [8, 8], strides = [1, 1]} : vector<8x96xf32> to vector<8x8xf32>
    %233 = arith.truncf %230 : vector<8x8xf32> to vector<8x8xbf16>
    %234 = arith.truncf %231 : vector<8x8xf32> to vector<8x8xbf16>
    %cst_72 = arith.constant dense<0.000000e+00> : vector<8x8xf32>
    %235 = tpu.matmul %233, %234, %cst_72 {dimension_numbers = #tpu.dot_dimension_numbers<[1], [1], [0], [0], [0, 0, 1, 0], [], []>} : vector<8x8xbf16>, vector<8x8xbf16>, vector<8x8xf32> -> vector<8x8xf32>
    %cst_73 = arith.constant dense<0xFF800000> : vector<8xf32>
    %236 = vector.multi_reduction <maximumf>, %235, %cst_73 [1] : vector<8x8xf32> to vector<8xf32>
    %237 = vector.shape_cast %236 : vector<8xf32> to vector<8x1xf32>
    %238 = vector.broadcast %237 : vector<8x1xf32> to vector<8x8xf32>
    %239 = arith.subf %235, %238 : vector<8x8xf32>
    %240 = math.exp %239 : vector<8x8xf32>
    %cst_74 = arith.constant dense<0.000000e+00> : vector<8xf32>
    %241 = vector.multi_reduction <add>, %240, %cst_74 [1] : vector<8x8xf32> to vector<8xf32>
    %242 = vector.shape_cast %241 : vector<8xf32> to vector<8x1xf32>
    %243 = arith.truncf %240 : vector<8x8xf32> to vector<8x8xbf16>
    %244 = arith.truncf %232 : vector<8x8xf32> to vector<8x8xbf16>
    %cst_75 = arith.constant dense<0.000000e+00> : vector<8x8xf32>
    %245 = tpu.matmul %243, %244, %cst_75 {dimension_numbers = #tpu.dot_dimension_numbers<[1], [0], [0], [1], [0, 0, 1, 1], [], []>} : vector<8x8xbf16>, vector<8x8xbf16>, vector<8x8xf32> -> vector<8x8xf32>
    %246 = tpu.reciprocal %242 {approx = true} : vector<8x1xf32> -> vector<8x1xf32>
    %247 = vector.broadcast %246 : vector<8x1xf32> to vector<8x8xf32>
    %248 = arith.mulf %245, %247 : vector<8x8xf32>
    %249 = vector.extract_strided_slice %191 {offsets = [0, 24], sizes = [8, 8], strides = [1, 1]} : vector<8x96xf32> to vector<8x8xf32>
    %250 = vector.extract_strided_slice %191 {offsets = [0, 56], sizes = [8, 8], strides = [1, 1]} : vector<8x96xf32> to vector<8x8xf32>
    %251 = vector.extract_strided_slice %191 {offsets = [0, 88], sizes = [8, 8], strides = [1, 1]} : vector<8x96xf32> to vector<8x8xf32>
    %252 = arith.truncf %249 : vector<8x8xf32> to vector<8x8xbf16>
    %253 = arith.truncf %250 : vector<8x8xf32> to vector<8x8xbf16>
    %cst_76 = arith.constant dense<0.000000e+00> : vector<8x8xf32>
    %254 = tpu.matmul %252, %253, %cst_76 {dimension_numbers = #tpu.dot_dimension_numbers<[1], [1], [0], [0], [0, 0, 1, 0], [], []>} : vector<8x8xbf16>, vector<8x8xbf16>, vector<8x8xf32> -> vector<8x8xf32>
    %cst_77 = arith.constant dense<0xFF800000> : vector<8xf32>
    %255 = vector.multi_reduction <maximumf>, %254, %cst_77 [1] : vector<8x8xf32> to vector<8xf32>
    %256 = vector.shape_cast %255 : vector<8xf32> to vector<8x1xf32>
    %257 = vector.broadcast %256 : vector<8x1xf32> to vector<8x8xf32>
    %258 = arith.subf %254, %257 : vector<8x8xf32>
    %259 = math.exp %258 : vector<8x8xf32>
    %cst_78 = arith.constant dense<0.000000e+00> : vector<8xf32>
    %260 = vector.multi_reduction <add>, %259, %cst_78 [1] : vector<8x8xf32> to vector<8xf32>
    %261 = vector.shape_cast %260 : vector<8xf32> to vector<8x1xf32>
    %262 = arith.truncf %259 : vector<8x8xf32> to vector<8x8xbf16>
    %263 = arith.truncf %251 : vector<8x8xf32> to vector<8x8xbf16>
    %cst_79 = arith.constant dense<0.000000e+00> : vector<8x8xf32>
    %264 = tpu.matmul %262, %263, %cst_79 {dimension_numbers = #tpu.dot_dimension_numbers<[1], [0], [0], [1], [0, 0, 1, 1], [], []>} : vector<8x8xbf16>, vector<8x8xbf16>, vector<8x8xf32> -> vector<8x8xf32>
    %265 = tpu.reciprocal %261 {approx = true} : vector<8x1xf32> -> vector<8x1xf32>
    %266 = vector.broadcast %265 : vector<8x1xf32> to vector<8x8xf32>
    %267 = arith.mulf %264, %266 : vector<8x8xf32>
    %268 = tpu.concatenate %210, %229, %248, %267 in 1 : vector<8x8xf32>, vector<8x8xf32>, vector<8x8xf32>, vector<8x8xf32> -> vector<8x32xf32>
    %269 = arith.truncf %268 : vector<8x32xf32> to vector<8x32xbf16>
    %c0_80 = arith.constant 0 : index
    %c0_81 = arith.constant 0 : index
    %270 = vector.load %arg12[%c0_80, %c0_81] : memref<32x32xbf16, #tpu.memory_space<vmem>>, vector<32x32xbf16>
    %cst_82 = arith.constant dense<0.000000e+00> : vector<8x32xf32>
    %271 = tpu.matmul %269, %270, %cst_82 {dimension_numbers = #tpu.dot_dimension_numbers<[1], [0], [0], [1], [0, 0, 1, 1], [], []>} : vector<8x32xbf16>, vector<32x32xbf16>, vector<8x32xf32> -> vector<8x32xf32>
    %c0_83 = arith.constant 0 : index
    %c0_84 = arith.constant 0 : index
    %272 = vector.load %arg13[%c0_83, %c0_84] : memref<1x32xf32, #tpu.memory_space<vmem>>, vector<1x32xf32>
    %273 = vector.broadcast %272 : vector<1x32xf32> to vector<8x32xf32>
    %274 = arith.addf %271, %273 : vector<8x32xf32>
    %c0_85 = arith.constant 0 : index
    %c0_86 = arith.constant 0 : index
    %c0_87 = arith.constant 0 : index
    %275 = vector.load %arg16[%c0_85, %c0_86, %c0_87] : memref<1x8x32xf32, #tpu.memory_space<vmem>>, vector<1x8x32xf32>
    %276 = vector.shape_cast %275 : vector<1x8x32xf32> to vector<8x32xf32>
    %277 = vector.shape_cast %274 : vector<8x32xf32> to vector<1x8x32xf32>
    tpu.vector_store %arg16[%c0_85, %c0_86, %c0_87], %277 {strides = array<i32>} : memref<1x8x32xf32, #tpu.memory_space<vmem>>, vector<1x8x32xf32>,
    return
  }
  func.func @transform_0(%arg0: i32) -> (i32, i32, i32) {
    %c0_i32 = arith.constant 0 : i32
    %c0_i32_0 = arith.constant 0 : i32
    %c0_i32_1 = arith.constant 0 : i32
    return %arg0, %c0_i32, %c0_i32_0 : i32, i32, i32
  }
  func.func @transform_1(%arg0: i32) -> (i32, i32) {
    %c0_i32 = arith.constant 0 : i32
    %c0_i32_0 = arith.constant 0 : i32
    %c0_i32_1 = arith.constant 0 : i32
    return %c0_i32, %c0_i32_0 : i32, i32
  }
  func.func @transform_2(%arg0: i32) -> (i32, i32) {
    %c0_i32 = arith.constant 0 : i32
    %c0_i32_0 = arith.constant 0 : i32
    %c0_i32_1 = arith.constant 0 : i32
    return %c0_i32, %c0_i32_0 : i32, i32
  }
  func.func @transform_3(%arg0: i32) -> (i32, i32) {
    %c0_i32 = arith.constant 0 : i32
    %c0_i32_0 = arith.constant 0 : i32
    %c0_i32_1 = arith.constant 0 : i32
    return %c0_i32, %c0_i32_0 : i32, i32
  }
  func.func @transform_4(%arg0: i32) -> (i32, i32) {
    %c0_i32 = arith.constant 0 : i32
    %c0_i32_0 = arith.constant 0 : i32
    %c0_i32_1 = arith.constant 0 : i32
    return %c0_i32, %c0_i32_0 : i32, i32
  }
  func.func @transform_5(%arg0: i32) -> (i32, i32) {
    %c0_i32 = arith.constant 0 : i32
    %c0_i32_0 = arith.constant 0 : i32
    %c0_i32_1 = arith.constant 0 : i32
    return %c0_i32, %c0_i32_0 : i32, i32
  }
  func.func @transform_6(%arg0: i32) -> (i32, i32) {
    %c0_i32 = arith.constant 0 : i32
    %c0_i32_0 = arith.constant 0 : i32
    %c0_i32_1 = arith.constant 0 : i32
    return %c0_i32, %c0_i32_0 : i32, i32
  }
  func.func @transform_7(%arg0: i32) -> (i32, i32) {
    %c0_i32 = arith.constant 0 : i32
    %c0_i32_0 = arith.constant 0 : i32
    %c0_i32_1 = arith.constant 0 : i32
    return %c0_i32, %c0_i32_0 : i32, i32
  }
  func.func @transform_8(%arg0: i32) -> (i32, i32) {
    %c0_i32 = arith.constant 0 : i32
    %c0_i32_0 = arith.constant 0 : i32
    %c0_i32_1 = arith.constant 0 : i32
    return %c0_i32, %c0_i32_0 : i32, i32
  }
  func.func @transform_9(%arg0: i32) -> (i32, i32) {
    %c0_i32 = arith.constant 0 : i32
    %c0_i32_0 = arith.constant 0 : i32
    %c0_i32_1 = arith.constant 0 : i32
    return %c0_i32, %c0_i32_0 : i32, i32
  }
  func.func @transform_10(%arg0: i32) -> (i32, i32) {
    %c0_i32 = arith.constant 0 : i32
    %c0_i32_0 = arith.constant 0 : i32
    %c0_i32_1 = arith.constant 0 : i32
    return %c0_i32, %c0_i32_0 : i32, i32
  }
  func.func @transform_11(%arg0: i32) -> (i32, i32) {
    %c0_i32 = arith.constant 0 : i32
    %c0_i32_0 = arith.constant 0 : i32
    %c0_i32_1 = arith.constant 0 : i32
    return %c0_i32, %c0_i32_0 : i32, i32
  }
  func.func @transform_12(%arg0: i32) -> (i32, i32) {
    %c0_i32 = arith.constant 0 : i32
    %c0_i32_0 = arith.constant 0 : i32
    %c0_i32_1 = arith.constant 0 : i32
    return %c0_i32, %c0_i32_0 : i32, i32
  }
  func.func @transform_13(%arg0: i32) -> (i32, i32, i32) {
    %c0_i32 = arith.constant 0 : i32
    %c0_i32_0 = arith.constant 0 : i32
    %c0_i32_1 = arith.constant 0 : i32
    return %arg0, %c0_i32, %c0_i32_0 : i32, i32, i32
  }
  func.func @transform_14(%arg0: i32) -> (i32, i32, i32) {
    %c0_i32 = arith.constant 0 : i32
    %c0_i32_0 = arith.constant 0 : i32
    %c0_i32_1 = arith.constant 0 : i32
    return %arg0, %c0_i32, %c0_i32_0 : i32, i32, i32
  }
  func.func @transform_15(%arg0: i32) -> (i32, i32, i32) {
    %c0_i32 = arith.constant 0 : i32
    %c0_i32_0 = arith.constant 0 : i32
    %c0_i32_1 = arith.constant 0 : i32
    return %arg0, %c0_i32, %c0_i32_0 : i32, i32, i32
  }
}

</mosaic_0001>

<llo_original>
// kernel: tpu_custom_call.1
$region0: #{tpu_custom_call.1}
  #allocation0 [shape = 'u32[]', space=smem, size = 0x4, offset = 0x4, fixed_abs, tag = 'smem constant byte address 0x4 - core index']
  #allocation1 [shape = 'u32[144,128]{1,0:T(1,128)}', space=vmem, size = 0x12000, scoped, tag = 'internal scratch']
  %s0 = inlined_call_operand.hbm [shape: f32[2,8,32], index: 0, kind: input, shape index: {}]
  %s1 = inlined_call_operand.hbm [shape: bf16[32,96], index: 1, kind: input, shape index: {}]
  %s2 = inlined_call_operand.hbm [shape: f32[1,96], index: 2, kind: input, shape index: {}]
  %s3 = inlined_call_operand.hbm [shape: bf16[32,32], index: 3, kind: input, shape index: {}]
  %s4 = inlined_call_operand.hbm [shape: f32[1,32], index: 4, kind: input, shape index: {}]
  %s5 = inlined_call_operand.hbm [shape: bf16[32,96], index: 5, kind: input, shape index: {}]
  %s6 = inlined_call_operand.hbm [shape: f32[1,96], index: 6, kind: input, shape index: {}]
  %s7 = inlined_call_operand.hbm [shape: bf16[32,32], index: 7, kind: input, shape index: {}]
  %s8 = inlined_call_operand.hbm [shape: f32[1,32], index: 8, kind: input, shape index: {}]
  %s9 = inlined_call_operand.vmem [shape: bf16[32,96], index: 9, kind: input, shape index: {}]
  %s10 = inlined_call_operand.vmem [shape: f32[1,96], index: 10, kind: input, shape index: {}]
  %s11 = inlined_call_operand.hbm [shape: bf16[32,32], index: 11, kind: input, shape index: {}]
  %s12 = inlined_call_operand.vmem [shape: f32[1,32], index: 12, kind: input, shape index: {}]
  %s13 = inlined_call_operand.hbm [shape: f32[2,8,32], index: 13, kind: output, shape index: {0}]
  %s14 = inlined_call_operand.hbm [shape: f32[2,8,32], index: 14, kind: output, shape index: {1}]
  %s15 = inlined_call_operand.hbm [shape: f32[2,8,32], index: 15, kind: output, shape index: {2}]
  %16 = xla_tuple %s13, %s14, %s15
  %s17 = sld [smem:[#allocation0]]
  $region141: #{tpu_custom_call.1} parent=0
    _
  %s19 = ssub.s32 1, %s17
  %s20 = scalar_select 0, %s19, %s17
  $region1: #{tpu_custom_call.1} parent=0
    #allocation2 [shape = 'u8[8192]{0}', space=vmem, size = 0x2000, scoped, tag = 'input window, operand 0']
    #allocation3 [shape = 's32[2]{0}', space=sflag, size = 0x8, scoped, tag = 'scoped memory for tpu_custom_call.1']
    #allocation4 [shape = 's32[2]{0}', space=sflag, size = 0x8, scoped, tag = 'scoped memory for tpu_custom_call.1']
    #allocation5 [shape = 'u8[8192]{0}', space=vmem, size = 0x2000, scoped, tag = 'input window, operand 1, single buffered']
    #allocation6 [shape = 's32[1]{0}', space=sflag, size = 0x4, scoped, tag = 'scoped memory for tpu_custom_call.1']
    #allocation7 [shape = 'u8[512]{0}', space=vmem, size = 0x400, scoped, tag = 'input window, operand 2, single buffered']
    #allocation8 [shape = 'u8[8192]{0}', space=vmem, size = 0x2000, scoped, tag = 'input window, operand 3, single buffered']
    #allocation9 [shape = 's32[1]{0}', space=sflag, size = 0x4, scoped, tag = 'scoped memory for tpu_custom_call.1']
    #allocation10 [shape = 'u8[512]{0}', space=vmem, size = 0x400, scoped, tag = 'input window, operand 4, single buffered']
    #allocation11 [shape = 'u8[8192]{0}', space=vmem, size = 0x2000, scoped, tag = 'input window, operand 5, single buffered']
    #allocation12 [shape = 's32[1]{0}', space=sflag, size = 0x4, scoped, tag = 'scoped memory for tpu_custom_call.1']
    #allocation13 [shape = 'u8[512]{0}', space=vmem, size = 0x400, scoped, tag = 'input window, operand 6, single buffered']
    #allocation14 [shape = 'u8[8192]{0}', space=vmem, size = 0x2000, scoped, tag = 'input window, operand 7, single buffered']
    #allocation15 [shape = 's32[1]{0}', space=sflag, size = 0x4, scoped, tag = 'scoped memory for tpu_custom_call.1']
    #allocation16 [shape = 'u8[512]{0}', space=vmem, size = 0x400, scoped, tag = 'input window, operand 8, single buffered']
    #allocation17 [shape = 'u8[8192]{0}', space=vmem, size = 0x2000, scoped, tag = 'input window, operand 11, single buffered']
    #allocation18 [shape = 's32[1]{0}', space=sflag, size = 0x4, scoped, tag = 'scoped memory for tpu_custom_call.1']
    #allocation19 [shape = 'u8[8192]{0}', space=vmem, size = 0x2000, scoped, tag = 'output window, operand 0']
    #allocation20 [shape = 'u8[8192]{0}', space=vmem, size = 0x2000, scoped, tag = 'output window, operand 1']
    #allocation21 [shape = 's32[2]{0}', space=sflag, size = 0x8, scoped, tag = 'scoped memory for tpu_custom_call.1']
    #allocation22 [shape = 'u8[8192]{0}', space=vmem, size = 0x2000, scoped, tag = 'output window, operand 2']
    %21 = vsyncpa [#allocation3], 0
    %s22 = scalar_lea.sflag [#allocation3], 1
    %23 = vsyncpa %s22, 0
    %24 = vsyncpa [#allocation6], 0
    %25 = vsyncpa [#allocation9], 0
    %26 = vsyncpa [#allocation12], 0
    %27 = vsyncpa [#allocation15], 0
    %28 = vsyncpa [#allocation18], 0
    %29 = vsyncpa [#allocation4], 0
    %s30 = scalar_lea.sflag [#allocation4], 1
    %31 = vsyncpa %s30, 0
    %32 = vsyncpa [#allocation21], 0
    %s33 = scalar_lea.sflag [#allocation21], 1
    %34 = vsyncpa %s33, 0
    loop: start=0, step=1, limit=4
    $region2: #{tpu_custom_call.1} parent=1 // loop_pre_header
      _
    $region3: #{tpu_custom_call.1} parent=1 // loop_header
      %s36 = sphi 0, %s40
      %p37 = scmp.ge.s32.totalorder %s36, 4
      %s46 = sphi 0, %s48
      %s49 = sphi 0, %s46
      %s50 = sphi 0, %s49
      %s66 = sphi 0, %s50
      %s70 = sphi 0, %s70
      %s72 = sphi 0, %s70
      %s73 = sphi 0, %s72
      %s87 = sphi 0, %s73
      %s91 = sphi 0, %s91
      %s93 = sphi 0, %s91
      %s94 = sphi 0, %s93
      %s108 = sphi 0, %s94
      %s112 = sphi 0, %s112
      %s114 = sphi 0, %s112
      %s115 = sphi 0, %s114
      %s129 = sphi 0, %s115
      %s133 = sphi 0, %s133
      %s135 = sphi 0, %s133
      %s136 = sphi 0, %s135
      %s150 = sphi 0, %s136
      %s154 = sphi 0, %s154
      %s156 = sphi 0, %s154
      %s157 = sphi 0, %s156
      %s171 = sphi 0, %s157
      %s175 = sphi 0, %s175
      %s177 = sphi 0, %s175
      %s178 = sphi 0, %s177
      %s192 = sphi 0, %s178
      %s196 = sphi 0, %s196
      %s198 = sphi 0, %s196
      %s199 = sphi 0, %s198
      %s213 = sphi 0, %s199
      %s217 = sphi 0, %s217
      %s219 = sphi 0, %s217
      %s220 = sphi 0, %s219
      %s234 = sphi 0, %s220
      %s238 = sphi 0, %s238
      %s240 = sphi 0, %s238
      %s241 = sphi 0, %s240
      %s255 = sphi 0, %s241
      %s259 = sphi 0, %s259
      %s261 = sphi 0, %s259
      %s262 = sphi 0, %s261
      %s276 = sphi 0, %s262
      %s280 = sphi 0, %s280
      %s282 = sphi 0, %s280
      %s283 = sphi 0, %s282
      %s297 = sphi 0, %s283
      %s301 = sphi 0, %s301
      %s303 = sphi 0, %s301
      %s304 = sphi 0, %s303
      %s318 = sphi 0, %s304
      %s324 = sphi 0, %s326
      %s327 = sphi 0, %s324
      %s328 = sphi 0, %s327
      %s344 = sphi 0, %s328
      %s350 = sphi 0, %s352
      %s353 = sphi 0, %s350
      %s354 = sphi 0, %s353
      %s370 = sphi 0, %s354
      %s376 = sphi 0, %s378
      %s379 = sphi 0, %s376
      %s380 = sphi 0, %s379
      %s396 = sphi 0, %s380
    $region4: #{tpu_custom_call.1} parent=1 // loop_header_branch
      %39 = sbr.rel (%p37) target = $region8
    $region5: #{tpu_custom_call.1} parent=1 // loop_body
      %s41 = ssub.s32 %s36, 1
      %s42 = ssub.s32 %s36, 2
      %s43 = sadd.s32 %s36, 1
      %s44 = ssub.s32 %s36, %s43
      %p45 = scmp.eq.s32.totalorder %s44, 0
      %s47 = sadd.s32 %s46, 1
      %s48 = scalar_select %p45, %s46, %s47
      %p51 = pneg %p45
      %p52 = scmp.eq.s32.totalorder %s36, 1
      %p53 = por %p51, %p52
      %p54 = scmp.ne.s32.totalorder %s46, %s49
      %p55 = scmp.eq.s32.totalorder %s36, 0
      %p56 = por %p54, %p55
      %p57 = scmp.ne.s32.totalorder %s46, %s49
      %p58 = scmp.eq.s32.totalorder %s41, 1
      %p59 = por %p57, %p58
      %p60 = scmp.ne.s32.totalorder %s49, %s50
      %p61 = scmp.eq.s32.totalorder %s41, 0
      %p62 = por %p60, %p61
      %p63 = scmp.ne.s32.totalorder %s49, %s50
      %p64 = scmp.eq.s32.totalorder %s42, 1
      %p65 = por %p63, %p64
      %p67 = scmp.ne.s32.totalorder %s50, %s66
      %p68 = scmp.eq.s32.totalorder %s42, 0
      %p69 = por %p67, %p68
      %s71 = sadd.s32 %s70, 1
      %p74 = scmp.eq.s32.totalorder %s36, 1
      %p75 = scmp.ne.s32.totalorder %s70, %s72
      %p76 = scmp.eq.s32.totalorder %s36, 0
      %p77 = por %p75, %p76
      %p78 = scmp.ne.s32.totalorder %s70, %s72
      %p79 = scmp.eq.s32.totalorder %s41, 1
      %p80 = por %p78, %p79
      %p81 = scmp.ne.s32.totalorder %s72, %s73
      %p82 = scmp.eq.s32.totalorder %s41, 0
      %p83 = por %p81, %p82
      %p84 = scmp.ne.s32.totalorder %s72, %s73
      %p85 = scmp.eq.s32.totalorder %s42, 1
      %p86 = por %p84, %p85
      %p88 = scmp.ne.s32.totalorder %s73, %s87
      %p89 = scmp.eq.s32.totalorder %s42, 0
      %p90 = por %p88, %p89
      %s92 = sadd.s32 %s91, 1
      %p95 = scmp.eq.s32.totalorder %s36, 1
      %p96 = scmp.ne.s32.totalorder %s91, %s93
      %p97 = scmp.eq.s32.totalorder %s36, 0
      %p98 = por %p96, %p97
      %p99 = scmp.ne.s32.totalorder %s91, %s93
      %p100 = scmp.eq.s32.totalorder %s41, 1
      %p101 = por %p99, %p100
      %p102 = scmp.ne.s32.totalorder %s93, %s94
      %p103 = scmp.eq.s32.totalorder %s41, 0
      %p104 = por %p102, %p103
      %p105 = scmp.ne.s32.totalorder %s93, %s94
      %p106 = scmp.eq.s32.totalorder %s42, 1
      %p107 = por %p105, %p106
      %p109 = scmp.ne.s32.totalorder %s94, %s108
      %p110 = scmp.eq.s32.totalorder %s42, 0
      %p111 = por %p109, %p110
      %s113 = sadd.s32 %s112, 1
      %p116 = scmp.eq.s32.totalorder %s36, 1
      %p117 = scmp.ne.s32.totalorder %s112, %s114
      %p118 = scmp.eq.s32.totalorder %s36, 0
      %p119 = por %p117, %p118
      %p120 = scmp.ne.s32.totalorder %s112, %s114
      %p121 = scmp.eq.s32.totalorder %s41, 1
      %p122 = por %p120, %p121
      %p123 = scmp.ne.s32.totalorder %s114, %s115
      %p124 = scmp.eq.s32.totalorder %s41, 0
      %p125 = por %p123, %p124
      %p126 = scmp.ne.s32.totalorder %s114, %s115
      %p127 = scmp.eq.s32.totalorder %s42, 1
      %p128 = por %p126, %p127
      %p130 = scmp.ne.s32.totalorder %s115, %s129
      %p131 = scmp.eq.s32.totalorder %s42, 0
      %p132 = por %p130, %p131
      %s134 = sadd.s32 %s133, 1
      %p137 = scmp.eq.s32.totalorder %s36, 1
      %p138 = scmp.ne.s32.totalorder %s133, %s135
      %p139 = scmp.eq.s32.totalorder %s36, 0
      %p140 = por %p138, %p139
      %p141 = scmp.ne.s32.totalorder %s133, %s135
      %p142 = scmp.eq.s32.totalorder %s41, 1
      %p143 = por %p141, %p142
      %p144 = scmp.ne.s32.totalorder %s135, %s136
      %p145 = scmp.eq.s32.totalorder %s41, 0
      %p146 = por %p144, %p145
      %p147 = scmp.ne.s32.totalorder %s135, %s136
      %p148 = scmp.eq.s32.totalorder %s42, 1
      %p149 = por %p147, %p148
      %p151 = scmp.ne.s32.totalorder %s136, %s150
      %p152 = scmp.eq.s32.totalorder %s42, 0
      %p153 = por %p151, %p152
      %s155 = sadd.s32 %s154, 1
      %p158 = scmp.eq.s32.totalorder %s36, 1
      %p159 = scmp.ne.s32.totalorder %s154, %s156
      %p160 = scmp.eq.s32.totalorder %s36, 0
      %p161 = por %p159, %p160
      %p162 = scmp.ne.s32.totalorder %s154, %s156
      %p163 = scmp.eq.s32.totalorder %s41, 1
      %p164 = por %p162, %p163
      %p165 = scmp.ne.s32.totalorder %s156, %s157
      %p166 = scmp.eq.s32.totalorder %s41, 0
      %p167 = por %p165, %p166
      %p168 = scmp.ne.s32.totalorder %s156, %s157
      %p169 = scmp.eq.s32.totalorder %s42, 1
      %p170 = por %p168, %p169
      %p172 = scmp.ne.s32.totalorder %s157, %s171
      %p173 = scmp.eq.s32.totalorder %s42, 0
      %p174 = por %p172, %p173
      %s176 = sadd.s32 %s175, 1
      %p179 = scmp.eq.s32.totalorder %s36, 1
      %p180 = scmp.ne.s32.totalorder %s175, %s177
      %p181 = scmp.eq.s32.totalorder %s36, 0
      %p182 = por %p180, %p181
      %p183 = scmp.ne.s32.totalorder %s175, %s177
      %p184 = scmp.eq.s32.totalorder %s41, 1
      %p185 = por %p183, %p184
      %p186 = scmp.ne.s32.totalorder %s177, %s178
      %p187 = scmp.eq.s32.totalorder %s41, 0
      %p188 = por %p186, %p187
      %p189 = scmp.ne.s32.totalorder %s177, %s178
      %p190 = scmp.eq.s32.totalorder %s42, 1
      %p191 = por %p189, %p190
      %p193 = scmp.ne.s32.totalorder %s178, %s192
      %p194 = scmp.eq.s32.totalorder %s42, 0
      %p195 = por %p193, %p194
      %s197 = sadd.s32 %s196, 1
      %p200 = scmp.eq.s32.totalorder %s36, 1
      %p201 = scmp.ne.s32.totalorder %s196, %s198
      %p202 = scmp.eq.s32.totalorder %s36, 0
      %p203 = por %p201, %p202
      %p204 = scmp.ne.s32.totalorder %s196, %s198
      %p205 = scmp.eq.s32.totalorder %s41, 1
      %p206 = por %p204, %p205
      %p207 = scmp.ne.s32.totalorder %s198, %s199
      %p208 = scmp.eq.s32.totalorder %s41, 0
      %p209 = por %p207, %p208
      %p210 = scmp.ne.s32.totalorder %s198, %s199
      %p211 = scmp.eq.s32.totalorder %s42, 1
      %p212 = por %p210, %p211
      %p214 = scmp.ne.s32.totalorder %s199, %s213
      %p215 = scmp.eq.s32.totalorder %s42, 0
      %p216 = por %p214, %p215
      %s218 = sadd.s32 %s217, 1
      %p221 = scmp.eq.s32.totalorder %s36, 1
      %p222 = scmp.ne.s32.totalorder %s217, %s219
      %p223 = scmp.eq.s32.totalorder %s36, 0
      %p224 = por %p222, %p223
      %p225 = scmp.ne.s32.totalorder %s217, %s219
      %p226 = scmp.eq.s32.totalorder %s41, 1
      %p227 = por %p225, %p226
      %p228 = scmp.ne.s32.totalorder %s219, %s220
      %p229 = scmp.eq.s32.totalorder %s41, 0
      %p230 = por %p228, %p229
      %p231 = scmp.ne.s32.totalorder %s219, %s220
      %p232 = scmp.eq.s32.totalorder %s42, 1
      %p233 = por %p231, %p232
      %p235 = scmp.ne.s32.totalorder %s220, %s234
      %p236 = scmp.eq.s32.totalorder %s42, 0
      %p237 = por %p235, %p236
      %s239 = sadd.s32 %s238, 1
      %p242 = scmp.eq.s32.totalorder %s36, 1
      %p243 = scmp.ne.s32.totalorder %s238, %s240
      %p244 = scmp.eq.s32.totalorder %s36, 0
      %p245 = por %p243, %p244
      %p246 = scmp.ne.s32.totalorder %s238, %s240
      %p247 = scmp.eq.s32.totalorder %s41, 1
      %p248 = por %p246, %p247
      %p249 = scmp.ne.s32.totalorder %s240, %s241
      %p250 = scmp.eq.s32.totalorder %s41, 0
      %p251 = por %p249, %p250
      %p252 = scmp.ne.s32.totalorder %s240, %s241
      %p253 = scmp.eq.s32.totalorder %s42, 1
      %p254 = por %p252, %p253
      %p256 = scmp.ne.s32.totalorder %s241, %s255
      %p257 = scmp.eq.s32.totalorder %s42, 0
      %p258 = por %p256, %p257
      %s260 = sadd.s32 %s259, 1
      %p263 = scmp.eq.s32.totalorder %s36, 1
      %p264 = scmp.ne.s32.totalorder %s259, %s261
      %p265 = scmp.eq.s32.totalorder %s36, 0
      %p266 = por %p264, %p265
      %p267 = scmp.ne.s32.totalorder %s259, %s261
      %p268 = scmp.eq.s32.totalorder %s41, 1
      %p269 = por %p267, %p268
      %p270 = scmp.ne.s32.totalorder %s261, %s262
      %p271 = scmp.eq.s32.totalorder %s41, 0
      %p272 = por %p270, %p271
      %p273 = scmp.ne.s32.totalorder %s261, %s262
      %p274 = scmp.eq.s32.totalorder %s42, 1
      %p275 = por %p273, %p274
      %p277 = scmp.ne.s32.totalorder %s262, %s276
      %p278 = scmp.eq.s32.totalorder %s42, 0
      %p279 = por %p277, %p278
      %s281 = sadd.s32 %s280, 1
      %p284 = scmp.eq.s32.totalorder %s36, 1
      %p285 = scmp.ne.s32.totalorder %s280, %s282
      %p286 = scmp.eq.s32.totalorder %s36, 0
      %p287 = por %p285, %p286
      %p288 = scmp.ne.s32.totalorder %s280, %s282
      %p289 = scmp.eq.s32.totalorder %s41, 1
      %p290 = por %p288, %p289
      %p291 = scmp.ne.s32.totalorder %s282, %s283
      %p292 = scmp.eq.s32.totalorder %s41, 0
      %p293 = por %p291, %p292
      %p294 = scmp.ne.s32.totalorder %s282, %s283
      %p295 = scmp.eq.s32.totalorder %s42, 1
      %p296 = por %p294, %p295
      %p298 = scmp.ne.s32.totalorder %s283, %s297
      %p299 = scmp.eq.s32.totalorder %s42, 0
      %p300 = por %p298, %p299
      %s302 = sadd.s32 %s301, 1
      %p305 = scmp.eq.s32.totalorder %s36, 1
      %p306 = scmp.ne.s32.totalorder %s301, %s303
      %p307 = scmp.eq.s32.totalorder %s36, 0
      %p308 = por %p306, %p307
      %p309 = scmp.ne.s32.totalorder %s301, %s303
      %p310 = scmp.eq.s32.totalorder %s41, 1
      %p311 = por %p309, %p310
      %p312 = scmp.ne.s32.totalorder %s303, %s304
      %p313 = scmp.eq.s32.totalorder %s41, 0
      %p314 = por %p312, %p313
      %p315 = scmp.ne.s32.totalorder %s303, %s304
      %p316 = scmp.eq.s32.totalorder %s42, 1
      %p317 = por %p315, %p316
      %p319 = scmp.ne.s32.totalorder %s304, %s318
      %p320 = scmp.eq.s32.totalorder %s42, 0
      %p321 = por %p319, %p320
      %s322 = ssub.s32 %s36, %s43
      %p323 = scmp.eq.s32.totalorder %s322, 0
      %s325 = sadd.s32 %s324, 1
      %s326 = scalar_select %p323, %s324, %s325
      %p329 = pneg %p323
      %p330 = scmp.eq.s32.totalorder %s36, 1
      %p331 = por %p329, %p330
      %p332 = scmp.ne.s32.totalorder %s324, %s327
      %p333 = scmp.eq.s32.totalorder %s36, 0
      %p334 = por %p332, %p333
      %p335 = scmp.ne.s32.totalorder %s324, %s327
      %p336 = scmp.eq.s32.totalorder %s41, 1
      %p337 = por %p335, %p336
      %p338 = scmp.ne.s32.totalorder %s327, %s328
      %p339 = scmp.eq.s32.totalorder %s41, 0
      %p340 = por %p338, %p339
      %p341 = scmp.ne.s32.totalorder %s327, %s328
      %p342 = scmp.eq.s32.totalorder %s42, 1
      %p343 = por %p341, %p342
      %p345 = scmp.ne.s32.totalorder %s328, %s344
      %p346 = scmp.eq.s32.totalorder %s42, 0
      %p347 = por %p345, %p346
      %s348 = ssub.s32 %s36, %s43
      %p349 = scmp.eq.s32.totalorder %s348, 0
      %s351 = sadd.s32 %s350, 1
      %s352 = scalar_select %p349, %s350, %s351
      %p355 = pneg %p349
      %p356 = scmp.eq.s32.totalorder %s36, 1
      %p357 = por %p355, %p356
      %p358 = scmp.ne.s32.totalorder %s350, %s353
      %p359 = scmp.eq.s32.totalorder %s36, 0
      %p360 = por %p358, %p359
      %p361 = scmp.ne.s32.totalorder %s350, %s353
      %p362 = scmp.eq.s32.totalorder %s41, 1
      %p363 = por %p361, %p362
      %p364 = scmp.ne.s32.totalorder %s353, %s354
      %p365 = scmp.eq.s32.totalorder %s41, 0
      %p366 = por %p364, %p365
      %p367 = scmp.ne.s32.totalorder %s353, %s354
      %p368 = scmp.eq.s32.totalorder %s42, 1
      %p369 = por %p367, %p368
      %p371 = scmp.ne.s32.totalorder %s354, %s370
      %p372 = scmp.eq.s32.totalorder %s42, 0
      %p373 = por %p371, %p372
      %s374 = ssub.s32 %s36, %s43
      %p375 = scmp.eq.s32.totalorder %s374, 0
      %s377 = sadd.s32 %s376, 1
      %s378 = scalar_select %p375, %s376, %s377
      %p381 = pneg %p375
      %p382 = scmp.eq.s32.totalorder %s36, 1
      %p383 = por %p381, %p382
      %p384 = scmp.ne.s32.totalorder %s376, %s379
      %p385 = scmp.eq.s32.totalorder %s36, 0
      %p386 = por %p384, %p385
      %p387 = scmp.ne.s32.totalorder %s376, %s379
      %p388 = scmp.eq.s32.totalorder %s41, 1
      %p389 = por %p387, %p388
      %p390 = scmp.ne.s32.totalorder %s379, %s380
      %p391 = scmp.eq.s32.totalorder %s41, 0
      %p392 = por %p390, %p391
      %p393 = scmp.ne.s32.totalorder %s379, %s380
      %p394 = scmp.eq.s32.totalorder %s42, 1
      %p395 = por %p393, %p394
      %p397 = scmp.ne.s32.totalorder %s380, %s396
      %p398 = scmp.eq.s32.totalorder %s42, 0
      %p399 = por %p397, %p398
      %p400 = scmp.le.s32.totalorder 1, %s36
      %p401 = scmp.lt.s32.totalorder %s36, 3
      %p402 = pnand %p400, %p401
      %p403 = pneg %p402
      // Predicated region
      $region9: #{tpu_custom_call.1} parent=5 // pred_check
        _
      $region10: #{tpu_custom_call.1} parent=5 // pred_check_branch
        %405 = sbr.rel (%p402) target = $region12
      $region11: #{tpu_custom_call.1} parent=5 // pred_region
        %s406 = ssub.s32 %s36, 1
        // Predicated region
        $region13: #{tpu_custom_call.1} parent=11 // pred_check
          %p407 = pneg %p83
        $region14: #{tpu_custom_call.1} parent=11 // pred_check_branch
          %409 = sbr.rel (%p407) target = $region16
        $region15: #{tpu_custom_call.1} parent=11 // pred_region
          %s411 = ssub.s32 256, 256
          %412 = vsyncadd [#allocation6], %s411
          %s413 = sshll.u32 [#allocation5], 4
          %s414 = int_to_ptr.vmem [resolvable:$true] %s413
          %419 = dma.hbm_to_vmem [thread:$0]  %s1, 256, %s414, [#allocation6], 64, 64, 4
        $region16: #{tpu_custom_call.1} parent=11 // pred_fallthru
          _
        // Predicated region
        $region17: #{tpu_custom_call.1} parent=11 // pred_check
          %p420 = pneg %p104
        $region18: #{tpu_custom_call.1} parent=11 // pred_check_branch
          %422 = sbr.rel (%p420) target = $region20
        $region19: #{tpu_custom_call.1} parent=11 // pred_region
          %s424 = ssub.s32 16, 16
          %425 = vsyncadd [#allocation6], %s424
          %s427 = sshll.u32 [#allocation7], 4
          %s428 = int_to_ptr.vmem [resolvable:$true] %s427
          %430 = dma.hbm_to_vmem [thread:$0]  %s2, 16, %s428, [#allocation6]
        $region20: #{tpu_custom_call.1} parent=11 // pred_fallthru
          _
        // Predicated region
        $region21: #{tpu_custom_call.1} parent=11 // pred_check
          %p431 = pneg %p125
        $region22: #{tpu_custom_call.1} parent=11 // pred_check_branch
          %433 = sbr.rel (%p431) target = $region24
        $region23: #{tpu_custom_call.1} parent=11 // pred_region
          %s435 = ssub.s32 256, 256
          %436 = vsyncadd [#allocation9], %s435
          %s437 = sshll.u32 [#allocation8], 4
          %s438 = int_to_ptr.vmem [resolvable:$true] %s437
          %443 = dma.hbm_to_vmem [thread:$0]  %s3, 256, %s438, [#allocation9], 64, 64, 4
        $region24: #{tpu_custom_call.1} parent=11 // pred_fallthru
          _
        // Predicated region
        $region25: #{tpu_custom_call.1} parent=11 // pred_check
          %p444 = pneg %p146
        $region26: #{tpu_custom_call.1} parent=11 // pred_check_branch
          %446 = sbr.rel (%p444) target = $region28
        $region27: #{tpu_custom_call.1} parent=11 // pred_region
          %s448 = ssub.s32 16, 16
          %449 = vsyncadd [#allocation9], %s448
          %s451 = sshll.u32 [#allocation10], 4
          %s452 = int_to_ptr.vmem [resolvable:$true] %s451
          %454 = dma.hbm_to_vmem [thread:$0]  %s4, 16, %s452, [#allocation9]
        $region28: #{tpu_custom_call.1} parent=11 // pred_fallthru
          _
        // Predicated region
        $region29: #{tpu_custom_call.1} parent=11 // pred_check
          %p455 = pneg %p167
        $region30: #{tpu_custom_call.1} parent=11 // pred_check_branch
          %457 = sbr.rel (%p455) target = $region32
        $region31: #{tpu_custom_call.1} parent=11 // pred_region
          %s459 = ssub.s32 256, 256
          %460 = vsyncadd [#allocation12], %s459
          %s461 = sshll.u32 [#allocation11], 4
          %s462 = int_to_ptr.vmem [resolvable:$true] %s461
          %467 = dma.hbm_to_vmem [thread:$0]  %s5, 256, %s462, [#allocation12], 64, 64, 4
        $region32: #{tpu_custom_call.1} parent=11 // pred_fallthru
          _
        // Predicated region
        $region33: #{tpu_custom_call.1} parent=11 // pred_check
          %p468 = pneg %p188
        $region34: #{tpu_custom_call.1} parent=11 // pred_check_branch
          %470 = sbr.rel (%p468) target = $region36
        $region35: #{tpu_custom_call.1} parent=11 // pred_region
          %s472 = ssub.s32 16, 16
          %473 = vsyncadd [#allocation12], %s472
          %s475 = sshll.u32 [#allocation13], 4
          %s476 = int_to_ptr.vmem [resolvable:$true] %s475
          %478 = dma.hbm_to_vmem [thread:$0]  %s6, 16, %s476, [#allocation12]
        $region36: #{tpu_custom_call.1} parent=11 // pred_fallthru
          _
        // Predicated region
        $region37: #{tpu_custom_call.1} parent=11 // pred_check
          %p479 = pneg %p209
        $region38: #{tpu_custom_call.1} parent=11 // pred_check_branch
          %481 = sbr.rel (%p479) target = $region40
        $region39: #{tpu_custom_call.1} parent=11 // pred_region
          %s483 = ssub.s32 256, 256
          %484 = vsyncadd [#allocation15], %s483
          %s485 = sshll.u32 [#allocation14], 4
          %s486 = int_to_ptr.vmem [resolvable:$true] %s485
          %491 = dma.hbm_to_vmem [thread:$0]  %s7, 256, %s486, [#allocation15], 64, 64, 4
        $region40: #{tpu_custom_call.1} parent=11 // pred_fallthru
          _
        // Predicated region
        $region41: #{tpu_custom_call.1} parent=11 // pred_check
          %p492 = pneg %p230
        $region42: #{tpu_custom_call.1} parent=11 // pred_check_branch
          %494 = sbr.rel (%p492) target = $region44
        $region43: #{tpu_custom_call.1} parent=11 // pred_region
          %s496 = ssub.s32 16, 16
          %497 = vsyncadd [#allocation15], %s496
          %s499 = sshll.u32 [#allocation16], 4
          %s500 = int_to_ptr.vmem [resolvable:$true] %s499
          %502 = dma.hbm_to_vmem [thread:$0]  %s8, 16, %s500, [#allocation15]
        $region44: #{tpu_custom_call.1} parent=11 // pred_fallthru
          _
        // Predicated region
        $region45: #{tpu_custom_call.1} parent=11 // pred_check
          %p503 = pneg %p251
        $region46: #{tpu_custom_call.1} parent=11 // pred_check_branch
          %505 = sbr.rel (%p503) target = $region48
        $region47: #{tpu_custom_call.1} parent=11 // pred_region
          _
        $region48: #{tpu_custom_call.1} parent=11 // pred_fallthru
          _
        // Predicated region
        $region49: #{tpu_custom_call.1} parent=11 // pred_check
          %p506 = pneg %p272
        $region50: #{tpu_custom_call.1} parent=11 // pred_check_branch
          %508 = sbr.rel (%p506) target = $region52
        $region51: #{tpu_custom_call.1} parent=11 // pred_region
          _
        $region52: #{tpu_custom_call.1} parent=11 // pred_fallthru
          _
        // Predicated region
        $region53: #{tpu_custom_call.1} parent=11 // pred_check
          %p509 = pneg %p293
        $region54: #{tpu_custom_call.1} parent=11 // pred_check_branch
          %511 = sbr.rel (%p509) target = $region56
        $region55: #{tpu_custom_call.1} parent=11 // pred_region
          %s513 = ssub.s32 256, 256
          %514 = vsyncadd [#allocation18], %s513
          %s515 = sshll.u32 [#allocation17], 4
          %s516 = int_to_ptr.vmem [resolvable:$true] %s515
          %521 = dma.hbm_to_vmem [thread:$0]  %s11, 256, %s516, [#allocation18], 64, 64, 4
        $region56: #{tpu_custom_call.1} parent=11 // pred_fallthru
          _
        // Predicated region
        $region57: #{tpu_custom_call.1} parent=11 // pred_check
          %p522 = pneg %p314
        $region58: #{tpu_custom_call.1} parent=11 // pred_check_branch
          %524 = sbr.rel (%p522) target = $region60
        $region59: #{tpu_custom_call.1} parent=11 // pred_region
          _
        $region60: #{tpu_custom_call.1} parent=11 // pred_fallthru
          _
      $region12: #{tpu_custom_call.1} parent=5 // pred_fallthru
        _
      %p525 = scmp.lt.s32.totalorder %s36, 2
      // Predicated region
      $region61: #{tpu_custom_call.1} parent=5 // pred_check
        %p526 = pneg %p525
      $region62: #{tpu_custom_call.1} parent=5 // pred_check_branch
        %528 = sbr.rel (%p526) target = $region64
      $region63: #{tpu_custom_call.1} parent=5 // pred_region
        // Predicated region
        $region65: #{tpu_custom_call.1} parent=63 // pred_check
          %p529 = pneg %p56
        $region66: #{tpu_custom_call.1} parent=63 // pred_check_branch
          %531 = sbr.rel (%p529) target = $region68
        $region67: #{tpu_custom_call.1} parent=63 // pred_region
          %s532 = sand.u32 %s46, 1
          %s533 = scalar_lea.sflag [#allocation3], %s532
          %s534 = sand.u32 %s46, 1
          %s535 = smul.addr %s534, 8
          %s536 = scalar_lea.vmem [#allocation2], %s535
          %s538 = ssub.s32 128, 128
          %539 = vsyncadd %s533, %s538
          %s540 = smul.addr %s36, 128
          %s541 = scalar_lea.hbm %s0, %s540
          %s543 = sshll.u32 %s536, 4
          %s544 = int_to_ptr.vmem [resolvable:$true] %s543
          %546 = dma.hbm_to_vmem [thread:$0]  %s541, 128, %s544, %s533
        $region68: #{tpu_custom_call.1} parent=63 // pred_fallthru
          _
      $region64: #{tpu_custom_call.1} parent=5 // pred_fallthru
        _
      %p547 = scmp.le.s32.totalorder 1, %s36
      %p548 = scmp.lt.s32.totalorder %s36, 3
      %p549 = pnand %p547, %p548
      %p550 = pneg %p549
      // Predicated region
      $region69: #{tpu_custom_call.1} parent=5 // pred_check
        _
      $region70: #{tpu_custom_call.1} parent=5 // pred_check_branch
        %552 = sbr.rel (%p549) target = $region72
      $region71: #{tpu_custom_call.1} parent=5 // pred_region
        %s553 = ssub.s32 %s36, 1
        %s554 = sand.u32 %s49, 1
        %s555 = scalar_lea.sflag [#allocation3], %s554
        %s556 = sand.u32 %s49, 1
        %s557 = smul.addr %s556, 8
        %s558 = scalar_lea.vmem [#allocation2], %s557
        // Predicated region
        $region73: #{tpu_custom_call.1} parent=71 // pred_check
          %p559 = pneg %p62
        $region74: #{tpu_custom_call.1} parent=71 // pred_check_branch
          %561 = sbr.rel (%p559) target = $region76
        $region75: #{tpu_custom_call.1} parent=71 // pred_region
          %562 = dma.done %s555, 128
        $region76: #{tpu_custom_call.1} parent=71 // pred_fallthru
          _
        // Predicated region
        $region77: #{tpu_custom_call.1} parent=71 // pred_check
          %p563 = pneg %p83
        $region78: #{tpu_custom_call.1} parent=71 // pred_check_branch
          %565 = sbr.rel (%p563) target = $region80
        $region79: #{tpu_custom_call.1} parent=71 // pred_region
          %566 = dma.done [#allocation6], 256
        $region80: #{tpu_custom_call.1} parent=71 // pred_fallthru
          _
        // Predicated region
        $region81: #{tpu_custom_call.1} parent=71 // pred_check
          %p567 = pneg %p104
        $region82: #{tpu_custom_call.1} parent=71 // pred_check_branch
          %569 = sbr.rel (%p567) target = $region84
        $region83: #{tpu_custom_call.1} parent=71 // pred_region
          %570 = dma.done [#allocation6], 16
        $region84: #{tpu_custom_call.1} parent=71 // pred_fallthru
          _
        // Predicated region
        $region85: #{tpu_custom_call.1} parent=71 // pred_check
          %p571 = pneg %p125
        $region86: #{tpu_custom_call.1} parent=71 // pred_check_branch
          %573 = sbr.rel (%p571) target = $region88
        $region87: #{tpu_custom_call.1} parent=71 // pred_region
          %574 = dma.done [#allocation9], 256
        $region88: #{tpu_custom_call.1} parent=71 // pred_fallthru
          _
        // Predicated region
        $region89: #{tpu_custom_call.1} parent=71 // pred_check
          %p575 = pneg %p146
        $region90: #{tpu_custom_call.1} parent=71 // pred_check_branch
          %577 = sbr.rel (%p575) target = $region92
        $region91: #{tpu_custom_call.1} parent=71 // pred_region
          %578 = dma.done [#allocation9], 16
        $region92: #{tpu_custom_call.1} parent=71 // pred_fallthru
          _
        // Predicated region
        $region93: #{tpu_custom_call.1} parent=71 // pred_check
          %p579 = pneg %p167
        $region94: #{tpu_custom_call.1} parent=71 // pred_check_branch
          %581 = sbr.rel (%p579) target = $region96
        $region95: #{tpu_custom_call.1} parent=71 // pred_region
          %582 = dma.done [#allocation12], 256
        $region96: #{tpu_custom_call.1} parent=71 // pred_fallthru
          _
        // Predicated region
        $region97: #{tpu_custom_call.1} parent=71 // pred_check
          %p583 = pneg %p188
        $region98: #{tpu_custom_call.1} parent=71 // pred_check_branch
          %585 = sbr.rel (%p583) target = $region100
        $region99: #{tpu_custom_call.1} parent=71 // pred_region
          %586 = dma.done [#allocation12], 16
        $region100: #{tpu_custom_call.1} parent=71 // pred_fallthru
          _
        // Predicated region
        $region101: #{tpu_custom_call.1} parent=71 // pred_check
          %p587 = pneg %p209
        $region102: #{tpu_custom_call.1} parent=71 // pred_check_branch
          %589 = sbr.rel (%p587) target = $region104
        $region103: #{tpu_custom_call.1} parent=71 // pred_region
          %590 = dma.done [#allocation15], 256
        $region104: #{tpu_custom_call.1} parent=71 // pred_fallthru
          _
        // Predicated region
        $region105: #{tpu_custom_call.1} parent=71 // pred_check
          %p591 = pneg %p230
        $region106: #{tpu_custom_call.1} parent=71 // pred_check_branch
          %593 = sbr.rel (%p591) target = $region108
        $region107: #{tpu_custom_call.1} parent=71 // pred_region
          %594 = dma.done [#allocation15], 16
        $region108: #{tpu_custom_call.1} parent=71 // pred_fallthru
          _
        // Predicated region
        $region109: #{tpu_custom_call.1} parent=71 // pred_check
          %p595 = pneg %p293
        $region110: #{tpu_custom_call.1} parent=71 // pred_check_branch
          %597 = sbr.rel (%p595) target = $region112
        $region111: #{tpu_custom_call.1} parent=71 // pred_region
          %598 = dma.done [#allocation18], 256
        $region112: #{tpu_custom_call.1} parent=71 // pred_fallthru
          _
        %s599 = sand.u32 %s49, 1
        %s600 = scalar_lea.sflag [#allocation3], %s599
        %s601 = sand.u32 %s49, 1
        %s602 = smul.addr %s601, 8
        %s603 = scalar_lea.vmem [#allocation2], %s602
        %p604 = pneg %p62
        %p605 = pneg %p59
        %p606 = pneg %p83
        %p607 = pneg %p80
        %p608 = pneg %p104
        %p609 = pneg %p101
        %p610 = pneg %p125
        %p611 = pneg %p122
        %p612 = pneg %p146
        %p613 = pneg %p143
        %p614 = pneg %p167
        %p615 = pneg %p164
        %p616 = pneg %p188
        %p617 = pneg %p185
        %p618 = pneg %p209
        %p619 = pneg %p206
        %p620 = pneg %p230
        %p621 = pneg %p227
        %p622 = pneg %p251
        %p623 = pneg %p248
        %p624 = pneg %p272
        %p625 = pneg %p269
        %p626 = pneg %p293
        %p627 = pneg %p290
        %p628 = pneg %p314
        %p629 = pneg %p311
        %p630 = pneg %p340
        %p631 = pneg %p337
        %s632 = sand.u32 %s327, 1
        %s633 = scalar_lea.sflag [#allocation4], %s632
        %s634 = sand.u32 %s327, 1
        %s635 = smul.addr %s634, 8
        %s636 = scalar_lea.vmem [#allocation19], %s635
        %p637 = pneg %p366
        %p638 = pneg %p363
        %s639 = sand.u32 %s41, 1
        %s640 = scalar_lea.sflag [#allocation21], %s639
        %s641 = sand.u32 %s353, 1
        %s642 = smul.addr %s641, 8
        %s643 = scalar_lea.vmem [#allocation20], %s642
        %p644 = pneg %p392
        %p645 = pneg %p389
        %s646 = sand.u32 %s41, 1
        %s647 = scalar_lea.sflag [#allocation21], %s646
        %s648 = sand.u32 %s379, 1
        %s649 = smul.addr %s648, 8
        %s650 = scalar_lea.vmem [#allocation22], %s649
        %v652 = vld [vmem:[%s558] sm:$0xff]
        %v653 = vpack.c.bf16 %v652, %v652
        %v654 = vld [vmem:[#allocation5] sm:$0xf]
        %v655 = vld [vmem:[#allocation5 + $0x4] sm:$0xf]
        %v656 = vld [vmem:[#allocation5 + $0x8] sm:$0xf]
        %v657 = vld [vmem:[#allocation5 + $0xc] sm:$0xf]
        %v658 = vld [vmem:[#allocation7] sm:$0x1]
        %v660 = vlaneseq
        %v661 = vshrl.u32 %v660, 7
        %v662 = vsub.s32 0, %v661
        %v663 = vrot.slane %v658, %v662
        %v669 = vunpack.c.l.b16 %v654
        %v670 = vunpack.c.l.b16 %v655
        %v671 = vunpack.c.l.b16 %v656
        %v672 = vunpack.c.l.b16 %v657
        %v673 = vpack.c.b16 %v670, %v669
        %v674 = vpack.c.b16 %v672, %v671
        %vm677 = vcmask 261120
        %v679 = vsel %vm677, %v653, 0
        %681 = vmatprep.subr.bf16.mxu0 0
        %682 = vmatpush1.bf16.msra.mxu0 0
        %683 = vmatprep.subr.bf16.mxu0 0
        %684 = vmatpush1.bf16.msra.mxu0 0
        %685 = vmatprep.subr.bf16.mxu0 0
        %686 = vmatpush1.bf16.msra.mxu0 0
        %687 = vmatprep.subr.bf16.mxu0 0
        %688 = vmatpush1.bf16.msra.mxu0 0
        %689 = vmatprep.subr.bf16.mxu0 0
        %690 = vmatpush1.bf16.msra.mxu0 0
        %691 = vmatprep.subr.bf16.mxu0 0
        %692 = vmatpush1.bf16.msra.mxu0 0
        %693 = vmatprep.subr.bf16.mxu0 0
        %694 = vmatpush1.bf16.msra.mxu0 %v674
        %695 = vmatprep.subr.bf16.mxu0 0
        %696 = vmatpush1.bf16.msra.mxu0 %v673
        %697 = vmatprep.subr.bf16.mxu0 0
        %698 = vmatpush2.bf16.msra.mxu0 0
        %699 = vmatprep.subr.bf16.mxu0 0
        %700 = vmatpush2.bf16.msra.mxu0 0
        %701 = vmatprep.subr.bf16.mxu0 0
        %702 = vmatpush2.bf16.msra.mxu0 0
        %703 = vmatprep.subr.bf16.mxu0 0
        %704 = vmatpush2.bf16.msra.mxu0 0
        %705 = vmatprep.subr.bf16.mxu0 0
        %706 = vmatpush2.bf16.msra.mxu0 0
        %707 = vmatprep.subr.bf16.mxu0 0
        %708 = vmatpush2.bf16.msra.mxu0 0
        %709 = vmatprep.subr.bf16.mxu0 0
        %710 = vmatpush2.bf16.msra.mxu0 0
        %711 = vmatprep.subr.bf16.mxu0 0
        %712 = vmatpush2.bf16.msra.mxu0 0
        %713 = vmatprep.mubr.bf16.mxu0 0
        %714 = vmatmul.mubr.bf16.gmra.mxu0 %v679
        %v715 = vpop.f32.mrf.mxu0
        %v716 = vadd.f32 %v663, %v715
        %v717 = vpop.f32.mrf.mxu0
        %v718 = vpop.f32.mrf.mxu0
        %v719 = vpop.f32.mrf.mxu0
        %720 = vdwg.mxu0
        %v721 = vpack.c.bf16 %v716, %v716
        %723 = vrot.lane.b32.xlu0 %v721, 96
        %v724 = vpop.permute.xlu0 %723
        %vm725 = vcmask 64512
        %v727 = vsel %vm725, %v721, 0
        %v730 = vsel %vm725, %v724, 0
        %732 = vmatprep.subr.bf16.mxu0 0
        %733 = vmatpush1.bf16.xpose.msra.mxu0 0
        %734 = vmatprep.subr.bf16.mxu0 0
        %735 = vmatpush1.bf16.xpose.msra.mxu0 0
        %736 = vmatprep.subr.bf16.mxu0 0
        %737 = vmatpush1.bf16.xpose.msra.mxu0 0
        %738 = vmatprep.subr.bf16.mxu0 0
        %739 = vmatpush1.bf16.xpose.msra.mxu0 0
        %740 = vmatprep.subr.bf16.mxu0 0
        %741 = vmatpush1.bf16.xpose.msra.mxu0 0
        %742 = vmatprep.subr.bf16.mxu0 0
        %743 = vmatpush1.bf16.xpose.msra.mxu0 0
        %744 = vmatprep.subr.bf16.mxu0 0
        %745 = vmatpush1.bf16.xpose.msra.mxu0 0
        %746 = vmatprep.subr.bf16.mxu0 0
        %747 = vmatpush1.bf16.xpose.msra.mxu0 %v730
        %748 = vmatprep.subr.bf16.mxu0 0
        %749 = vmatpush2.bf16.xpose.msra.mxu0 0
        %750 = vmatprep.subr.bf16.mxu0 0
        %751 = vmatpush2.bf16.xpose.msra.mxu0 0
        %752 = vmatprep.subr.bf16.mxu0 0
        %753 = vmatpush2.bf16.xpose.msra.mxu0 0
        %754 = vmatprep.subr.bf16.mxu0 0
        %755 = vmatpush2.bf16.xpose.msra.mxu0 0
        %756 = vmatprep.subr.bf16.mxu0 0
        %757 = vmatpush2.bf16.xpose.msra.mxu0 0
        %758 = vmatprep.subr.bf16.mxu0 0
        %759 = vmatpush2.bf16.xpose.msra.mxu0 0
        %760 = vmatprep.subr.bf16.mxu0 0
        %761 = vmatpush2.bf16.xpose.msra.mxu0 0
        %762 = vmatprep.subr.bf16.mxu0 0
        %763 = vmatpush2.bf16.xpose.msra.mxu0 0
        %764 = vmatprep.mubr.bf16.mxu0 0
        %765 = vmatmul.mubr.bf16.gmra.mxu0 %v727
        %v766 = vpop.f32.mrf.mxu0
        %v767 = vadd.f32 0.0, %v766
        %v768 = vpop.f32.mrf.mxu0
        %v769 = vpop.f32.mrf.mxu0
        %v770 = vpop.f32.mrf.mxu0
        %771 = vdwg.mxu0
        %v772 = vsel %vm725, %v767, -inf
        %773 = vmax.xlane.f32.xlu0 %v772
        %v774 = vpop.xlane.xlu0 %773
        %v775 = vsub.f32 %v767, %v774
        %v776 = vmul.f32 %v775, 1.442695
        %v777 = vpow.pop %v776
        %v778 = vsel %vm725, %v777, 0.0
        %779 = vadd.xlane.f32.xlu0 %v778
        %v780 = vpop.xlane.xlu0 %779
        %v781 = vpack.c.bf16 %v777, %v777
        %782 = vrot.lane.b32.xlu0 %v721, 64
        %v783 = vpop.permute.xlu0 %782
        %v785 = vsel %vm725, %v781, 0
        %vm787 = vcmask 1043456
        %v789 = vsel %vm787, %v783, 0
        %791 = vmatprep.subr.bf16.mxu0 0
        %792 = vmatpush1.bf16.msra.mxu0 0
        %793 = vmatprep.subr.bf16.mxu0 0
        %794 = vmatpush1.bf16.msra.mxu0 0
        %795 = vmatprep.subr.bf16.mxu0 0
        %796 = vmatpush1.bf16.msra.mxu0 0
        %797 = vmatprep.subr.bf16.mxu0 0
        %798 = vmatpush1.bf16.msra.mxu0 0
        %799 = vmatprep.subr.bf16.mxu0 0
        %800 = vmatpush1.bf16.msra.mxu0 0
        %801 = vmatprep.subr.bf16.mxu0 0
        %802 = vmatpush1.bf16.msra.mxu0 0
        %803 = vmatprep.subr.bf16.mxu0 0
        %804 = vmatpush1.bf16.msra.mxu0 0
        %805 = vmatprep.subr.bf16.mxu0 0
        %806 = vmatpush1.bf16.msra.mxu0 %v789
        %807 = vmatprep.subr.bf16.mxu0 0
        %808 = vmatpush2.bf16.msra.mxu0 0
        %809 = vmatprep.subr.bf16.mxu0 0
        %810 = vmatpush2.bf16.msra.mxu0 0
        %811 = vmatprep.subr.bf16.mxu0 0
        %812 = vmatpush2.bf16.msra.mxu0 0
        %813 = vmatprep.subr.bf16.mxu0 0
        %814 = vmatpush2.bf16.msra.mxu0 0
        %815 = vmatprep.subr.bf16.mxu0 0
        %816 = vmatpush2.bf16.msra.mxu0 0
        %817 = vmatprep.subr.bf16.mxu0 0
        %818 = vmatpush2.bf16.msra.mxu0 0
        %819 = vmatprep.subr.bf16.mxu0 0
        %820 = vmatpush2.bf16.msra.mxu0 0
        %821 = vmatprep.subr.bf16.mxu0 0
        %822 = vmatpush2.bf16.msra.mxu0 0
        %823 = vmatprep.mubr.bf16.mxu0 0
        %824 = vmatmul.mubr.bf16.gmra.mxu0 %v785
        %v825 = vpop.f32.mrf.mxu0
        %v826 = vadd.f32 0.0, %v825
        %v827 = vpop.f32.mrf.mxu0
        %v828 = vpop.f32.mrf.mxu0
        %v829 = vpop.f32.mrf.mxu0
        %830 = vdwg.mxu0
        %v831 = vrcp.pop %v780
        %v832 = vmul.f32 %v826, %v831
        %833 = vrot.lane.b32.xlu0 %v721, 120
        %v834 = vpop.permute.xlu0 %833
        %835 = vrot.lane.b32.xlu0 %v721, 88
        %v836 = vpop.permute.xlu0 %835
        %v838 = vsel %vm725, %v834, 0
        %v841 = vsel %vm725, %v836, 0
        %843 = vmatprep.subr.bf16.mxu0 0
        %844 = vmatpush1.bf16.xpose.msra.mxu0 0
        %845 = vmatprep.subr.bf16.mxu0 0
        %846 = vmatpush1.bf16.xpose.msra.mxu0 0
        %847 = vmatprep.subr.bf16.mxu0 0
        %848 = vmatpush1.bf16.xpose.msra.mxu0 0
        %849 = vmatprep.subr.bf16.mxu0 0
        %850 = vmatpush1.bf16.xpose.msra.mxu0 0
        %851 = vmatprep.subr.bf16.mxu0 0
        %852 = vmatpush1.bf16.xpose.msra.mxu0 0
        %853 = vmatprep.subr.bf16.mxu0 0
        %854 = vmatpush1.bf16.xpose.msra.mxu0 0
        %855 = vmatprep.subr.bf16.mxu0 0
        %856 = vmatpush1.bf16.xpose.msra.mxu0 0
        %857 = vmatprep.subr.bf16.mxu0 0
        %858 = vmatpush1.bf16.xpose.msra.mxu0 %v841
        %859 = vmatprep.subr.bf16.mxu0 0
        %860 = vmatpush2.bf16.xpose.msra.mxu0 0
        %861 = vmatprep.subr.bf16.mxu0 0
        %862 = vmatpush2.bf16.xpose.msra.mxu0 0
        %863 = vmatprep.subr.bf16.mxu0 0
        %864 = vmatpush2.bf16.xpose.msra.mxu0 0
        %865 = vmatprep.subr.bf16.mxu0 0
        %866 = vmatpush2.bf16.xpose.msra.mxu0 0
        %867 = vmatprep.subr.bf16.mxu0 0
        %868 = vmatpush2.bf16.xpose.msra.mxu0 0
        %869 = vmatprep.subr.bf16.mxu0 0
        %870 = vmatpush2.bf16.xpose.msra.mxu0 0
        %871 = vmatprep.subr.bf16.mxu0 0
        %872 = vmatpush2.bf16.xpose.msra.mxu0 0
        %873 = vmatprep.subr.bf16.mxu0 0
        %874 = vmatpush2.bf16.xpose.msra.mxu0 0
        %875 = vmatprep.mubr.bf16.mxu0 0
        %876 = vmatmul.mubr.bf16.gmra.mxu0 %v838
        %v877 = vpop.f32.mrf.mxu0
        %v878 = vadd.f32 0.0, %v877
        %v879 = vpop.f32.mrf.mxu0
        %v880 = vpop.f32.mrf.mxu0
        %v881 = vpop.f32.mrf.mxu0
        %882 = vdwg.mxu0
        %v883 = vsel %vm725, %v878, -inf
        %884 = vmax.xlane.f32.xlu0 %v883
        %v885 = vpop.xlane.xlu0 %884
        %v886 = vsub.f32 %v878, %v885
        %v887 = vmul.f32 %v886, 1.442695
        %v888 = vpow.pop %v887
        %v889 = vsel %vm725, %v888, 0.0
        %890 = vadd.xlane.f32.xlu0 %v889
        %v891 = vpop.xlane.xlu0 %890
        %v892 = vpack.c.bf16 %v888, %v888
        %893 = vrot.lane.b32.xlu0 %v721, 56
        %v894 = vpop.permute.xlu0 %893
        %v896 = vsel %vm725, %v892, 0
        %v899 = vsel %vm787, %v894, 0
        %901 = vmatprep.subr.bf16.mxu0 0
        %902 = vmatpush1.bf16.msra.mxu0 0
        %903 = vmatprep.subr.bf16.mxu0 0
        %904 = vmatpush1.bf16.msra.mxu0 0
        %905 = vmatprep.subr.bf16.mxu0 0
        %906 = vmatpush1.bf16.msra.mxu0 0
        %907 = vmatprep.subr.bf16.mxu0 0
        %908 = vmatpush1.bf16.msra.mxu0 0
        %909 = vmatprep.subr.bf16.mxu0 0
        %910 = vmatpush1.bf16.msra.mxu0 0
        %911 = vmatprep.subr.bf16.mxu0 0
        %912 = vmatpush1.bf16.msra.mxu0 0
        %913 = vmatprep.subr.bf16.mxu0 0
        %914 = vmatpush1.bf16.msra.mxu0 0
        %915 = vmatprep.subr.bf16.mxu0 0
        %916 = vmatpush1.bf16.msra.mxu0 %v899
        %917 = vmatprep.subr.bf16.mxu0 0
        %918 = vmatpush2.bf16.msra.mxu0 0
        %919 = vmatprep.subr.bf16.mxu0 0
        %920 = vmatpush2.bf16.msra.mxu0 0
        %921 = vmatprep.subr.bf16.mxu0 0
        %922 = vmatpush2.bf16.msra.mxu0 0
        %923 = vmatprep.subr.bf16.mxu0 0
        %924 = vmatpush2.bf16.msra.mxu0 0
        %925 = vmatprep.subr.bf16.mxu0 0
        %926 = vmatpush2.bf16.msra.mxu0 0
        %927 = vmatprep.subr.bf16.mxu0 0
        %928 = vmatpush2.bf16.msra.mxu0 0
        %929 = vmatprep.subr.bf16.mxu0 0
        %930 = vmatpush2.bf16.msra.mxu0 0
        %931 = vmatprep.subr.bf16.mxu0 0
        %932 = vmatpush2.bf16.msra.mxu0 0
        %933 = vmatprep.mubr.bf16.mxu0 0
        %934 = vmatmul.mubr.bf16.gmra.mxu0 %v896
        %v935 = vpop.f32.mrf.mxu0
        %v936 = vadd.f32 0.0, %v935
        %v937 = vpop.f32.mrf.mxu0
        %v938 = vpop.f32.mrf.mxu0
        %v939 = vpop.f32.mrf.mxu0
        %940 = vdwg.mxu0
        %v941 = vrcp.pop %v891
        %v942 = vmul.f32 %v936, %v941
        %943 = vrot.lane.b32.xlu0 %v721, 112
        %v944 = vpop.permute.xlu0 %943
        %945 = vrot.lane.b32.xlu0 %v721, 80
        %v946 = vpop.permute.xlu0 %945
        %v948 = vsel %vm725, %v944, 0
        %v951 = vsel %vm725, %v946, 0
        %953 = vmatprep.subr.bf16.mxu0 0
        %954 = vmatpush1.bf16.xpose.msra.mxu0 0
        %955 = vmatprep.subr.bf16.mxu0 0
        %956 = vmatpush1.bf16.xpose.msra.mxu0 0
        %957 = vmatprep.subr.bf16.mxu0 0
        %958 = vmatpush1.bf16.xpose.msra.mxu0 0
        %959 = vmatprep.subr.bf16.mxu0 0
        %960 = vmatpush1.bf16.xpose.msra.mxu0 0
        %961 = vmatprep.subr.bf16.mxu0 0
        %962 = vmatpush1.bf16.xpose.msra.mxu0 0
        %963 = vmatprep.subr.bf16.mxu0 0
        %964 = vmatpush1.bf16.xpose.msra.mxu0 0
        %965 = vmatprep.subr.bf16.mxu0 0
        %966 = vmatpush1.bf16.xpose.msra.mxu0 0
        %967 = vmatprep.subr.bf16.mxu0 0
        %968 = vmatpush1.bf16.xpose.msra.mxu0 %v951
        %969 = vmatprep.subr.bf16.mxu0 0
        %970 = vmatpush2.bf16.xpose.msra.mxu0 0
        %971 = vmatprep.subr.bf16.mxu0 0
        %972 = vmatpush2.bf16.xpose.msra.mxu0 0
        %973 = vmatprep.subr.bf16.mxu0 0
        %974 = vmatpush2.bf16.xpose.msra.mxu0 0
        %975 = vmatprep.subr.bf16.mxu0 0
        %976 = vmatpush2.bf16.xpose.msra.mxu0 0
        %977 = vmatprep.subr.bf16.mxu0 0
        %978 = vmatpush2.bf16.xpose.msra.mxu0 0
        %979 = vmatprep.subr.bf16.mxu0 0
        %980 = vmatpush2.bf16.xpose.msra.mxu0 0
        %981 = vmatprep.subr.bf16.mxu0 0
        %982 = vmatpush2.bf16.xpose.msra.mxu0 0
        %983 = vmatprep.subr.bf16.mxu0 0
        %984 = vmatpush2.bf16.xpose.msra.mxu0 0
        %985 = vmatprep.mubr.bf16.mxu0 0
        %986 = vmatmul.mubr.bf16.gmra.mxu0 %v948
        %v987 = vpop.f32.mrf.mxu0
        %v988 = vadd.f32 0.0, %v987
        %v989 = vpop.f32.mrf.mxu0
        %v990 = vpop.f32.mrf.mxu0
        %v991 = vpop.f32.mrf.mxu0
        %992 = vdwg.mxu0
        %v993 = vsel %vm725, %v988, -inf
        %994 = vmax.xlane.f32.xlu0 %v993
        %v995 = vpop.xlane.xlu0 %994
        %v996 = vsub.f32 %v988, %v995
        %v997 = vmul.f32 %v996, 1.442695
        %v998 = vpow.pop %v997
        %v999 = vsel %vm725, %v998, 0.0
        %1000 = vadd.xlane.f32.xlu0 %v999
        %v1001 = vpop.xlane.xlu0 %1000
        %v1002 = vpack.c.bf16 %v998, %v998
        %1003 = vrot.lane.b32.xlu0 %v721, 48
        %v1004 = vpop.permute.xlu0 %1003
        %v1006 = vsel %vm725, %v1002, 0
        %v1009 = vsel %vm787, %v1004, 0
        %1011 = vmatprep.subr.bf16.mxu0 0
        %1012 = vmatpush1.bf16.msra.mxu0 0
        %1013 = vmatprep.subr.bf16.mxu0 0
        %1014 = vmatpush1.bf16.msra.mxu0 0
        %1015 = vmatprep.subr.bf16.mxu0 0
        %1016 = vmatpush1.bf16.msra.mxu0 0
        %1017 = vmatprep.subr.bf16.mxu0 0
        %1018 = vmatpush1.bf16.msra.mxu0 0
        %1019 = vmatprep.subr.bf16.mxu0 0
        %1020 = vmatpush1.bf16.msra.mxu0 0
        %1021 = vmatprep.subr.bf16.mxu0 0
        %1022 = vmatpush1.bf16.msra.mxu0 0
        %1023 = vmatprep.subr.bf16.mxu0 0
        %1024 = vmatpush1.bf16.msra.mxu0 0
        %1025 = vmatprep.subr.bf16.mxu0 0
        %1026 = vmatpush1.bf16.msra.mxu0 %v1009
        %1027 = vmatprep.subr.bf16.mxu0 0
        %1028 = vmatpush2.bf16.msra.mxu0 0
        %1029 = vmatprep.subr.bf16.mxu0 0
        %1030 = vmatpush2.bf16.msra.mxu0 0
        %1031 = vmatprep.subr.bf16.mxu0 0
        %1032 = vmatpush2.bf16.msra.mxu0 0
        %1033 = vmatprep.subr.bf16.mxu0 0
        %1034 = vmatpush2.bf16.msra.mxu0 0
        %1035 = vmatprep.subr.bf16.mxu0 0
        %1036 = vmatpush2.bf16.msra.mxu0 0
        %1037 = vmatprep.subr.bf16.mxu0 0
        %1038 = vmatpush2.bf16.msra.mxu0 0
        %1039 = vmatprep.subr.bf16.mxu0 0
        %1040 = vmatpush2.bf16.msra.mxu0 0
        %1041 = vmatprep.subr.bf16.mxu0 0
        %1042 = vmatpush2.bf16.msra.mxu0 0
        %1043 = vmatprep.mubr.bf16.mxu0 0
        %1044 = vmatmul.mubr.bf16.gmra.mxu0 %v1006
        %v1045 = vpop.f32.mrf.mxu0
        %v1046 = vadd.f32 0.0, %v1045
        %v1047 = vpop.f32.mrf.mxu0
        %v1048 = vpop.f32.mrf.mxu0
        %v1049 = vpop.f32.mrf.mxu0
        %1050 = vdwg.mxu0
        %v1051 = vrcp.pop %v1001
        %v1052 = vmul.f32 %v1046, %v1051
        %1053 = vrot.lane.b32.xlu0 %v721, 104
        %v1054 = vpop.permute.xlu0 %1053
        %1055 = vrot.lane.b32.xlu0 %v721, 72
        %v1056 = vpop.permute.xlu0 %1055
        %v1058 = vsel %vm725, %v1054, 0
        %v1061 = vsel %vm725, %v1056, 0
        %1063 = vmatprep.subr.bf16.mxu0 0
        %1064 = vmatpush1.bf16.xpose.msra.mxu0 0
        %1065 = vmatprep.subr.bf16.mxu0 0
        %1066 = vmatpush1.bf16.xpose.msra.mxu0 0
        %1067 = vmatprep.subr.bf16.mxu0 0
        %1068 = vmatpush1.bf16.xpose.msra.mxu0 0
        %1069 = vmatprep.subr.bf16.mxu0 0
        %1070 = vmatpush1.bf16.xpose.msra.mxu0 0
        %1071 = vmatprep.subr.bf16.mxu0 0
        %1072 = vmatpush1.bf16.xpose.msra.mxu0 0
        %1073 = vmatprep.subr.bf16.mxu0 0
        %1074 = vmatpush1.bf16.xpose.msra.mxu0 0
        %1075 = vmatprep.subr.bf16.mxu0 0
        %1076 = vmatpush1.bf16.xpose.msra.mxu0 0
        %1077 = vmatprep.subr.bf16.mxu0 0
        %1078 = vmatpush1.bf16.xpose.msra.mxu0 %v1061
        %1079 = vmatprep.subr.bf16.mxu0 0
        %1080 = vmatpush2.bf16.xpose.msra.mxu0 0
        %1081 = vmatprep.subr.bf16.mxu0 0
        %1082 = vmatpush2.bf16.xpose.msra.mxu0 0
        %1083 = vmatprep.subr.bf16.mxu0 0
        %1084 = vmatpush2.bf16.xpose.msra.mxu0 0
        %1085 = vmatprep.subr.bf16.mxu0 0
        %1086 = vmatpush2.bf16.xpose.msra.mxu0 0
        %1087 = vmatprep.subr.bf16.mxu0 0
        %1088 = vmatpush2.bf16.xpose.msra.mxu0 0
        %1089 = vmatprep.subr.bf16.mxu0 0
        %1090 = vmatpush2.bf16.xpose.msra.mxu0 0
        %1091 = vmatprep.subr.bf16.mxu0 0
        %1092 = vmatpush2.bf16.xpose.msra.mxu0 0
        %1093 = vmatprep.subr.bf16.mxu0 0
        %1094 = vmatpush2.bf16.xpose.msra.mxu0 0
        %1095 = vmatprep.mubr.bf16.mxu0 0
        %1096 = vmatmul.mubr.bf16.gmra.mxu0 %v1058
        %v1097 = vpop.f32.mrf.mxu0
        %v1098 = vadd.f32 0.0, %v1097
        %v1099 = vpop.f32.mrf.mxu0
        %v1100 = vpop.f32.mrf.mxu0
        %v1101 = vpop.f32.mrf.mxu0
        %1102 = vdwg.mxu0
        %v1103 = vsel %vm725, %v1098, -inf
        %1104 = vmax.xlane.f32.xlu0 %v1103
        %v1105 = vpop.xlane.xlu0 %1104
        %v1106 = vsub.f32 %v1098, %v1105
        %v1107 = vmul.f32 %v1106, 1.442695
        %v1108 = vpow.pop %v1107
        %v1109 = vsel %vm725, %v1108, 0.0
        %1110 = vadd.xlane.f32.xlu0 %v1109
        %v1111 = vpop.xlane.xlu0 %1110
        %v1112 = vpack.c.bf16 %v1108, %v1108
        %1113 = vrot.lane.b32.xlu0 %v721, 40
        %v1114 = vpop.permute.xlu0 %1113
        %v1116 = vsel %vm725, %v1112, 0
        %v1119 = vsel %vm787, %v1114, 0
        %1121 = vmatprep.subr.bf16.mxu0 0
        %1122 = vmatpush1.bf16.msra.mxu0 0
        %1123 = vmatprep.subr.bf16.mxu0 0
        %1124 = vmatpush1.bf16.msra.mxu0 0
        %1125 = vmatprep.subr.bf16.mxu0 0
        %1126 = vmatpush1.bf16.msra.mxu0 0
        %1127 = vmatprep.subr.bf16.mxu0 0
        %1128 = vmatpush1.bf16.msra.mxu0 0
        %1129 = vmatprep.subr.bf16.mxu0 0
        %1130 = vmatpush1.bf16.msra.mxu0 0
        %1131 = vmatprep.subr.bf16.mxu0 0
        %1132 = vmatpush1.bf16.msra.mxu0 0
        %1133 = vmatprep.subr.bf16.mxu0 0
        %1134 = vmatpush1.bf16.msra.mxu0 0
        %1135 = vmatprep.subr.bf16.mxu0 0
        %1136 = vmatpush1.bf16.msra.mxu0 %v1119
        %1137 = vmatprep.subr.bf16.mxu0 0
        %1138 = vmatpush2.bf16.msra.mxu0 0
        %1139 = vmatprep.subr.bf16.mxu0 0
        %1140 = vmatpush2.bf16.msra.mxu0 0
        %1141 = vmatprep.subr.bf16.mxu0 0
        %1142 = vmatpush2.bf16.msra.mxu0 0
        %1143 = vmatprep.subr.bf16.mxu0 0
        %1144 = vmatpush2.bf16.msra.mxu0 0
        %1145 = vmatprep.subr.bf16.mxu0 0
        %1146 = vmatpush2.bf16.msra.mxu0 0
        %1147 = vmatprep.subr.bf16.mxu0 0
        %1148 = vmatpush2.bf16.msra.mxu0 0
        %1149 = vmatprep.subr.bf16.mxu0 0
        %1150 = vmatpush2.bf16.msra.mxu0 0
        %1151 = vmatprep.subr.bf16.mxu0 0
        %1152 = vmatpush2.bf16.msra.mxu0 0
        %1153 = vmatprep.mubr.bf16.mxu0 0
        %1154 = vmatmul.mubr.bf16.gmra.mxu0 %v1116
        %v1155 = vpop.f32.mrf.mxu0
        %v1156 = vadd.f32 0.0, %v1155
        %v1157 = vpop.f32.mrf.mxu0
        %v1158 = vpop.f32.mrf.mxu0
        %v1159 = vpop.f32.mrf.mxu0
        %1160 = vdwg.mxu0
        %v1161 = vrcp.pop %v1111
        %v1162 = vmul.f32 %v1156, %v1161
        %1164 = vrot.lane.b32.xlu0 %v942, 8
        %v1165 = vpop.permute.xlu0 %1164
        %1168 = vrot.lane.b32.xlu0 %v1052, 16
        %v1169 = vpop.permute.xlu0 %1168
        %1172 = vrot.lane.b32.xlu0 %v1162, 24
        %v1173 = vpop.permute.xlu0 %1172
        %v1175 = vsel %vm725, %v832, %v1165
        %vm1176 = vcmask 130048
        %v1177 = vsel %vm1176, %v1175, %v1169
        %vm1178 = vcmask 195584
        %v1179 = vsel %vm1178, %v1177, %v1173
        %v1180 = vpack.c.bf16 %v1179, %v1179
        %v1181 = vld [vmem:[#allocation8] sm:$0xf]
        %v1182 = vld [vmem:[#allocation8 + $0x4] sm:$0xf]
        %v1183 = vld [vmem:[#allocation8 + $0x8] sm:$0xf]
        %v1184 = vld [vmem:[#allocation8 + $0xc] sm:$0xf]
        %v1185 = vld [vmem:[#allocation10] sm:$0x1]
        %v1187 = vlaneseq
        %v1188 = vshrl.u32 %v1187, 7
        %v1189 = vsub.s32 0, %v1188
        %v1190 = vrot.slane %v1185, %v1189
        %v1196 = vunpack.c.l.b16 %v1181
        %v1197 = vunpack.c.l.b16 %v1182
        %v1198 = vunpack.c.l.b16 %v1183
        %v1199 = vunpack.c.l.b16 %v1184
        %v1200 = vpack.c.b16 %v1197, %v1196
        %v1201 = vpack.c.b16 %v1199, %v1198
        %v1205 = vsel %vm677, %v1180, 0
        %1207 = vmatprep.subr.bf16.mxu0 0
        %1208 = vmatpush1.bf16.msra.mxu0 0
        %1209 = vmatprep.subr.bf16.mxu0 0
        %1210 = vmatpush1.bf16.msra.mxu0 0
        %1211 = vmatprep.subr.bf16.mxu0 0
        %1212 = vmatpush1.bf16.msra.mxu0 0
        %1213 = vmatprep.subr.bf16.mxu0 0
        %1214 = vmatpush1.bf16.msra.mxu0 0
        %1215 = vmatprep.subr.bf16.mxu0 0
        %1216 = vmatpush1.bf16.msra.mxu0 0
        %1217 = vmatprep.subr.bf16.mxu0 0
        %1218 = vmatpush1.bf16.msra.mxu0 0
        %1219 = vmatprep.subr.bf16.mxu0 0
        %1220 = vmatpush1.bf16.msra.mxu0 %v1201
        %1221 = vmatprep.subr.bf16.mxu0 0
        %1222 = vmatpush1.bf16.msra.mxu0 %v1200
        %1223 = vmatprep.subr.bf16.mxu0 0
        %1224 = vmatpush2.bf16.msra.mxu0 0
        %1225 = vmatprep.subr.bf16.mxu0 0
        %1226 = vmatpush2.bf16.msra.mxu0 0
        %1227 = vmatprep.subr.bf16.mxu0 0
        %1228 = vmatpush2.bf16.msra.mxu0 0
        %1229 = vmatprep.subr.bf16.mxu0 0
        %1230 = vmatpush2.bf16.msra.mxu0 0
        %1231 = vmatprep.subr.bf16.mxu0 0
        %1232 = vmatpush2.bf16.msra.mxu0 0
        %1233 = vmatprep.subr.bf16.mxu0 0
        %1234 = vmatpush2.bf16.msra.mxu0 0
        %1235 = vmatprep.subr.bf16.mxu0 0
        %1236 = vmatpush2.bf16.msra.mxu0 0
        %1237 = vmatprep.subr.bf16.mxu0 0
        %1238 = vmatpush2.bf16.msra.mxu0 0
        %1239 = vmatprep.mubr.bf16.mxu0 0
        %1240 = vmatmul.mubr.bf16.gmra.mxu0 %v1205
        %v1241 = vpop.f32.mrf.mxu0
        %v1242 = vadd.f32 %v1190, %v1241
        %v1243 = vpop.f32.mrf.mxu0
        %v1244 = vpop.f32.mrf.mxu0
        %v1245 = vpop.f32.mrf.mxu0
        %1246 = vdwg.mxu0
        %1247 = vst.msk [vmem:[%s636] sm:$0xff] %vm677, %v1242
        %v1248 = vpack.c.bf16 %v1242, %v1242
        %v1249 = vld [vmem:[#allocation11] sm:$0xf]
        %v1250 = vld [vmem:[#allocation11 + $0x4] sm:$0xf]
        %v1251 = vld [vmem:[#allocation11 + $0x8] sm:$0xf]
        %v1252 = vld [vmem:[#allocation11 + $0xc] sm:$0xf]
        %v1253 = vld [vmem:[#allocation13] sm:$0x1]
        %v1255 = vlaneseq
        %v1256 = vshrl.u32 %v1255, 7
        %v1257 = vsub.s32 0, %v1256
        %v1258 = vrot.slane %v1253, %v1257
        %v1264 = vunpack.c.l.b16 %v1249
        %v1265 = vunpack.c.l.b16 %v1250
        %v1266 = vunpack.c.l.b16 %v1251
        %v1267 = vunpack.c.l.b16 %v1252
        %v1268 = vpack.c.b16 %v1265, %v1264
        %v1269 = vpack.c.b16 %v1267, %v1266
        %v1273 = vsel %vm677, %v1248, 0
        %1275 = vmatprep.subr.bf16.mxu0 0
        %1276 = vmatpush1.bf16.msra.mxu0 0
        %1277 = vmatprep.subr.bf16.mxu0 0
        %1278 = vmatpush1.bf16.msra.mxu0 0
        %1279 = vmatprep.subr.bf16.mxu0 0
        %1280 = vmatpush1.bf16.msra.mxu0 0
        %1281 = vmatprep.subr.bf16.mxu0 0
        %1282 = vmatpush1.bf16.msra.mxu0 0
        %1283 = vmatprep.subr.bf16.mxu0 0
        %1284 = vmatpush1.bf16.msra.mxu0 0
        %1285 = vmatprep.subr.bf16.mxu0 0
        %1286 = vmatpush1.bf16.msra.mxu0 0
        %1287 = vmatprep.subr.bf16.mxu0 0
        %1288 = vmatpush1.bf16.msra.mxu0 %v1269
        %1289 = vmatprep.subr.bf16.mxu0 0
        %1290 = vmatpush1.bf16.msra.mxu0 %v1268
        %1291 = vmatprep.subr.bf16.mxu0 0
        %1292 = vmatpush2.bf16.msra.mxu0 0
        %1293 = vmatprep.subr.bf16.mxu0 0
        %1294 = vmatpush2.bf16.msra.mxu0 0
        %1295 = vmatprep.subr.bf16.mxu0 0
        %1296 = vmatpush2.bf16.msra.mxu0 0
        %1297 = vmatprep.subr.bf16.mxu0 0
        %1298 = vmatpush2.bf16.msra.mxu0 0
        %1299 = vmatprep.subr.bf16.mxu0 0
        %1300 = vmatpush2.bf16.msra.mxu0 0
        %1301 = vmatprep.subr.bf16.mxu0 0
        %1302 = vmatpush2.bf16.msra.mxu0 0
        %1303 = vmatprep.subr.bf16.mxu0 0
        %1304 = vmatpush2.bf16.msra.mxu0 0
        %1305 = vmatprep.subr.bf16.mxu0 0
        %1306 = vmatpush2.bf16.msra.mxu0 0
        %1307 = vmatprep.mubr.bf16.mxu0 0
        %1308 = vmatmul.mubr.bf16.gmra.mxu0 %v1273
        %v1309 = vpop.f32.mrf.mxu0
        %v1310 = vadd.f32 %v1258, %v1309
        %v1311 = vpop.f32.mrf.mxu0
        %v1312 = vpop.f32.mrf.mxu0
        %v1313 = vpop.f32.mrf.mxu0
        %1314 = vdwg.mxu0
        %v1315 = vpack.c.bf16 %v1310, %v1310
        %1317 = vrot.lane.b32.xlu0 %v1315, 96
        %v1318 = vpop.permute.xlu0 %1317
        %v1320 = vsel %vm725, %v1315, 0
        %v1323 = vsel %vm725, %v1318, 0
        %1325 = vmatprep.subr.bf16.mxu0 0
        %1326 = vmatpush1.bf16.xpose.msra.mxu0 0
        %1327 = vmatprep.subr.bf16.mxu0 0
        %1328 = vmatpush1.bf16.xpose.msra.mxu0 0
        %1329 = vmatprep.subr.bf16.mxu0 0
        %1330 = vmatpush1.bf16.xpose.msra.mxu0 0
        %1331 = vmatprep.subr.bf16.mxu0 0
        %1332 = vmatpush1.bf16.xpose.msra.mxu0 0
        %1333 = vmatprep.subr.bf16.mxu0 0
        %1334 = vmatpush1.bf16.xpose.msra.mxu0 0
        %1335 = vmatprep.subr.bf16.mxu0 0
        %1336 = vmatpush1.bf16.xpose.msra.mxu0 0
        %1337 = vmatprep.subr.bf16.mxu0 0
        %1338 = vmatpush1.bf16.xpose.msra.mxu0 0
        %1339 = vmatprep.subr.bf16.mxu0 0
        %1340 = vmatpush1.bf16.xpose.msra.mxu0 %v1323
        %1341 = vmatprep.subr.bf16.mxu0 0
        %1342 = vmatpush2.bf16.xpose.msra.mxu0 0
        %1343 = vmatprep.subr.bf16.mxu0 0
        %1344 = vmatpush2.bf16.xpose.msra.mxu0 0
        %1345 = vmatprep.subr.bf16.mxu0 0
        %1346 = vmatpush2.bf16.xpose.msra.mxu0 0
        %1347 = vmatprep.subr.bf16.mxu0 0
        %1348 = vmatpush2.bf16.xpose.msra.mxu0 0
        %1349 = vmatprep.subr.bf16.mxu0 0
        %1350 = vmatpush2.bf16.xpose.msra.mxu0 0
        %1351 = vmatprep.subr.bf16.mxu0 0
        %1352 = vmatpush2.bf16.xpose.msra.mxu0 0
        %1353 = vmatprep.subr.bf16.mxu0 0
        %1354 = vmatpush2.bf16.xpose.msra.mxu0 0
        %1355 = vmatprep.subr.bf16.mxu0 0
        %1356 = vmatpush2.bf16.xpose.msra.mxu0 0
        %1357 = vmatprep.mubr.bf16.mxu0 0
        %1358 = vmatmul.mubr.bf16.gmra.mxu0 %v1320
        %v1359 = vpop.f32.mrf.mxu0
        %v1360 = vadd.f32 0.0, %v1359
        %v1361 = vpop.f32.mrf.mxu0
        %v1362 = vpop.f32.mrf.mxu0
        %v1363 = vpop.f32.mrf.mxu0
        %1364 = vdwg.mxu0
        %v1365 = vsel %vm725, %v1360, -inf
        %1366 = vmax.xlane.f32.xlu0 %v1365
        %v1367 = vpop.xlane.xlu0 %1366
        %v1368 = vsub.f32 %v1360, %v1367
        %v1369 = vmul.f32 %v1368, 1.442695
        %v1370 = vpow.pop %v1369
        %v1371 = vsel %vm725, %v1370, 0.0
        %1372 = vadd.xlane.f32.xlu0 %v1371
        %v1373 = vpop.xlane.xlu0 %1372
        %v1374 = vpack.c.bf16 %v1370, %v1370
        %1375 = vrot.lane.b32.xlu0 %v1315, 64
        %v1376 = vpop.permute.xlu0 %1375
        %v1378 = vsel %vm725, %v1374, 0
        %v1381 = vsel %vm787, %v1376, 0
        %1383 = vmatprep.subr.bf16.mxu0 0
        %1384 = vmatpush1.bf16.msra.mxu0 0
        %1385 = vmatprep.subr.bf16.mxu0 0
        %1386 = vmatpush1.bf16.msra.mxu0 0
        %1387 = vmatprep.subr.bf16.mxu0 0
        %1388 = vmatpush1.bf16.msra.mxu0 0
        %1389 = vmatprep.subr.bf16.mxu0 0
        %1390 = vmatpush1.bf16.msra.mxu0 0
        %1391 = vmatprep.subr.bf16.mxu0 0
        %1392 = vmatpush1.bf16.msra.mxu0 0
        %1393 = vmatprep.subr.bf16.mxu0 0
        %1394 = vmatpush1.bf16.msra.mxu0 0
        %1395 = vmatprep.subr.bf16.mxu0 0
        %1396 = vmatpush1.bf16.msra.mxu0 0
        %1397 = vmatprep.subr.bf16.mxu0 0
        %1398 = vmatpush1.bf16.msra.mxu0 %v1381
        %1399 = vmatprep.subr.bf16.mxu0 0
        %1400 = vmatpush2.bf16.msra.mxu0 0
        %1401 = vmatprep.subr.bf16.mxu0 0
        %1402 = vmatpush2.bf16.msra.mxu0 0
        %1403 = vmatprep.subr.bf16.mxu0 0
        %1404 = vmatpush2.bf16.msra.mxu0 0
        %1405 = vmatprep.subr.bf16.mxu0 0
        %1406 = vmatpush2.bf16.msra.mxu0 0
        %1407 = vmatprep.subr.bf16.mxu0 0
        %1408 = vmatpush2.bf16.msra.mxu0 0
        %1409 = vmatprep.subr.bf16.mxu0 0
        %1410 = vmatpush2.bf16.msra.mxu0 0
        %1411 = vmatprep.subr.bf16.mxu0 0
        %1412 = vmatpush2.bf16.msra.mxu0 0
        %1413 = vmatprep.subr.bf16.mxu0 0
        %1414 = vmatpush2.bf16.msra.mxu0 0
        %1415 = vmatprep.mubr.bf16.mxu0 0
        %1416 = vmatmul.mubr.bf16.gmra.mxu0 %v1378
        %v1417 = vpop.f32.mrf.mxu0
        %v1418 = vadd.f32 0.0, %v1417
        %v1419 = vpop.f32.mrf.mxu0
        %v1420 = vpop.f32.mrf.mxu0
        %v1421 = vpop.f32.mrf.mxu0
        %1422 = vdwg.mxu0
        %v1423 = vrcp.pop %v1373
        %v1424 = vmul.f32 %v1418, %v1423
        %1425 = vrot.lane.b32.xlu0 %v1315, 120
        %v1426 = vpop.permute.xlu0 %1425
        %1427 = vrot.lane.b32.xlu0 %v1315, 88
        %v1428 = vpop.permute.xlu0 %1427
        %v1430 = vsel %vm725, %v1426, 0
        %v1433 = vsel %vm725, %v1428, 0
        %1435 = vmatprep.subr.bf16.mxu0 0
        %1436 = vmatpush1.bf16.xpose.msra.mxu0 0
        %1437 = vmatprep.subr.bf16.mxu0 0
        %1438 = vmatpush1.bf16.xpose.msra.mxu0 0
        %1439 = vmatprep.subr.bf16.mxu0 0
        %1440 = vmatpush1.bf16.xpose.msra.mxu0 0
        %1441 = vmatprep.subr.bf16.mxu0 0
        %1442 = vmatpush1.bf16.xpose.msra.mxu0 0
        %1443 = vmatprep.subr.bf16.mxu0 0
        %1444 = vmatpush1.bf16.xpose.msra.mxu0 0
        %1445 = vmatprep.subr.bf16.mxu0 0
        %1446 = vmatpush1.bf16.xpose.msra.mxu0 0
        %1447 = vmatprep.subr.bf16.mxu0 0
        %1448 = vmatpush1.bf16.xpose.msra.mxu0 0
        %1449 = vmatprep.subr.bf16.mxu0 0
        %1450 = vmatpush1.bf16.xpose.msra.mxu0 %v1433
        %1451 = vmatprep.subr.bf16.mxu0 0
        %1452 = vmatpush2.bf16.xpose.msra.mxu0 0
        %1453 = vmatprep.subr.bf16.mxu0 0
        %1454 = vmatpush2.bf16.xpose.msra.mxu0 0
        %1455 = vmatprep.subr.bf16.mxu0 0
        %1456 = vmatpush2.bf16.xpose.msra.mxu0 0
        %1457 = vmatprep.subr.bf16.mxu0 0
        %1458 = vmatpush2.bf16.xpose.msra.mxu0 0
        %1459 = vmatprep.subr.bf16.mxu0 0
        %1460 = vmatpush2.bf16.xpose.msra.mxu0 0
        %1461 = vmatprep.subr.bf16.mxu0 0
        %1462 = vmatpush2.bf16.xpose.msra.mxu0 0
        %1463 = vmatprep.subr.bf16.mxu0 0
        %1464 = vmatpush2.bf16.xpose.msra.mxu0 0
        %1465 = vmatprep.subr.bf16.mxu0 0
        %1466 = vmatpush2.bf16.xpose.msra.mxu0 0
        %1467 = vmatprep.mubr.bf16.mxu0 0
        %1468 = vmatmul.mubr.bf16.gmra.mxu0 %v1430
        %v1469 = vpop.f32.mrf.mxu0
        %v1470 = vadd.f32 0.0, %v1469
        %v1471 = vpop.f32.mrf.mxu0
        %v1472 = vpop.f32.mrf.mxu0
        %v1473 = vpop.f32.mrf.mxu0
        %1474 = vdwg.mxu0
        %v1475 = vsel %vm725, %v1470, -inf
        %1476 = vmax.xlane.f32.xlu0 %v1475
        %v1477 = vpop.xlane.xlu0 %1476
        %v1478 = vsub.f32 %v1470, %v1477
        %v1479 = vmul.f32 %v1478, 1.442695
        %v1480 = vpow.pop %v1479
        %v1481 = vsel %vm725, %v1480, 0.0
        %1482 = vadd.xlane.f32.xlu0 %v1481
        %v1483 = vpop.xlane.xlu0 %1482
        %v1484 = vpack.c.bf16 %v1480, %v1480
        %1485 = vrot.lane.b32.xlu0 %v1315, 56
        %v1486 = vpop.permute.xlu0 %1485
        %v1488 = vsel %vm725, %v1484, 0
        %v1491 = vsel %vm787, %v1486, 0
        %1493 = vmatprep.subr.bf16.mxu0 0
        %1494 = vmatpush1.bf16.msra.mxu0 0
        %1495 = vmatprep.subr.bf16.mxu0 0
        %1496 = vmatpush1.bf16.msra.mxu0 0
        %1497 = vmatprep.subr.bf16.mxu0 0
        %1498 = vmatpush1.bf16.msra.mxu0 0
        %1499 = vmatprep.subr.bf16.mxu0 0
        %1500 = vmatpush1.bf16.msra.mxu0 0
        %1501 = vmatprep.subr.bf16.mxu0 0
        %1502 = vmatpush1.bf16.msra.mxu0 0
        %1503 = vmatprep.subr.bf16.mxu0 0
        %1504 = vmatpush1.bf16.msra.mxu0 0
        %1505 = vmatprep.subr.bf16.mxu0 0
        %1506 = vmatpush1.bf16.msra.mxu0 0
        %1507 = vmatprep.subr.bf16.mxu0 0
        %1508 = vmatpush1.bf16.msra.mxu0 %v1491
        %1509 = vmatprep.subr.bf16.mxu0 0
        %1510 = vmatpush2.bf16.msra.mxu0 0
        %1511 = vmatprep.subr.bf16.mxu0 0
        %1512 = vmatpush2.bf16.msra.mxu0 0
        %1513 = vmatprep.subr.bf16.mxu0 0
        %1514 = vmatpush2.bf16.msra.mxu0 0
        %1515 = vmatprep.subr.bf16.mxu0 0
        %1516 = vmatpush2.bf16.msra.mxu0 0
        %1517 = vmatprep.subr.bf16.mxu0 0
        %1518 = vmatpush2.bf16.msra.mxu0 0
        %1519 = vmatprep.subr.bf16.mxu0 0
        %1520 = vmatpush2.bf16.msra.mxu0 0
        %1521 = vmatprep.subr.bf16.mxu0 0
        %1522 = vmatpush2.bf16.msra.mxu0 0
        %1523 = vmatprep.subr.bf16.mxu0 0
        %1524 = vmatpush2.bf16.msra.mxu0 0
        %1525 = vmatprep.mubr.bf16.mxu0 0
        %1526 = vmatmul.mubr.bf16.gmra.mxu0 %v1488
        %v1527 = vpop.f32.mrf.mxu0
        %v1528 = vadd.f32 0.0, %v1527
        %v1529 = vpop.f32.mrf.mxu0
        %v1530 = vpop.f32.mrf.mxu0
        %v1531 = vpop.f32.mrf.mxu0
        %1532 = vdwg.mxu0
        %v1533 = vrcp.pop %v1483
        %v1534 = vmul.f32 %v1528, %v1533
        %1535 = vrot.lane.b32.xlu0 %v1315, 112
        %v1536 = vpop.permute.xlu0 %1535
        %1537 = vrot.lane.b32.xlu0 %v1315, 80
        %v1538 = vpop.permute.xlu0 %1537
        %v1540 = vsel %vm725, %v1536, 0
        %v1543 = vsel %vm725, %v1538, 0
        %1545 = vmatprep.subr.bf16.mxu0 0
        %1546 = vmatpush1.bf16.xpose.msra.mxu0 0
        %1547 = vmatprep.subr.bf16.mxu0 0
        %1548 = vmatpush1.bf16.xpose.msra.mxu0 0
        %1549 = vmatprep.subr.bf16.mxu0 0
        %1550 = vmatpush1.bf16.xpose.msra.mxu0 0
        %1551 = vmatprep.subr.bf16.mxu0 0
        %1552 = vmatpush1.bf16.xpose.msra.mxu0 0
        %1553 = vmatprep.subr.bf16.mxu0 0
        %1554 = vmatpush1.bf16.xpose.msra.mxu0 0
        %1555 = vmatprep.subr.bf16.mxu0 0
        %1556 = vmatpush1.bf16.xpose.msra.mxu0 0
        %1557 = vmatprep.subr.bf16.mxu0 0
        %1558 = vmatpush1.bf16.xpose.msra.mxu0 0
        %1559 = vmatprep.subr.bf16.mxu0 0
        %1560 = vmatpush1.bf16.xpose.msra.mxu0 %v1543
        %1561 = vmatprep.subr.bf16.mxu0 0
        %1562 = vmatpush2.bf16.xpose.msra.mxu0 0
        %1563 = vmatprep.subr.bf16.mxu0 0
        %1564 = vmatpush2.bf16.xpose.msra.mxu0 0
        %1565 = vmatprep.subr.bf16.mxu0 0
        %1566 = vmatpush2.bf16.xpose.msra.mxu0 0
        %1567 = vmatprep.subr.bf16.mxu0 0
        %1568 = vmatpush2.bf16.xpose.msra.mxu0 0
        %1569 = vmatprep.subr.bf16.mxu0 0
        %1570 = vmatpush2.bf16.xpose.msra.mxu0 0
        %1571 = vmatprep.subr.bf16.mxu0 0
        %1572 = vmatpush2.bf16.xpose.msra.mxu0 0
        %1573 = vmatprep.subr.bf16.mxu0 0
        %1574 = vmatpush2.bf16.xpose.msra.mxu0 0
        %1575 = vmatprep.subr.bf16.mxu0 0
        %1576 = vmatpush2.bf16.xpose.msra.mxu0 0
        %1577 = vmatprep.mubr.bf16.mxu0 0
        %1578 = vmatmul.mubr.bf16.gmra.mxu0 %v1540
        %v1579 = vpop.f32.mrf.mxu0
        %v1580 = vadd.f32 0.0, %v1579
        %v1581 = vpop.f32.mrf.mxu0
        %v1582 = vpop.f32.mrf.mxu0
        %v1583 = vpop.f32.mrf.mxu0
        %1584 = vdwg.mxu0
        %v1585 = vsel %vm725, %v1580, -inf
        %1586 = vmax.xlane.f32.xlu0 %v1585
        %v1587 = vpop.xlane.xlu0 %1586
        %v1588 = vsub.f32 %v1580, %v1587
        %v1589 = vmul.f32 %v1588, 1.442695
        %v1590 = vpow.pop %v1589
        %v1591 = vsel %vm725, %v1590, 0.0
        %1592 = vadd.xlane.f32.xlu0 %v1591
        %v1593 = vpop.xlane.xlu0 %1592
        %v1594 = vpack.c.bf16 %v1590, %v1590
        %1595 = vrot.lane.b32.xlu0 %v1315, 48
        %v1596 = vpop.permute.xlu0 %1595
        %v1598 = vsel %vm725, %v1594, 0
        %v1601 = vsel %vm787, %v1596, 0
        %1603 = vmatprep.subr.bf16.mxu0 0
        %1604 = vmatpush1.bf16.msra.mxu0 0
        %1605 = vmatprep.subr.bf16.mxu0 0
        %1606 = vmatpush1.bf16.msra.mxu0 0
        %1607 = vmatprep.subr.bf16.mxu0 0
        %1608 = vmatpush1.bf16.msra.mxu0 0
        %1609 = vmatprep.subr.bf16.mxu0 0
        %1610 = vmatpush1.bf16.msra.mxu0 0
        %1611 = vmatprep.subr.bf16.mxu0 0
        %1612 = vmatpush1.bf16.msra.mxu0 0
        %1613 = vmatprep.subr.bf16.mxu0 0
        %1614 = vmatpush1.bf16.msra.mxu0 0
        %1615 = vmatprep.subr.bf16.mxu0 0
        %1616 = vmatpush1.bf16.msra.mxu0 0
        %1617 = vmatprep.subr.bf16.mxu0 0
        %1618 = vmatpush1.bf16.msra.mxu0 %v1601
        %1619 = vmatprep.subr.bf16.mxu0 0
        %1620 = vmatpush2.bf16.msra.mxu0 0
        %1621 = vmatprep.subr.bf16.mxu0 0
        %1622 = vmatpush2.bf16.msra.mxu0 0
        %1623 = vmatprep.subr.bf16.mxu0 0
        %1624 = vmatpush2.bf16.msra.mxu0 0
        %1625 = vmatprep.subr.bf16.mxu0 0
        %1626 = vmatpush2.bf16.msra.mxu0 0
        %1627 = vmatprep.subr.bf16.mxu0 0
        %1628 = vmatpush2.bf16.msra.mxu0 0
        %1629 = vmatprep.subr.bf16.mxu0 0
        %1630 = vmatpush2.bf16.msra.mxu0 0
        %1631 = vmatprep.subr.bf16.mxu0 0
        %1632 = vmatpush2.bf16.msra.mxu0 0
        %1633 = vmatprep.subr.bf16.mxu0 0
        %1634 = vmatpush2.bf16.msra.mxu0 0
        %1635 = vmatprep.mubr.bf16.mxu0 0
        %1636 = vmatmul.mubr.bf16.gmra.mxu0 %v1598
        %v1637 = vpop.f32.mrf.mxu0
        %v1638 = vadd.f32 0.0, %v1637
        %v1639 = vpop.f32.mrf.mxu0
        %v1640 = vpop.f32.mrf.mxu0
        %v1641 = vpop.f32.mrf.mxu0
        %1642 = vdwg.mxu0
        %v1643 = vrcp.pop %v1593
        %v1644 = vmul.f32 %v1638, %v1643
        %1645 = vrot.lane.b32.xlu0 %v1315, 104
        %v1646 = vpop.permute.xlu0 %1645
        %1647 = vrot.lane.b32.xlu0 %v1315, 72
        %v1648 = vpop.permute.xlu0 %1647
        %v1650 = vsel %vm725, %v1646, 0
        %v1653 = vsel %vm725, %v1648, 0
        %1655 = vmatprep.subr.bf16.mxu0 0
        %1656 = vmatpush1.bf16.xpose.msra.mxu0 0
        %1657 = vmatprep.subr.bf16.mxu0 0
        %1658 = vmatpush1.bf16.xpose.msra.mxu0 0
        %1659 = vmatprep.subr.bf16.mxu0 0
        %1660 = vmatpush1.bf16.xpose.msra.mxu0 0
        %1661 = vmatprep.subr.bf16.mxu0 0
        %1662 = vmatpush1.bf16.xpose.msra.mxu0 0
        %1663 = vmatprep.subr.bf16.mxu0 0
        %1664 = vmatpush1.bf16.xpose.msra.mxu0 0
        %1665 = vmatprep.subr.bf16.mxu0 0
        %1666 = vmatpush1.bf16.xpose.msra.mxu0 0
        %1667 = vmatprep.subr.bf16.mxu0 0
        %1668 = vmatpush1.bf16.xpose.msra.mxu0 0
        %1669 = vmatprep.subr.bf16.mxu0 0
        %1670 = vmatpush1.bf16.xpose.msra.mxu0 %v1653
        %1671 = vmatprep.subr.bf16.mxu0 0
        %1672 = vmatpush2.bf16.xpose.msra.mxu0 0
        %1673 = vmatprep.subr.bf16.mxu0 0
        %1674 = vmatpush2.bf16.xpose.msra.mxu0 0
        %1675 = vmatprep.subr.bf16.mxu0 0
        %1676 = vmatpush2.bf16.xpose.msra.mxu0 0
        %1677 = vmatprep.subr.bf16.mxu0 0
        %1678 = vmatpush2.bf16.xpose.msra.mxu0 0
        %1679 = vmatprep.subr.bf16.mxu0 0
        %1680 = vmatpush2.bf16.xpose.msra.mxu0 0
        %1681 = vmatprep.subr.bf16.mxu0 0
        %1682 = vmatpush2.bf16.xpose.msra.mxu0 0
        %1683 = vmatprep.subr.bf16.mxu0 0
        %1684 = vmatpush2.bf16.xpose.msra.mxu0 0
        %1685 = vmatprep.subr.bf16.mxu0 0
        %1686 = vmatpush2.bf16.xpose.msra.mxu0 0
        %1687 = vmatprep.mubr.bf16.mxu0 0
        %1688 = vmatmul.mubr.bf16.gmra.mxu0 %v1650
        %v1689 = vpop.f32.mrf.mxu0
        %v1690 = vadd.f32 0.0, %v1689
        %v1691 = vpop.f32.mrf.mxu0
        %v1692 = vpop.f32.mrf.mxu0
        %v1693 = vpop.f32.mrf.mxu0
        %1694 = vdwg.mxu0
        %v1695 = vsel %vm725, %v1690, -inf
        %1696 = vmax.xlane.f32.xlu0 %v1695
        %v1697 = vpop.xlane.xlu0 %1696
        %v1698 = vsub.f32 %v1690, %v1697
        %v1699 = vmul.f32 %v1698, 1.442695
        %v1700 = vpow.pop %v1699
        %v1701 = vsel %vm725, %v1700, 0.0
        %1702 = vadd.xlane.f32.xlu0 %v1701
        %v1703 = vpop.xlane.xlu0 %1702
        %v1704 = vpack.c.bf16 %v1700, %v1700
        %1705 = vrot.lane.b32.xlu0 %v1315, 40
        %v1706 = vpop.permute.xlu0 %1705
        %v1708 = vsel %vm725, %v1704, 0
        %v1711 = vsel %vm787, %v1706, 0
        %1713 = vmatprep.subr.bf16.mxu0 0
        %1714 = vmatpush1.bf16.msra.mxu0 0
        %1715 = vmatprep.subr.bf16.mxu0 0
        %1716 = vmatpush1.bf16.msra.mxu0 0
        %1717 = vmatprep.subr.bf16.mxu0 0
        %1718 = vmatpush1.bf16.msra.mxu0 0
        %1719 = vmatprep.subr.bf16.mxu0 0
        %1720 = vmatpush1.bf16.msra.mxu0 0
        %1721 = vmatprep.subr.bf16.mxu0 0
        %1722 = vmatpush1.bf16.msra.mxu0 0
        %1723 = vmatprep.subr.bf16.mxu0 0
        %1724 = vmatpush1.bf16.msra.mxu0 0
        %1725 = vmatprep.subr.bf16.mxu0 0
        %1726 = vmatpush1.bf16.msra.mxu0 0
        %1727 = vmatprep.subr.bf16.mxu0 0
        %1728 = vmatpush1.bf16.msra.mxu0 %v1711
        %1729 = vmatprep.subr.bf16.mxu0 0
        %1730 = vmatpush2.bf16.msra.mxu0 0
        %1731 = vmatprep.subr.bf16.mxu0 0
        %1732 = vmatpush2.bf16.msra.mxu0 0
        %1733 = vmatprep.subr.bf16.mxu0 0
        %1734 = vmatpush2.bf16.msra.mxu0 0
        %1735 = vmatprep.subr.bf16.mxu0 0
        %1736 = vmatpush2.bf16.msra.mxu0 0
        %1737 = vmatprep.subr.bf16.mxu0 0
        %1738 = vmatpush2.bf16.msra.mxu0 0
        %1739 = vmatprep.subr.bf16.mxu0 0
        %1740 = vmatpush2.bf16.msra.mxu0 0
        %1741 = vmatprep.subr.bf16.mxu0 0
        %1742 = vmatpush2.bf16.msra.mxu0 0
        %1743 = vmatprep.subr.bf16.mxu0 0
        %1744 = vmatpush2.bf16.msra.mxu0 0
        %1745 = vmatprep.mubr.bf16.mxu0 0
        %1746 = vmatmul.mubr.bf16.gmra.mxu0 %v1708
        %v1747 = vpop.f32.mrf.mxu0
        %v1748 = vadd.f32 0.0, %v1747
        %v1749 = vpop.f32.mrf.mxu0
        %v1750 = vpop.f32.mrf.mxu0
        %v1751 = vpop.f32.mrf.mxu0
        %1752 = vdwg.mxu0
        %v1753 = vrcp.pop %v1703
        %v1754 = vmul.f32 %v1748, %v1753
        %1756 = vrot.lane.b32.xlu0 %v1534, 8
        %v1757 = vpop.permute.xlu0 %1756
        %1760 = vrot.lane.b32.xlu0 %v1644, 16
        %v1761 = vpop.permute.xlu0 %1760
        %1764 = vrot.lane.b32.xlu0 %v1754, 24
        %v1765 = vpop.permute.xlu0 %1764
        %v1767 = vsel %vm725, %v1424, %v1757
        %v1768 = vsel %vm1176, %v1767, %v1761
        %v1769 = vsel %vm1178, %v1768, %v1765
        %v1770 = vpack.c.bf16 %v1769, %v1769
        %v1771 = vld [vmem:[#allocation14] sm:$0xf]
        %v1772 = vld [vmem:[#allocation14 + $0x4] sm:$0xf]
        %v1773 = vld [vmem:[#allocation14 + $0x8] sm:$0xf]
        %v1774 = vld [vmem:[#allocation14 + $0xc] sm:$0xf]
        %v1775 = vld [vmem:[#allocation16] sm:$0x1]
        %v1777 = vlaneseq
        %v1778 = vshrl.u32 %v1777, 7
        %v1779 = vsub.s32 0, %v1778
        %v1780 = vrot.slane %v1775, %v1779
        %v1786 = vunpack.c.l.b16 %v1771
        %v1787 = vunpack.c.l.b16 %v1772
        %v1788 = vunpack.c.l.b16 %v1773
        %v1789 = vunpack.c.l.b16 %v1774
        %v1790 = vpack.c.b16 %v1787, %v1786
        %v1791 = vpack.c.b16 %v1789, %v1788
        %v1795 = vsel %vm677, %v1770, 0
        %1797 = vmatprep.subr.bf16.mxu0 0
        %1798 = vmatpush1.bf16.msra.mxu0 0
        %1799 = vmatprep.subr.bf16.mxu0 0
        %1800 = vmatpush1.bf16.msra.mxu0 0
        %1801 = vmatprep.subr.bf16.mxu0 0
        %1802 = vmatpush1.bf16.msra.mxu0 0
        %1803 = vmatprep.subr.bf16.mxu0 0
        %1804 = vmatpush1.bf16.msra.mxu0 0
        %1805 = vmatprep.subr.bf16.mxu0 0
        %1806 = vmatpush1.bf16.msra.mxu0 0
        %1807 = vmatprep.subr.bf16.mxu0 0
        %1808 = vmatpush1.bf16.msra.mxu0 0
        %1809 = vmatprep.subr.bf16.mxu0 0
        %1810 = vmatpush1.bf16.msra.mxu0 %v1791
        %1811 = vmatprep.subr.bf16.mxu0 0
        %1812 = vmatpush1.bf16.msra.mxu0 %v1790
        %1813 = vmatprep.subr.bf16.mxu0 0
        %1814 = vmatpush2.bf16.msra.mxu0 0
        %1815 = vmatprep.subr.bf16.mxu0 0
        %1816 = vmatpush2.bf16.msra.mxu0 0
        %1817 = vmatprep.subr.bf16.mxu0 0
        %1818 = vmatpush2.bf16.msra.mxu0 0
        %1819 = vmatprep.subr.bf16.mxu0 0
        %1820 = vmatpush2.bf16.msra.mxu0 0
        %1821 = vmatprep.subr.bf16.mxu0 0
        %1822 = vmatpush2.bf16.msra.mxu0 0
        %1823 = vmatprep.subr.bf16.mxu0 0
        %1824 = vmatpush2.bf16.msra.mxu0 0
        %1825 = vmatprep.subr.bf16.mxu0 0
        %1826 = vmatpush2.bf16.msra.mxu0 0
        %1827 = vmatprep.subr.bf16.mxu0 0
        %1828 = vmatpush2.bf16.msra.mxu0 0
        %1829 = vmatprep.mubr.bf16.mxu0 0
        %1830 = vmatmul.mubr.bf16.gmra.mxu0 %v1795
        %v1831 = vpop.f32.mrf.mxu0
        %v1832 = vadd.f32 %v1780, %v1831
        %v1833 = vpop.f32.mrf.mxu0
        %v1834 = vpop.f32.mrf.mxu0
        %v1835 = vpop.f32.mrf.mxu0
        %1836 = vdwg.mxu0
        %1837 = vst.msk [vmem:[%s643] sm:$0xff] %vm677, %v1832
        %v1838 = vpack.c.bf16 %v1832, %v1832
        %v1839 = vld [vmem:[%s9] sm:$0xf]
        %v1840 = vld [vmem:[%s9 + $0x4] sm:$0xf]
        %v1841 = vld [vmem:[%s9 + $0x8] sm:$0xf]
        %v1842 = vld [vmem:[%s9 + $0xc] sm:$0xf]
        %v1843 = vld [vmem:[%s10] sm:$0x1]
        %v1845 = vlaneseq
        %v1846 = vshrl.u32 %v1845, 7
        %v1847 = vsub.s32 0, %v1846
        %v1848 = vrot.slane %v1843, %v1847
        %v1854 = vunpack.c.l.b16 %v1839
        %v1855 = vunpack.c.l.b16 %v1840
        %v1856 = vunpack.c.l.b16 %v1841
        %v1857 = vunpack.c.l.b16 %v1842
        %v1858 = vpack.c.b16 %v1855, %v1854
        %v1859 = vpack.c.b16 %v1857, %v1856
        %v1863 = vsel %vm677, %v1838, 0
        %1865 = vmatprep.subr.bf16.mxu0 0
        %1866 = vmatpush1.bf16.msra.mxu0 0
        %1867 = vmatprep.subr.bf16.mxu0 0
        %1868 = vmatpush1.bf16.msra.mxu0 0
        %1869 = vmatprep.subr.bf16.mxu0 0
        %1870 = vmatpush1.bf16.msra.mxu0 0
        %1871 = vmatprep.subr.bf16.mxu0 0
        %1872 = vmatpush1.bf16.msra.mxu0 0
        %1873 = vmatprep.subr.bf16.mxu0 0
        %1874 = vmatpush1.bf16.msra.mxu0 0
        %1875 = vmatprep.subr.bf16.mxu0 0
        %1876 = vmatpush1.bf16.msra.mxu0 0
        %1877 = vmatprep.subr.bf16.mxu0 0
        %1878 = vmatpush1.bf16.msra.mxu0 %v1859
        %1879 = vmatprep.subr.bf16.mxu0 0
        %1880 = vmatpush1.bf16.msra.mxu0 %v1858
        %1881 = vmatprep.subr.bf16.mxu0 0
        %1882 = vmatpush2.bf16.msra.mxu0 0
        %1883 = vmatprep.subr.bf16.mxu0 0
        %1884 = vmatpush2.bf16.msra.mxu0 0
        %1885 = vmatprep.subr.bf16.mxu0 0
        %1886 = vmatpush2.bf16.msra.mxu0 0
        %1887 = vmatprep.subr.bf16.mxu0 0
        %1888 = vmatpush2.bf16.msra.mxu0 0
        %1889 = vmatprep.subr.bf16.mxu0 0
        %1890 = vmatpush2.bf16.msra.mxu0 0
        %1891 = vmatprep.subr.bf16.mxu0 0
        %1892 = vmatpush2.bf16.msra.mxu0 0
        %1893 = vmatprep.subr.bf16.mxu0 0
        %1894 = vmatpush2.bf16.msra.mxu0 0
        %1895 = vmatprep.subr.bf16.mxu0 0
        %1896 = vmatpush2.bf16.msra.mxu0 0
        %1897 = vmatprep.mubr.bf16.mxu0 0
        %1898 = vmatmul.mubr.bf16.gmra.mxu0 %v1863
        %v1899 = vpop.f32.mrf.mxu0
        %v1900 = vadd.f32 %v1848, %v1899
        %v1901 = vpop.f32.mrf.mxu0
        %v1902 = vpop.f32.mrf.mxu0
        %v1903 = vpop.f32.mrf.mxu0
        %1904 = vdwg.mxu0
        %v1905 = vpack.c.bf16 %v1900, %v1900
        %1907 = vrot.lane.b32.xlu0 %v1905, 96
        %v1908 = vpop.permute.xlu0 %1907
        %v1910 = vsel %vm725, %v1905, 0
        %v1913 = vsel %vm725, %v1908, 0
        %1915 = vmatprep.subr.bf16.mxu0 0
        %1916 = vmatpush1.bf16.xpose.msra.mxu0 0
        %1917 = vmatprep.subr.bf16.mxu0 0
        %1918 = vmatpush1.bf16.xpose.msra.mxu0 0
        %1919 = vmatprep.subr.bf16.mxu0 0
        %1920 = vmatpush1.bf16.xpose.msra.mxu0 0
        %1921 = vmatprep.subr.bf16.mxu0 0
        %1922 = vmatpush1.bf16.xpose.msra.mxu0 0
        %1923 = vmatprep.subr.bf16.mxu0 0
        %1924 = vmatpush1.bf16.xpose.msra.mxu0 0
        %1925 = vmatprep.subr.bf16.mxu0 0
        %1926 = vmatpush1.bf16.xpose.msra.mxu0 0
        %1927 = vmatprep.subr.bf16.mxu0 0
        %1928 = vmatpush1.bf16.xpose.msra.mxu0 0
        %1929 = vmatprep.subr.bf16.mxu0 0
        %1930 = vmatpush1.bf16.xpose.msra.mxu0 %v1913
        %1931 = vmatprep.subr.bf16.mxu0 0
        %1932 = vmatpush2.bf16.xpose.msra.mxu0 0
        %1933 = vmatprep.subr.bf16.mxu0 0
        %1934 = vmatpush2.bf16.xpose.msra.mxu0 0
        %1935 = vmatprep.subr.bf16.mxu0 0
        %1936 = vmatpush2.bf16.xpose.msra.mxu0 0
        %1937 = vmatprep.subr.bf16.mxu0 0
        %1938 = vmatpush2.bf16.xpose.msra.mxu0 0
        %1939 = vmatprep.subr.bf16.mxu0 0
        %1940 = vmatpush2.bf16.xpose.msra.mxu0 0
        %1941 = vmatprep.subr.bf16.mxu0 0
        %1942 = vmatpush2.bf16.xpose.msra.mxu0 0
        %1943 = vmatprep.subr.bf16.mxu0 0
        %1944 = vmatpush2.bf16.xpose.msra.mxu0 0
        %1945 = vmatprep.subr.bf16.mxu0 0
        %1946 = vmatpush2.bf16.xpose.msra.mxu0 0
        %1947 = vmatprep.mubr.bf16.mxu0 0
        %1948 = vmatmul.mubr.bf16.gmra.mxu0 %v1910
        %v1949 = vpop.f32.mrf.mxu0
        %v1950 = vadd.f32 0.0, %v1949
        %v1951 = vpop.f32.mrf.mxu0
        %v1952 = vpop.f32.mrf.mxu0
        %v1953 = vpop.f32.mrf.mxu0
        %1954 = vdwg.mxu0
        %v1955 = vsel %vm725, %v1950, -inf
        %1956 = vmax.xlane.f32.xlu0 %v1955
        %v1957 = vpop.xlane.xlu0 %1956
        %v1958 = vsub.f32 %v1950, %v1957
        %v1959 = vmul.f32 %v1958, 1.442695
        %v1960 = vpow.pop %v1959
        %v1961 = vsel %vm725, %v1960, 0.0
        %1962 = vadd.xlane.f32.xlu0 %v1961
        %v1963 = vpop.xlane.xlu0 %1962
        %v1964 = vpack.c.bf16 %v1960, %v1960
        %1965 = vrot.lane.b32.xlu0 %v1905, 64
        %v1966 = vpop.permute.xlu0 %1965
        %v1968 = vsel %vm725, %v1964, 0
        %v1971 = vsel %vm787, %v1966, 0
        %1973 = vmatprep.subr.bf16.mxu0 0
        %1974 = vmatpush1.bf16.msra.mxu0 0
        %1975 = vmatprep.subr.bf16.mxu0 0
        %1976 = vmatpush1.bf16.msra.mxu0 0
        %1977 = vmatprep.subr.bf16.mxu0 0
        %1978 = vmatpush1.bf16.msra.mxu0 0
        %1979 = vmatprep.subr.bf16.mxu0 0
        %1980 = vmatpush1.bf16.msra.mxu0 0
        %1981 = vmatprep.subr.bf16.mxu0 0
        %1982 = vmatpush1.bf16.msra.mxu0 0
        %1983 = vmatprep.subr.bf16.mxu0 0
        %1984 = vmatpush1.bf16.msra.mxu0 0
        %1985 = vmatprep.subr.bf16.mxu0 0
        %1986 = vmatpush1.bf16.msra.mxu0 0
        %1987 = vmatprep.subr.bf16.mxu0 0
        %1988 = vmatpush1.bf16.msra.mxu0 %v1971
        %1989 = vmatprep.subr.bf16.mxu0 0
        %1990 = vmatpush2.bf16.msra.mxu0 0
        %1991 = vmatprep.subr.bf16.mxu0 0
        %1992 = vmatpush2.bf16.msra.mxu0 0
        %1993 = vmatprep.subr.bf16.mxu0 0
        %1994 = vmatpush2.bf16.msra.mxu0 0
        %1995 = vmatprep.subr.bf16.mxu0 0
        %1996 = vmatpush2.bf16.msra.mxu0 0
        %1997 = vmatprep.subr.bf16.mxu0 0
        %1998 = vmatpush2.bf16.msra.mxu0 0
        %1999 = vmatprep.subr.bf16.mxu0 0
        %2000 = vmatpush2.bf16.msra.mxu0 0
        %2001 = vmatprep.subr.bf16.mxu0 0
        %2002 = vmatpush2.bf16.msra.mxu0 0
        %2003 = vmatprep.subr.bf16.mxu0 0
        %2004 = vmatpush2.bf16.msra.mxu0 0
        %2005 = vmatprep.mubr.bf16.mxu0 0
        %2006 = vmatmul.mubr.bf16.gmra.mxu0 %v1968
        %v2007 = vpop.f32.mrf.mxu0
        %v2008 = vadd.f32 0.0, %v2007
        %v2009 = vpop.f32.mrf.mxu0
        %v2010 = vpop.f32.mrf.mxu0
        %v2011 = vpop.f32.mrf.mxu0
        %2012 = vdwg.mxu0
        %v2013 = vrcp.pop %v1963
        %v2014 = vmul.f32 %v2008, %v2013
        %2015 = vrot.lane.b32.xlu0 %v1905, 120
        %v2016 = vpop.permute.xlu0 %2015
        %2017 = vrot.lane.b32.xlu0 %v1905, 88
        %v2018 = vpop.permute.xlu0 %2017
        %v2020 = vsel %vm725, %v2016, 0
        %v2023 = vsel %vm725, %v2018, 0
        %2025 = vmatprep.subr.bf16.mxu0 0
        %2026 = vmatpush1.bf16.xpose.msra.mxu0 0
        %2027 = vmatprep.subr.bf16.mxu0 0
        %2028 = vmatpush1.bf16.xpose.msra.mxu0 0
        %2029 = vmatprep.subr.bf16.mxu0 0
        %2030 = vmatpush1.bf16.xpose.msra.mxu0 0
        %2031 = vmatprep.subr.bf16.mxu0 0
        %2032 = vmatpush1.bf16.xpose.msra.mxu0 0
        %2033 = vmatprep.subr.bf16.mxu0 0
        %2034 = vmatpush1.bf16.xpose.msra.mxu0 0
        %2035 = vmatprep.subr.bf16.mxu0 0
        %2036 = vmatpush1.bf16.xpose.msra.mxu0 0
        %2037 = vmatprep.subr.bf16.mxu0 0
        %2038 = vmatpush1.bf16.xpose.msra.mxu0 0
        %2039 = vmatprep.subr.bf16.mxu0 0
        %2040 = vmatpush1.bf16.xpose.msra.mxu0 %v2023
        %2041 = vmatprep.subr.bf16.mxu0 0
        %2042 = vmatpush2.bf16.xpose.msra.mxu0 0
        %2043 = vmatprep.subr.bf16.mxu0 0
        %2044 = vmatpush2.bf16.xpose.msra.mxu0 0
        %2045 = vmatprep.subr.bf16.mxu0 0
        %2046 = vmatpush2.bf16.xpose.msra.mxu0 0
        %2047 = vmatprep.subr.bf16.mxu0 0
        %2048 = vmatpush2.bf16.xpose.msra.mxu0 0
        %2049 = vmatprep.subr.bf16.mxu0 0
        %2050 = vmatpush2.bf16.xpose.msra.mxu0 0
        %2051 = vmatprep.subr.bf16.mxu0 0
        %2052 = vmatpush2.bf16.xpose.msra.mxu0 0
        %2053 = vmatprep.subr.bf16.mxu0 0
        %2054 = vmatpush2.bf16.xpose.msra.mxu0 0
        %2055 = vmatprep.subr.bf16.mxu0 0
        %2056 = vmatpush2.bf16.xpose.msra.mxu0 0
        %2057 = vmatprep.mubr.bf16.mxu0 0
        %2058 = vmatmul.mubr.bf16.gmra.mxu0 %v2020
        %v2059 = vpop.f32.mrf.mxu0
        %v2060 = vadd.f32 0.0, %v2059
        %v2061 = vpop.f32.mrf.mxu0
        %v2062 = vpop.f32.mrf.mxu0
        %v2063 = vpop.f32.mrf.mxu0
        %2064 = vdwg.mxu0
        %v2065 = vsel %vm725, %v2060, -inf
        %2066 = vmax.xlane.f32.xlu0 %v2065
        %v2067 = vpop.xlane.xlu0 %2066
        %v2068 = vsub.f32 %v2060, %v2067
        %v2069 = vmul.f32 %v2068, 1.442695
        %v2070 = vpow.pop %v2069
        %v2071 = vsel %vm725, %v2070, 0.0
        %2072 = vadd.xlane.f32.xlu0 %v2071
        %v2073 = vpop.xlane.xlu0 %2072
        %v2074 = vpack.c.bf16 %v2070, %v2070
        %2075 = vrot.lane.b32.xlu0 %v1905, 56
        %v2076 = vpop.permute.xlu0 %2075
        %v2078 = vsel %vm725, %v2074, 0
        %v2081 = vsel %vm787, %v2076, 0
        %2083 = vmatprep.subr.bf16.mxu0 0
        %2084 = vmatpush1.bf16.msra.mxu0 0
        %2085 = vmatprep.subr.bf16.mxu0 0
        %2086 = vmatpush1.bf16.msra.mxu0 0
        %2087 = vmatprep.subr.bf16.mxu0 0
        %2088 = vmatpush1.bf16.msra.mxu0 0
        %2089 = vmatprep.subr.bf16.mxu0 0
        %2090 = vmatpush1.bf16.msra.mxu0 0
        %2091 = vmatprep.subr.bf16.mxu0 0
        %2092 = vmatpush1.bf16.msra.mxu0 0
        %2093 = vmatprep.subr.bf16.mxu0 0
        %2094 = vmatpush1.bf16.msra.mxu0 0
        %2095 = vmatprep.subr.bf16.mxu0 0
        %2096 = vmatpush1.bf16.msra.mxu0 0
        %2097 = vmatprep.subr.bf16.mxu0 0
        %2098 = vmatpush1.bf16.msra.mxu0 %v2081
        %2099 = vmatprep.subr.bf16.mxu0 0
        %2100 = vmatpush2.bf16.msra.mxu0 0
        %2101 = vmatprep.subr.bf16.mxu0 0
        %2102 = vmatpush2.bf16.msra.mxu0 0
        %2103 = vmatprep.subr.bf16.mxu0 0
        %2104 = vmatpush2.bf16.msra.mxu0 0
        %2105 = vmatprep.subr.bf16.mxu0 0
        %2106 = vmatpush2.bf16.msra.mxu0 0
        %2107 = vmatprep.subr.bf16.mxu0 0
        %2108 = vmatpush2.bf16.msra.mxu0 0
        %2109 = vmatprep.subr.bf16.mxu0 0
        %2110 = vmatpush2.bf16.msra.mxu0 0
        %2111 = vmatprep.subr.bf16.mxu0 0
        %2112 = vmatpush2.bf16.msra.mxu0 0
        %2113 = vmatprep.subr.bf16.mxu0 0
        %2114 = vmatpush2.bf16.msra.mxu0 0
        %2115 = vmatprep.mubr.bf16.mxu0 0
        %2116 = vmatmul.mubr.bf16.gmra.mxu0 %v2078
        %v2117 = vpop.f32.mrf.mxu0
        %v2118 = vadd.f32 0.0, %v2117
        %v2119 = vpop.f32.mrf.mxu0
        %v2120 = vpop.f32.mrf.mxu0
        %v2121 = vpop.f32.mrf.mxu0
        %2122 = vdwg.mxu0
        %v2123 = vrcp.pop %v2073
        %v2124 = vmul.f32 %v2118, %v2123
        %2125 = vrot.lane.b32.xlu0 %v1905, 112
        %v2126 = vpop.permute.xlu0 %2125
        %2127 = vrot.lane.b32.xlu0 %v1905, 80
        %v2128 = vpop.permute.xlu0 %2127
        %v2130 = vsel %vm725, %v2126, 0
        %v2133 = vsel %vm725, %v2128, 0
        %2135 = vmatprep.subr.bf16.mxu0 0
        %2136 = vmatpush1.bf16.xpose.msra.mxu0 0
        %2137 = vmatprep.subr.bf16.mxu0 0
        %2138 = vmatpush1.bf16.xpose.msra.mxu0 0
        %2139 = vmatprep.subr.bf16.mxu0 0
        %2140 = vmatpush1.bf16.xpose.msra.mxu0 0
        %2141 = vmatprep.subr.bf16.mxu0 0
        %2142 = vmatpush1.bf16.xpose.msra.mxu0 0
        %2143 = vmatprep.subr.bf16.mxu0 0
        %2144 = vmatpush1.bf16.xpose.msra.mxu0 0
        %2145 = vmatprep.subr.bf16.mxu0 0
        %2146 = vmatpush1.bf16.xpose.msra.mxu0 0
        %2147 = vmatprep.subr.bf16.mxu0 0
        %2148 = vmatpush1.bf16.xpose.msra.mxu0 0
        %2149 = vmatprep.subr.bf16.mxu0 0
        %2150 = vmatpush1.bf16.xpose.msra.mxu0 %v2133
        %2151 = vmatprep.subr.bf16.mxu0 0
        %2152 = vmatpush2.bf16.xpose.msra.mxu0 0
        %2153 = vmatprep.subr.bf16.mxu0 0
        %2154 = vmatpush2.bf16.xpose.msra.mxu0 0
        %2155 = vmatprep.subr.bf16.mxu0 0
        %2156 = vmatpush2.bf16.xpose.msra.mxu0 0
        %2157 = vmatprep.subr.bf16.mxu0 0
        %2158 = vmatpush2.bf16.xpose.msra.mxu0 0
        %2159 = vmatprep.subr.bf16.mxu0 0
        %2160 = vmatpush2.bf16.xpose.msra.mxu0 0
        %2161 = vmatprep.subr.bf16.mxu0 0
        %2162 = vmatpush2.bf16.xpose.msra.mxu0 0
        %2163 = vmatprep.subr.bf16.mxu0 0
        %2164 = vmatpush2.bf16.xpose.msra.mxu0 0
        %2165 = vmatprep.subr.bf16.mxu0 0
        %2166 = vmatpush2.bf16.xpose.msra.mxu0 0
        %2167 = vmatprep.mubr.bf16.mxu0 0
        %2168 = vmatmul.mubr.bf16.gmra.mxu0 %v2130
        %v2169 = vpop.f32.mrf.mxu0
        %v2170 = vadd.f32 0.0, %v2169
        %v2171 = vpop.f32.mrf.mxu0
        %v2172 = vpop.f32.mrf.mxu0
        %v2173 = vpop.f32.mrf.mxu0
        %2174 = vdwg.mxu0
        %v2175 = vsel %vm725, %v2170, -inf
        %2176 = vmax.xlane.f32.xlu0 %v2175
        %v2177 = vpop.xlane.xlu0 %2176
        %v2178 = vsub.f32 %v2170, %v2177
        %v2179 = vmul.f32 %v2178, 1.442695
        %v2180 = vpow.pop %v2179
        %v2181 = vsel %vm725, %v2180, 0.0
        %2182 = vadd.xlane.f32.xlu0 %v2181
        %v2183 = vpop.xlane.xlu0 %2182
        %v2184 = vpack.c.bf16 %v2180, %v2180
        %2185 = vrot.lane.b32.xlu0 %v1905, 48
        %v2186 = vpop.permute.xlu0 %2185
        %v2188 = vsel %vm725, %v2184, 0
        %v2191 = vsel %vm787, %v2186, 0
        %2193 = vmatprep.subr.bf16.mxu0 0
        %2194 = vmatpush1.bf16.msra.mxu0 0
        %2195 = vmatprep.subr.bf16.mxu0 0
        %2196 = vmatpush1.bf16.msra.mxu0 0
        %2197 = vmatprep.subr.bf16.mxu0 0
        %2198 = vmatpush1.bf16.msra.mxu0 0
        %2199 = vmatprep.subr.bf16.mxu0 0
        %2200 = vmatpush1.bf16.msra.mxu0 0
        %2201 = vmatprep.subr.bf16.mxu0 0
        %2202 = vmatpush1.bf16.msra.mxu0 0
        %2203 = vmatprep.subr.bf16.mxu0 0
        %2204 = vmatpush1.bf16.msra.mxu0 0
        %2205 = vmatprep.subr.bf16.mxu0 0
        %2206 = vmatpush1.bf16.msra.mxu0 0
        %2207 = vmatprep.subr.bf16.mxu0 0
        %2208 = vmatpush1.bf16.msra.mxu0 %v2191
        %2209 = vmatprep.subr.bf16.mxu0 0
        %2210 = vmatpush2.bf16.msra.mxu0 0
        %2211 = vmatprep.subr.bf16.mxu0 0
        %2212 = vmatpush2.bf16.msra.mxu0 0
        %2213 = vmatprep.subr.bf16.mxu0 0
        %2214 = vmatpush2.bf16.msra.mxu0 0
        %2215 = vmatprep.subr.bf16.mxu0 0
        %2216 = vmatpush2.bf16.msra.mxu0 0
        %2217 = vmatprep.subr.bf16.mxu0 0
        %2218 = vmatpush2.bf16.msra.mxu0 0
        %2219 = vmatprep.subr.bf16.mxu0 0
        %2220 = vmatpush2.bf16.msra.mxu0 0
        %2221 = vmatprep.subr.bf16.mxu0 0
        %2222 = vmatpush2.bf16.msra.mxu0 0
        %2223 = vmatprep.subr.bf16.mxu0 0
        %2224 = vmatpush2.bf16.msra.mxu0 0
        %2225 = vmatprep.mubr.bf16.mxu0 0
        %2226 = vmatmul.mubr.bf16.gmra.mxu0 %v2188
        %v2227 = vpop.f32.mrf.mxu0
        %v2228 = vadd.f32 0.0, %v2227
        %v2229 = vpop.f32.mrf.mxu0
        %v2230 = vpop.f32.mrf.mxu0
        %v2231 = vpop.f32.mrf.mxu0
        %2232 = vdwg.mxu0
        %v2233 = vrcp.pop %v2183
        %v2234 = vmul.f32 %v2228, %v2233
        %2235 = vrot.lane.b32.xlu0 %v1905, 104
        %v2236 = vpop.permute.xlu0 %2235
        %2237 = vrot.lane.b32.xlu0 %v1905, 72
        %v2238 = vpop.permute.xlu0 %2237
        %v2240 = vsel %vm725, %v2236, 0
        %v2243 = vsel %vm725, %v2238, 0
        %2245 = vmatprep.subr.bf16.mxu0 0
        %2246 = vmatpush1.bf16.xpose.msra.mxu0 0
        %2247 = vmatprep.subr.bf16.mxu0 0
        %2248 = vmatpush1.bf16.xpose.msra.mxu0 0
        %2249 = vmatprep.subr.bf16.mxu0 0
        %2250 = vmatpush1.bf16.xpose.msra.mxu0 0
        %2251 = vmatprep.subr.bf16.mxu0 0
        %2252 = vmatpush1.bf16.xpose.msra.mxu0 0
        %2253 = vmatprep.subr.bf16.mxu0 0
        %2254 = vmatpush1.bf16.xpose.msra.mxu0 0
        %2255 = vmatprep.subr.bf16.mxu0 0
        %2256 = vmatpush1.bf16.xpose.msra.mxu0 0
        %2257 = vmatprep.subr.bf16.mxu0 0
        %2258 = vmatpush1.bf16.xpose.msra.mxu0 0
        %2259 = vmatprep.subr.bf16.mxu0 0
        %2260 = vmatpush1.bf16.xpose.msra.mxu0 %v2243
        %2261 = vmatprep.subr.bf16.mxu0 0
        %2262 = vmatpush2.bf16.xpose.msra.mxu0 0
        %2263 = vmatprep.subr.bf16.mxu0 0
        %2264 = vmatpush2.bf16.xpose.msra.mxu0 0
        %2265 = vmatprep.subr.bf16.mxu0 0
        %2266 = vmatpush2.bf16.xpose.msra.mxu0 0
        %2267 = vmatprep.subr.bf16.mxu0 0
        %2268 = vmatpush2.bf16.xpose.msra.mxu0 0
        %2269 = vmatprep.subr.bf16.mxu0 0
        %2270 = vmatpush2.bf16.xpose.msra.mxu0 0
        %2271 = vmatprep.subr.bf16.mxu0 0
        %2272 = vmatpush2.bf16.xpose.msra.mxu0 0
        %2273 = vmatprep.subr.bf16.mxu0 0
        %2274 = vmatpush2.bf16.xpose.msra.mxu0 0
        %2275 = vmatprep.subr.bf16.mxu0 0
        %2276 = vmatpush2.bf16.xpose.msra.mxu0 0
        %2277 = vmatprep.mubr.bf16.mxu0 0
        %2278 = vmatmul.mubr.bf16.gmra.mxu0 %v2240
        %v2279 = vpop.f32.mrf.mxu0
        %v2280 = vadd.f32 0.0, %v2279
        %v2281 = vpop.f32.mrf.mxu0
        %v2282 = vpop.f32.mrf.mxu0
        %v2283 = vpop.f32.mrf.mxu0
        %2284 = vdwg.mxu0
        %v2285 = vsel %vm725, %v2280, -inf
        %2286 = vmax.xlane.f32.xlu0 %v2285
        %v2287 = vpop.xlane.xlu0 %2286
        %v2288 = vsub.f32 %v2280, %v2287
        %v2289 = vmul.f32 %v2288, 1.442695
        %v2290 = vpow.pop %v2289
        %v2291 = vsel %vm725, %v2290, 0.0
        %2292 = vadd.xlane.f32.xlu0 %v2291
        %v2293 = vpop.xlane.xlu0 %2292
        %v2294 = vpack.c.bf16 %v2290, %v2290
        %2295 = vrot.lane.b32.xlu0 %v1905, 40
        %v2296 = vpop.permute.xlu0 %2295
        %v2298 = vsel %vm725, %v2294, 0
        %v2301 = vsel %vm787, %v2296, 0
        %2303 = vmatprep.subr.bf16.mxu0 0
        %2304 = vmatpush1.bf16.msra.mxu0 0
        %2305 = vmatprep.subr.bf16.mxu0 0
        %2306 = vmatpush1.bf16.msra.mxu0 0
        %2307 = vmatprep.subr.bf16.mxu0 0
        %2308 = vmatpush1.bf16.msra.mxu0 0
        %2309 = vmatprep.subr.bf16.mxu0 0
        %2310 = vmatpush1.bf16.msra.mxu0 0
        %2311 = vmatprep.subr.bf16.mxu0 0
        %2312 = vmatpush1.bf16.msra.mxu0 0
        %2313 = vmatprep.subr.bf16.mxu0 0
        %2314 = vmatpush1.bf16.msra.mxu0 0
        %2315 = vmatprep.subr.bf16.mxu0 0
        %2316 = vmatpush1.bf16.msra.mxu0 0
        %2317 = vmatprep.subr.bf16.mxu0 0
        %2318 = vmatpush1.bf16.msra.mxu0 %v2301
        %2319 = vmatprep.subr.bf16.mxu0 0
        %2320 = vmatpush2.bf16.msra.mxu0 0
        %2321 = vmatprep.subr.bf16.mxu0 0
        %2322 = vmatpush2.bf16.msra.mxu0 0
        %2323 = vmatprep.subr.bf16.mxu0 0
        %2324 = vmatpush2.bf16.msra.mxu0 0
        %2325 = vmatprep.subr.bf16.mxu0 0
        %2326 = vmatpush2.bf16.msra.mxu0 0
        %2327 = vmatprep.subr.bf16.mxu0 0
        %2328 = vmatpush2.bf16.msra.mxu0 0
        %2329 = vmatprep.subr.bf16.mxu0 0
        %2330 = vmatpush2.bf16.msra.mxu0 0
        %2331 = vmatprep.subr.bf16.mxu0 0
        %2332 = vmatpush2.bf16.msra.mxu0 0
        %2333 = vmatprep.subr.bf16.mxu0 0
        %2334 = vmatpush2.bf16.msra.mxu0 0
        %2335 = vmatprep.mubr.bf16.mxu0 0
        %2336 = vmatmul.mubr.bf16.gmra.mxu0 %v2298
        %v2337 = vpop.f32.mrf.mxu0
        %v2338 = vadd.f32 0.0, %v2337
        %v2339 = vpop.f32.mrf.mxu0
        %v2340 = vpop.f32.mrf.mxu0
        %v2341 = vpop.f32.mrf.mxu0
        %2342 = vdwg.mxu0
        %v2343 = vrcp.pop %v2293
        %v2344 = vmul.f32 %v2338, %v2343
        %2346 = vrot.lane.b32.xlu0 %v2124, 8
        %v2347 = vpop.permute.xlu0 %2346
        %2350 = vrot.lane.b32.xlu0 %v2234, 16
        %v2351 = vpop.permute.xlu0 %2350
        %2354 = vrot.lane.b32.xlu0 %v2344, 24
        %v2355 = vpop.permute.xlu0 %2354
        %v2357 = vsel %vm725, %v2014, %v2347
        %v2358 = vsel %vm1176, %v2357, %v2351
        %v2359 = vsel %vm1178, %v2358, %v2355
        %v2360 = vpack.c.bf16 %v2359, %v2359
        %v2361 = vld [vmem:[#allocation17] sm:$0xf]
        %v2362 = vld [vmem:[#allocation17 + $0x4] sm:$0xf]
        %v2363 = vld [vmem:[#allocation17 + $0x8] sm:$0xf]
        %v2364 = vld [vmem:[#allocation17 + $0xc] sm:$0xf]
        %v2365 = vld [vmem:[%s12] sm:$0x1]
        %v2367 = vlaneseq
        %v2368 = vshrl.u32 %v2367, 7
        %v2369 = vsub.s32 0, %v2368
        %v2370 = vrot.slane %v2365, %v2369
        %v2376 = vunpack.c.l.b16 %v2361
        %v2377 = vunpack.c.l.b16 %v2362
        %v2378 = vunpack.c.l.b16 %v2363
        %v2379 = vunpack.c.l.b16 %v2364
        %v2380 = vpack.c.b16 %v2377, %v2376
        %v2381 = vpack.c.b16 %v2379, %v2378
        %v2385 = vsel %vm677, %v2360, 0
        %2387 = vmatprep.subr.bf16.mxu0 0
        %2388 = vmatpush1.bf16.msra.mxu0 0
        %2389 = vmatprep.subr.bf16.mxu0 0
        %2390 = vmatpush1.bf16.msra.mxu0 0
        %2391 = vmatprep.subr.bf16.mxu0 0
        %2392 = vmatpush1.bf16.msra.mxu0 0
        %2393 = vmatprep.subr.bf16.mxu0 0
        %2394 = vmatpush1.bf16.msra.mxu0 0
        %2395 = vmatprep.subr.bf16.mxu0 0
        %2396 = vmatpush1.bf16.msra.mxu0 0
        %2397 = vmatprep.subr.bf16.mxu0 0
        %2398 = vmatpush1.bf16.msra.mxu0 0
        %2399 = vmatprep.subr.bf16.mxu0 0
        %2400 = vmatpush1.bf16.msra.mxu0 %v2381
        %2401 = vmatprep.subr.bf16.mxu0 0
        %2402 = vmatpush1.bf16.msra.mxu0 %v2380
        %2403 = vmatprep.subr.bf16.mxu0 0
        %2404 = vmatpush2.bf16.msra.mxu0 0
        %2405 = vmatprep.subr.bf16.mxu0 0
        %2406 = vmatpush2.bf16.msra.mxu0 0
        %2407 = vmatprep.subr.bf16.mxu0 0
        %2408 = vmatpush2.bf16.msra.mxu0 0
        %2409 = vmatprep.subr.bf16.mxu0 0
        %2410 = vmatpush2.bf16.msra.mxu0 0
        %2411 = vmatprep.subr.bf16.mxu0 0
        %2412 = vmatpush2.bf16.msra.mxu0 0
        %2413 = vmatprep.subr.bf16.mxu0 0
        %2414 = vmatpush2.bf16.msra.mxu0 0
        %2415 = vmatprep.subr.bf16.mxu0 0
        %2416 = vmatpush2.bf16.msra.mxu0 0
        %2417 = vmatprep.subr.bf16.mxu0 0
        %2418 = vmatpush2.bf16.msra.mxu0 0
        %2419 = vmatprep.mubr.bf16.mxu0 0
        %2420 = vmatmul.mubr.bf16.gmra.mxu0 %v2385
        %v2421 = vpop.f32.mrf.mxu0
        %v2422 = vadd.f32 %v2370, %v2421
        %v2423 = vpop.f32.mrf.mxu0
        %v2424 = vpop.f32.mrf.mxu0
        %v2425 = vpop.f32.mrf.mxu0
        %2426 = vdwg.mxu0
        %2427 = vst.msk [vmem:[%s650] sm:$0xff] %vm677, %v2422
        %s2428 = sand.u32 %s327, 1
        %s2429 = scalar_lea.sflag [#allocation4], %s2428
        %s2430 = sand.u32 %s327, 1
        %s2431 = smul.addr %s2430, 8
        %s2432 = scalar_lea.vmem [#allocation19], %s2431
        %s2433 = sand.u32 %s41, 1
        %s2434 = scalar_lea.sflag [#allocation21], %s2433
        %s2435 = sand.u32 %s353, 1
        %s2436 = smul.addr %s2435, 8
        %s2437 = scalar_lea.vmem [#allocation20], %s2436
        %s2438 = sand.u32 %s41, 1
        %s2439 = scalar_lea.sflag [#allocation21], %s2438
        %s2440 = sand.u32 %s379, 1
        %s2441 = smul.addr %s2440, 8
        %s2442 = scalar_lea.vmem [#allocation22], %s2441
        // Predicated region
        $region113: #{tpu_custom_call.1} parent=71 // pred_check
          %p2443 = pneg %p337
        $region114: #{tpu_custom_call.1} parent=71 // pred_check_branch
          %2445 = sbr.rel (%p2443) target = $region116
        $region115: #{tpu_custom_call.1} parent=71 // pred_region
          %s2447 = ssub.s32 128, 128
          %2448 = vsyncadd %s2429, %s2447
          %s2449 = smul.addr %s41, 128
          %s2450 = scalar_lea.hbm %s13, %s2449
          %s2452 = sshll.u32 %s2432, 4
          %s2453 = int_to_ptr.vmem [resolvable:$true] %s2452
          %2455 = dma.vmem_to_hbm [thread:$0]  %s2453, 128, %s2450, %s2429
        $region116: #{tpu_custom_call.1} parent=71 // pred_fallthru
          _
        // Predicated region
        $region117: #{tpu_custom_call.1} parent=71 // pred_check
          %p2456 = pneg %p363
        $region118: #{tpu_custom_call.1} parent=71 // pred_check_branch
          %2458 = sbr.rel (%p2456) target = $region120
        $region119: #{tpu_custom_call.1} parent=71 // pred_region
          %s2460 = ssub.s32 128, 128
          %2461 = vsyncadd %s2434, %s2460
          %s2462 = smul.addr %s41, 128
          %s2463 = scalar_lea.hbm %s14, %s2462
          %s2465 = sshll.u32 %s2437, 4
          %s2466 = int_to_ptr.vmem [resolvable:$true] %s2465
          %2468 = dma.vmem_to_hbm [thread:$0]  %s2466, 128, %s2463, %s2434
        $region120: #{tpu_custom_call.1} parent=71 // pred_fallthru
          _
        // Predicated region
        $region121: #{tpu_custom_call.1} parent=71 // pred_check
          %p2469 = pneg %p389
        $region122: #{tpu_custom_call.1} parent=71 // pred_check_branch
          %2471 = sbr.rel (%p2469) target = $region124
        $region123: #{tpu_custom_call.1} parent=71 // pred_region
          %s2473 = ssub.s32 128, 128
          %2474 = vsyncadd %s2439, %s2473
          %s2475 = smul.addr %s41, 128
          %s2476 = scalar_lea.hbm %s15, %s2475
          %s2478 = sshll.u32 %s2442, 4
          %s2479 = int_to_ptr.vmem [resolvable:$true] %s2478
          %2481 = dma.vmem_to_hbm [thread:$0]  %s2479, 128, %s2476, %s2439
        $region124: #{tpu_custom_call.1} parent=71 // pred_fallthru
          _
      $region72: #{tpu_custom_call.1} parent=5 // pred_fallthru
        _
      %p2482 = scmp.le.s32.totalorder 2, %s36
      // Predicated region
      $region125: #{tpu_custom_call.1} parent=5 // pred_check
        %p2483 = pneg %p2482
      $region126: #{tpu_custom_call.1} parent=5 // pred_check_branch
        %2485 = sbr.rel (%p2483) target = $region128
      $region127: #{tpu_custom_call.1} parent=5 // pred_region
        %s2486 = ssub.s32 %s36, 2
        // Predicated region
        $region129: #{tpu_custom_call.1} parent=127 // pred_check
          %p2487 = pneg %p343
        $region130: #{tpu_custom_call.1} parent=127 // pred_check_branch
          %2489 = sbr.rel (%p2487) target = $region132
        $region131: #{tpu_custom_call.1} parent=127 // pred_region
          %s2490 = sand.u32 %s328, 1
          %s2491 = scalar_lea.sflag [#allocation4], %s2490
          %s2492 = sand.u32 %s328, 1
          %s2493 = smul.addr %s2492, 8
          %s2494 = scalar_lea.vmem [#allocation19], %s2493
          %2495 = dma.done %s2491, 128
        $region132: #{tpu_custom_call.1} parent=127 // pred_fallthru
          _
        // Predicated region
        $region133: #{tpu_custom_call.1} parent=127 // pred_check
          %p2496 = pneg %p369
        $region134: #{tpu_custom_call.1} parent=127 // pred_check_branch
          %2498 = sbr.rel (%p2496) target = $region136
        $region135: #{tpu_custom_call.1} parent=127 // pred_region
          %s2499 = sand.u32 %s42, 1
          %s2500 = scalar_lea.sflag [#allocation21], %s2499
          %s2501 = sand.u32 %s354, 1
          %s2502 = smul.addr %s2501, 8
          %s2503 = scalar_lea.vmem [#allocation20], %s2502
          %2504 = dma.done %s2500, 128
        $region136: #{tpu_custom_call.1} parent=127 // pred_fallthru
          _
        // Predicated region
        $region137: #{tpu_custom_call.1} parent=127 // pred_check
          %p2505 = pneg %p395
        $region138: #{tpu_custom_call.1} parent=127 // pred_check_branch
          %2507 = sbr.rel (%p2505) target = $region140
        $region139: #{tpu_custom_call.1} parent=127 // pred_region
          %s2508 = sand.u32 %s42, 1
          %s2509 = scalar_lea.sflag [#allocation21], %s2508
          %s2510 = sand.u32 %s380, 1
          %s2511 = smul.addr %s2510, 8
          %s2512 = scalar_lea.vmem [#allocation22], %s2511
          %2513 = dma.done %s2509, 128
        $region140: #{tpu_custom_call.1} parent=127 // pred_fallthru
          _
      $region128: #{tpu_custom_call.1} parent=5 // pred_fallthru
        _
    $region6: #{tpu_custom_call.1} parent=1 // loop_footer
      %s40 = sadd.s32 1, %s36
    $region7: #{tpu_custom_call.1} parent=1 // loop_footer_branch
      %35 = sbr.rel target = $region3
    $region8: #{tpu_custom_call.1} parent=1 // loop_exit
      _
    %2514 = vsyncpa [#allocation3], 1
    %s2515 = scalar_lea.sflag [#allocation3], 1
    %2516 = vsyncpa %s2515, 1
    %2517 = vsyncpa [#allocation6], 1
    %2518 = vsyncpa [#allocation9], 1
    %2519 = vsyncpa [#allocation12], 1
    %2520 = vsyncpa [#allocation15], 1
    %2521 = vsyncpa [#allocation18], 1
    %2522 = vsyncpa [#allocation4], 1
    %s2523 = scalar_lea.sflag [#allocation4], 1
    %2524 = vsyncpa %s2523, 1
    %2525 = vsyncpa [#allocation21], 1
    %s2526 = scalar_lea.sflag [#allocation21], 1
    %2527 = vsyncpa %s2526, 1

</llo_original>
